<compile_context>
chip_gen: v5e
topology: v5e:2x2
jax: 0.10.0
libtpu: 0.0.40
codegen_flags: <defaults>
</compile_context>

<pallas_src>
import functools

import jax
import jax.numpy as jnp
from jax.experimental import pallas as pl
from jax.experimental.pallas import tpu as pltpu


def _leaky_relu(x, negative_slope=0.2):
    # max(x, 0.2*x): one mul + one max on the VPU (cheaper than cmp/select/mul).
    return jnp.maximum(x, negative_slope * x)


def _mlp_multiview_kernel(x_ref, wx_ref, b_ref, w1h_ref, w2h_ref, w3h_ref,
                          w4_ref, o_ref, acc_ref, *, mean_views, c_dims):
    """Grid = (point_tiles, views). Channels lead; points on the lane axis."""
    c0, c1, c2, c3, cout = c_dims
    c_sum = c0 + c1 + c2 + c3
    v = pl.program_id(1)

    @pl.when(v == 0)
    def _init():
        acc_ref[...] = jnp.zeros_like(acc_ref)

    x = x_ref[0].astype(jnp.bfloat16)                       # (Cin, TP) bf16
    b_all = b_ref[...]                                       # (c_sum+cout, 1)

    # ---- MLP.forward0: one stacked x-projection for conv0..conv3 ----------
    # conv0..3 biases folded into the f32 epilogue; the biased x-contributions
    # are kept in bf16 so later-layer skip terms are cheap to hold/reload.
    xp = (jnp.dot(wx_ref[...], x, preferred_element_type=jnp.float32)
          + b_all[:c_sum]).astype(jnp.bfloat16)              # (c_sum, TP)

    h = _leaky_relu(xp[:c0].astype(jnp.float32))
    h = _leaky_relu(
        xp[c0:c0 + c1].astype(jnp.float32)
        + jnp.dot(w1h_ref[...], h.astype(jnp.bfloat16),
                  preferred_element_type=jnp.float32))
    h = _leaky_relu(
        xp[c0 + c1:c0 + c1 + c2].astype(jnp.float32)
        + jnp.dot(w2h_ref[...], h.astype(jnp.bfloat16),
                  preferred_element_type=jnp.float32))
    h = _leaky_relu(
        xp[c0 + c1 + c2:c_sum].astype(jnp.float32)
        + jnp.dot(w3h_ref[...], h.astype(jnp.bfloat16),
                  preferred_element_type=jnp.float32))

    # conv4 is linear: accumulate w4 @ h_v per view (cout x TP); the mean and
    # the conv4 bias are applied once at finalize.
    acc_ref[...] += jnp.dot(w4_ref[...], h.astype(jnp.bfloat16),
                            preferred_element_type=jnp.float32)

    # ---- MLP.forward1 (conv4 bias + sigmoid) on the view-mean --------------
    @pl.when(v == mean_views - 1)
    def _finalize():
        y = acc_ref[...] * (1.0 / mean_views) + b_all[c_sum:]
        sig = pl.reciprocal(1.0 + jnp.exp(-y), approx=True)   # EUP recip
        o_ref[...] = sig.astype(o_ref.dtype)


@functools.partial(jax.jit, static_argnames=("mean_num", "tile_p"))
def pamir_mlp_multiview_forward(pt_feat, params, mean_num=3, tile_p=2048):
    """Per-level point head of PamirNetMultiview.

    pt_feat : (view_num, Cin, point_num) float32 — concat of the grid-sampled
              2D/3D features (channels-leading; points on the lane axis).
    params  : dict with 1x1-conv weights "w0".."w4" of shape (c_out, c_in)
              (the PyTorch (out, in, 1, 1) kernels squeezed) and biases "b0".."b4".
    returns : (1, point_num, 1) float32, matching
              pt_output.permute([0, 2, 3, 1]).view([1, point_num, 1]).
    """
    V, Cin, P = pt_feat.shape
    w0, b0 = params["w0"], params["b0"]
    w1, b1 = params["w1"], params["b1"]
    w2, b2 = params["w2"], params["b2"]
    w3, b3 = params["w3"], params["b3"]
    w4, b4 = params["w4"], params["b4"]
    c0, c1, c2, c3 = w0.shape[0], w1.shape[0], w2.shape[0], w3.shape[0]
    cout = w4.shape[0]
    c_sum = c0 + c1 + c2 + c3

    # Stack the x-side weights of conv0..conv3 (the skip-concat columns) into
    # one matrix; keep the h-side columns separate. All MXU operands in bf16.
    wx = jnp.concatenate([w0, w1[:, :Cin], w2[:, :Cin], w3[:, :Cin]],
                         axis=0).astype(jnp.bfloat16)        # (c_sum, Cin)
    w1h = w1[:, Cin:].astype(jnp.bfloat16)                   # (c1, c0)
    w2h = w2[:, Cin:].astype(jnp.bfloat16)                   # (c2, c1)
    w3h = w3[:, Cin:].astype(jnp.bfloat16)                   # (c3, c2)
    w4b = w4.astype(jnp.bfloat16)                            # (cout, c3)
    # All biases packed into one column block (f32; added in-kernel epilogues).
    b_all = jnp.concatenate([b0, b1, b2, b3, b4]).reshape(
        c_sum + cout, 1).astype(jnp.float32)

    # Only the first min(mean_num, view_num) views influence the output
    # (torch.mean(pt_out0[:mean_num], 0)); skip the rest entirely.
    mean_views = min(mean_num, V)
    feats = pt_feat[:mean_views]

    # Lane-align the point axis and pick the largest usable tile (mult. of 128).
    # On v7x prefer a tile_p giving an even point-tile count (two TensorCores).
    tile_p = max(128, (min(tile_p, pl.cdiv(P, 128) * 128) // 128) * 128)
    P_pad = pl.cdiv(P, tile_p) * tile_p
    if P_pad != P:
        feats = jnp.pad(feats, ((0, 0), (0, 0), (0, P_pad - P)))

    grid = (P_pad // tile_p, mean_views)

    def _const_spec(shape):
        # Constant index map -> fetched once; single buffer (no double-buffer).
        return pl.BlockSpec(shape, lambda p, v: (0, 0),
                            pipeline_mode=pl.Buffered(1))

    flops = (2 * mean_views * P_pad
             * (c_sum * Cin + c1 * c0 + c2 * c1 + c3 * c2 + cout * c3))
    weight_bytes = 2 * (int(wx.size) + int(w1h.size) + int(w2h.size)
                        + int(w3h.size) + int(w4b.size)) + 4 * int(b_all.size)
    cost = pl.CostEstimate(
        flops=int(flops),
        transcendentals=int(P_pad * cout),
        bytes_accessed=int(4 * (mean_views * P_pad * Cin + P_pad * cout)
                           + weight_bytes),
    )

    kernel = functools.partial(_mlp_multiview_kernel,
                               mean_views=mean_views,
                               c_dims=(c0, c1, c2, c3, cout))

    out = pl.pallas_call(
        kernel,
        out_shape=jax.ShapeDtypeStruct((cout, P_pad), pt_feat.dtype),
        grid_spec=pltpu.PrefetchScalarGridSpec(
            num_scalar_prefetch=0,
            grid=grid,
            in_specs=[
                # point features: one (Cin, tile_p) tile per (view, point-tile)
                pl.BlockSpec((1, Cin, tile_p), lambda p, v: (v, 0, p)),
                # VMEM-resident constants (single-buffered):
                _const_spec((c_sum, Cin)),        # stacked x-side weights
                _const_spec((c_sum + cout, 1)),   # packed biases
                _const_spec((c1, c0)),            # w1 h-side
                _const_spec((c2, c1)),            # w2 h-side
                _const_spec((c3, c2)),            # w3 h-side
                _const_spec((cout, c3)),          # w4
            ],
            out_specs=pl.BlockSpec((cout, tile_p), lambda p, v: (0, p)),
            scratch_shapes=[pltpu.VMEM((cout, tile_p), jnp.float32)],
        ),
        compiler_params=pltpu.CompilerParams(
            dimension_semantics=("parallel", "arbitrary"),
            vmem_limit_bytes=64 * 1024 * 1024),
        cost_estimate=cost,
    )(feats, wx, b_all, w1h, w2h, w3h, w4b)

    out = out[:, :P]                        # (cout, P): drop lane padding
    return out.T.reshape(1, P, cout)        # (1, point_num, 1)


def init_params(key, in_channels, inter_channels, out_channels=1, gain=0.02):
    """xavier_normal_(gain=0.02) weights / zero biases, matching MLP.init_weights.

    Weights are stored as (out, in) — the PyTorch (out, in, 1, 1) conv kernels
    squeezed — which is exactly the channels-leading matmul layout used above.
    """
    c0, c1, c2, c3 = inter_channels
    shapes = [(c0, in_channels), (c1, in_channels + c0), (c2, in_channels + c1),
              (c3, in_channels + c2), (out_channels, c3)]
    keys = jax.random.split(key, len(shapes))
    params = {}
    for i, (k, (fo, fi)) in enumerate(zip(keys, shapes)):
        std = gain * jnp.sqrt(2.0 / (fi + fo))
        params[f"w{i}"] = std * jax.random.normal(k, (fo, fi), jnp.float32)
        params[f"b{i}"] = jnp.zeros((fo,), jnp.float32)
    return params


def _reference_forward(pt_feat, params, mean_num=3):
    """Pure-JAX f32 reference: MLP.forward0 per view -> mean over the first
    mean_num views -> MLP.forward1 (conv4 + sigmoid), per PamirNetMultiview."""
    def conv1x1(w, b, t):                 # (co, ci) x (V, ci, P) -> (V, co, P)
        return jnp.einsum("oc,vcp->vop", w, t) + b[None, :, None]

    def lrelu(x):
        return jnp.where(x > 0, x, 0.2 * x)

    x = pt_feat
    h = lrelu(conv1x1(params["w0"], params["b0"], x))
    h = lrelu(conv1x1(params["w1"], params["b1"],
                      jnp.concatenate([x, h], axis=1)))
    h = lrelu(conv1x1(params["w2"], params["b2"],
                      jnp.concatenate([x, h], axis=1)))
    h = lrelu(conv1x1(params["w3"], params["b3"],
                      jnp.concatenate([x, h], axis=1)))
    h_mean = jnp.mean(h[:mean_num], axis=0, keepdims=True)        # (1, c3, P)
    y = conv1x1(params["w4"], params["b4"], h_mean)                # (1, 1, P)
    y = 1.0 / (1.0 + jnp.exp(-y))
    return jnp.transpose(y, (0, 2, 1))                             # (1, P, 1)


if __name__ == "__main__":
    key = jax.random.PRNGKey(0)
    kx, kp = jax.random.split(key)

    # Small shapes consistent with the module (real model: Cin = 256 + 32 = 288,
    # inter_channels = (1024, 512, 256, 128), out_channels = 1, view_num = 3).
    view_num, point_num = 3, 2048
    in_channels, inter_channels, out_channels = 32, (64, 48, 32, 16), 1

    pt_feat = jax.random.normal(kx, (view_num, in_channels, point_num),
                                jnp.float32)
    params = init_params(kp, in_channels, inter_channels, out_channels)

    out = pamir_mlp_multiview_forward(pt_feat, params, mean_num=3, tile_p=2048)
    out = jax.block_until_ready(out)

    ref = _reference_forward(pt_feat, params, mean_num=3)
    assert out.shape == (1, point_num, out_channels)
    max_err = float(jnp.max(jnp.abs(out - ref)))
    # bf16 MXU + approximate reciprocal in the sigmoid -> relaxed tolerance.
    assert max_err < 1e-2, max_err

    print("KERNEL_OK")
</pallas_src>

<mosaic_0001>
module attributes {stable_mosaic.version = 11 : i64} {
  func.func @_mlp_multiview_kernel(%arg0: i32, %arg1: i32, %arg2: memref<1x32x2048xf32, #tpu.memory_space<vmem>>, %arg3: memref<160x32xbf16, #tpu.memory_space<vmem>>, %arg4: memref<161x1xf32, #tpu.memory_space<vmem>>, %arg5: memref<48x64xbf16, #tpu.memory_space<vmem>>, %arg6: memref<32x48xbf16, #tpu.memory_space<vmem>>, %arg7: memref<16x32xbf16, #tpu.memory_space<vmem>>, %arg8: memref<1x16xbf16, #tpu.memory_space<vmem>>, %arg9: memref<1x2048xf32, #tpu.memory_space<vmem>>, %arg10: memref<1x2048xf32, #tpu.memory_space<vmem>>) attributes {dimension_semantics = [#tpu.dimension_semantics<parallel>, #tpu.dimension_semantics<arbitrary>], iteration_bounds = array<i64: 1, 3>, scalar_prefetch = 0 : i64, scratch_operands = 1 : i64, tpu.core_type = #tpu.core_type<tc>, window_params = [{transform_indices = @transform_0, window_bounds = array<i64: 1, 32, 2048>}, {pipeline_mode = #tpu.pipeline_mode<synchronous>, transform_indices = @transform_1, window_bounds = array<i64: 160, 32>}, {pipeline_mode = #tpu.pipeline_mode<synchronous>, transform_indices = @transform_2, window_bounds = array<i64: 161, 1>}, {pipeline_mode = #tpu.pipeline_mode<synchronous>, transform_indices = @transform_3, window_bounds = array<i64: 48, 64>}, {pipeline_mode = #tpu.pipeline_mode<synchronous>, transform_indices = @transform_4, window_bounds = array<i64: 32, 48>}, {pipeline_mode = #tpu.pipeline_mode<synchronous>, transform_indices = @transform_5, window_bounds = array<i64: 16, 32>}, {pipeline_mode = #tpu.pipeline_mode<synchronous>, transform_indices = @transform_6, window_bounds = array<i64: 1, 16>}, {transform_indices = @transform_7, window_bounds = array<i64: 1, 2048>}]} {
    %c0_i32 = arith.constant 0 : i32
    %0 = arith.cmpi eq, %arg1, %c0_i32 : i32
    %1 = arith.extui %0 : i1 to i32
    %c0_i32_0 = arith.constant 0 : i32
    %2 = arith.cmpi ne, %1, %c0_i32_0 : i32
    scf.if %2 {
      %cst_28 = arith.constant 0.000000e+00 : f32
      %54 = vector.broadcast %cst_28 : f32 to vector<1x2048xf32>
      %c0_29 = arith.constant 0 : index
      %c0_30 = arith.constant 0 : index
      %55 = vector.load %arg10[%c0_29, %c0_30] : memref<1x2048xf32, #tpu.memory_space<vmem>>, vector<1x2048xf32>
      tpu.vector_store %arg10[%c0_29, %c0_30], %54 {strides = array<i32>} : memref<1x2048xf32, #tpu.memory_space<vmem>>, vector<1x2048xf32>,
    } else {
    }
    %c0 = arith.constant 0 : index
    %c0_1 = arith.constant 0 : index
    %c0_2 = arith.constant 0 : index
    %3 = vector.load %arg2[%c0, %c0_1, %c0_2] : memref<1x32x2048xf32, #tpu.memory_space<vmem>>, vector<1x32x2048xf32>
    %4 = vector.shape_cast %3 : vector<1x32x2048xf32> to vector<32x2048xf32>
    %5 = arith.truncf %4 : vector<32x2048xf32> to vector<32x2048xbf16>
    %c0_3 = arith.constant 0 : index
    %c0_4 = arith.constant 0 : index
    %6 = vector.load %arg4[%c0_3, %c0_4] : memref<161x1xf32, #tpu.memory_space<vmem>>, vector<161x1xf32>
    %c0_5 = arith.constant 0 : index
    %c0_6 = arith.constant 0 : index
    %7 = vector.load %arg3[%c0_5, %c0_6] : memref<160x32xbf16, #tpu.memory_space<vmem>>, vector<160x32xbf16>
    %cst = arith.constant dense<0.000000e+00> : vector<160x2048xf32>
    %8 = tpu.matmul %7, %5, %cst {dimension_numbers = #tpu.dot_dimension_numbers<[1], [0], [0], [1], [0, 0, 1, 1], [], []>} : vector<160x32xbf16>, vector<32x2048xbf16>, vector<160x2048xf32> -> vector<160x2048xf32>
    %9 = vector.extract_strided_slice %6 {offsets = [0, 0], sizes = [160, 1], strides = [1, 1]} : vector<161x1xf32> to vector<160x1xf32>
    %10 = vector.broadcast %9 : vector<160x1xf32> to vector<160x2048xf32>
    %11 = arith.addf %8, %10 : vector<160x2048xf32>
    %12 = arith.truncf %11 : vector<160x2048xf32> to vector<160x2048xbf16>
    %13 = vector.extract_strided_slice %12 {offsets = [0, 0], sizes = [64, 2048], strides = [1, 1]} : vector<160x2048xbf16> to vector<64x2048xbf16>
    %14 = arith.extf %13 : vector<64x2048xbf16> to vector<64x2048xf32>
    %cst_7 = arith.constant 2.000000e-01 : f32
    %15 = vector.broadcast %cst_7 : f32 to vector<64x2048xf32>
    %16 = arith.mulf %15, %14 : vector<64x2048xf32>
    %17 = arith.maximumf %14, %16 : vector<64x2048xf32>
    %18 = vector.extract_strided_slice %12 {offsets = [64, 0], sizes = [48, 2048], strides = [1, 1]} : vector<160x2048xbf16> to vector<48x2048xbf16>
    %19 = arith.extf %18 : vector<48x2048xbf16> to vector<48x2048xf32>
    %c0_8 = arith.constant 0 : index
    %c0_9 = arith.constant 0 : index
    %20 = vector.load %arg5[%c0_8, %c0_9] : memref<48x64xbf16, #tpu.memory_space<vmem>>, vector<48x64xbf16>
    %21 = arith.truncf %17 : vector<64x2048xf32> to vector<64x2048xbf16>
    %cst_10 = arith.constant dense<0.000000e+00> : vector<48x2048xf32>
    %22 = tpu.matmul %20, %21, %cst_10 {dimension_numbers = #tpu.dot_dimension_numbers<[1], [0], [0], [1], [0, 0, 1, 1], [], []>} : vector<48x64xbf16>, vector<64x2048xbf16>, vector<48x2048xf32> -> vector<48x2048xf32>
    %23 = arith.addf %19, %22 : vector<48x2048xf32>
    %cst_11 = arith.constant 2.000000e-01 : f32
    %24 = vector.broadcast %cst_11 : f32 to vector<48x2048xf32>
    %25 = arith.mulf %24, %23 : vector<48x2048xf32>
    %26 = arith.maximumf %23, %25 : vector<48x2048xf32>
    %27 = vector.extract_strided_slice %12 {offsets = [112, 0], sizes = [32, 2048], strides = [1, 1]} : vector<160x2048xbf16> to vector<32x2048xbf16>
    %28 = arith.extf %27 : vector<32x2048xbf16> to vector<32x2048xf32>
    %c0_12 = arith.constant 0 : index
    %c0_13 = arith.constant 0 : index
    %29 = vector.load %arg6[%c0_12, %c0_13] : memref<32x48xbf16, #tpu.memory_space<vmem>>, vector<32x48xbf16>
    %30 = arith.truncf %26 : vector<48x2048xf32> to vector<48x2048xbf16>
    %cst_14 = arith.constant dense<0.000000e+00> : vector<32x2048xf32>
    %31 = tpu.matmul %29, %30, %cst_14 {dimension_numbers = #tpu.dot_dimension_numbers<[1], [0], [0], [1], [0, 0, 1, 1], [], []>} : vector<32x48xbf16>, vector<48x2048xbf16>, vector<32x2048xf32> -> vector<32x2048xf32>
    %32 = arith.addf %28, %31 : vector<32x2048xf32>
    %cst_15 = arith.constant 2.000000e-01 : f32
    %33 = vector.broadcast %cst_15 : f32 to vector<32x2048xf32>
    %34 = arith.mulf %33, %32 : vector<32x2048xf32>
    %35 = arith.maximumf %32, %34 : vector<32x2048xf32>
    %36 = vector.extract_strided_slice %12 {offsets = [144, 0], sizes = [16, 2048], strides = [1, 1]} : vector<160x2048xbf16> to vector<16x2048xbf16>
    %37 = arith.extf %36 : vector<16x2048xbf16> to vector<16x2048xf32>
    %c0_16 = arith.constant 0 : index
    %c0_17 = arith.constant 0 : index
    %38 = vector.load %arg7[%c0_16, %c0_17] : memref<16x32xbf16, #tpu.memory_space<vmem>>, vector<16x32xbf16>
    %39 = arith.truncf %35 : vector<32x2048xf32> to vector<32x2048xbf16>
    %cst_18 = arith.constant dense<0.000000e+00> : vector<16x2048xf32>
    %40 = tpu.matmul %38, %39, %cst_18 {dimension_numbers = #tpu.dot_dimension_numbers<[1], [0], [0], [1], [0, 0, 1, 1], [], []>} : vector<16x32xbf16>, vector<32x2048xbf16>, vector<16x2048xf32> -> vector<16x2048xf32>
    %41 = arith.addf %37, %40 : vector<16x2048xf32>
    %cst_19 = arith.constant 2.000000e-01 : f32
    %42 = vector.broadcast %cst_19 : f32 to vector<16x2048xf32>
    %43 = arith.mulf %42, %41 : vector<16x2048xf32>
    %44 = arith.maximumf %41, %43 : vector<16x2048xf32>
    %c0_20 = arith.constant 0 : index
    %c0_21 = arith.constant 0 : index
    %45 = vector.load %arg10[%c0_20, %c0_21] : memref<1x2048xf32, #tpu.memory_space<vmem>>, vector<1x2048xf32>
    %c0_22 = arith.constant 0 : index
    %c0_23 = arith.constant 0 : index
    %46 = vector.load %arg8[%c0_22, %c0_23] : memref<1x16xbf16, #tpu.memory_space<vmem>>, vector<1x16xbf16>
    %47 = arith.truncf %44 : vector<16x2048xf32> to vector<16x2048xbf16>
    %cst_24 = arith.constant dense<0.000000e+00> : vector<1x2048xf32>
    %48 = tpu.matmul %46, %47, %cst_24 {dimension_numbers = #tpu.dot_dimension_numbers<[1], [0], [0], [1], [0, 0, 1, 1], [], []>} : vector<1x16xbf16>, vector<16x2048xbf16>, vector<1x2048xf32> -> vector<1x2048xf32>
    %49 = arith.addf %45, %48 : vector<1x2048xf32>
    %c0_25 = arith.constant 0 : index
    %c0_26 = arith.constant 0 : index
    %50 = vector.load %arg10[%c0_25, %c0_26] : memref<1x2048xf32, #tpu.memory_space<vmem>>, vector<1x2048xf32>
    tpu.vector_store %arg10[%c0_25, %c0_26], %49 {strides = array<i32>} : memref<1x2048xf32, #tpu.memory_space<vmem>>, vector<1x2048xf32>,
    %c2_i32 = arith.constant 2 : i32
    %51 = arith.cmpi eq, %arg1, %c2_i32 : i32
    %52 = arith.extui %51 : i1 to i32
    %c0_i32_27 = arith.constant 0 : i32
    %53 = arith.cmpi ne, %52, %c0_i32_27 : i32
    scf.if %53 {
      %c0_28 = arith.constant 0 : index
      %c0_29 = arith.constant 0 : index
      %54 = vector.load %arg10[%c0_28, %c0_29] : memref<1x2048xf32, #tpu.memory_space<vmem>>, vector<1x2048xf32>
      %cst_30 = arith.constant 0.333333343 : f32
      %55 = vector.broadcast %cst_30 : f32 to vector<1x2048xf32>
      %56 = arith.mulf %54, %55 : vector<1x2048xf32>
      %57 = vector.extract_strided_slice %6 {offsets = [160, 0], sizes = [1, 1], strides = [1, 1]} : vector<161x1xf32> to vector<1x1xf32>
      %58 = vector.broadcast %57 : vector<1x1xf32> to vector<1x2048xf32>
      %59 = arith.addf %56, %58 : vector<1x2048xf32>
      %cst_31 = arith.constant 0.000000e+00 : f32
      %60 = vector.broadcast %cst_31 : f32 to vector<1x2048xf32>
      %61 = arith.subf %60, %59 : vector<1x2048xf32>
      %62 = math.exp %61 : vector<1x2048xf32>
      %cst_32 = arith.constant 1.000000e+00 : f32
      %63 = vector.broadcast %cst_32 : f32 to vector<1x2048xf32>
      %64 = arith.addf %63, %62 : vector<1x2048xf32>
      %65 = tpu.reciprocal %64 {approx = true} : vector<1x2048xf32> -> vector<1x2048xf32>
      %c0_33 = arith.constant 0 : index
      %c0_34 = arith.constant 0 : index
      %66 = vector.load %arg9[%c0_33, %c0_34] : memref<1x2048xf32, #tpu.memory_space<vmem>>, vector<1x2048xf32>
      tpu.vector_store %arg9[%c0_33, %c0_34], %65 {strides = array<i32>} : memref<1x2048xf32, #tpu.memory_space<vmem>>, vector<1x2048xf32>,
    } else {
    }
    return
  }
  func.func @transform_0(%arg0: i32, %arg1: i32) -> (i32, i32, i32) {
    %c0_i32 = arith.constant 0 : i32
    %c0_i32_0 = arith.constant 0 : i32
    return %arg1, %c0_i32, %arg0 : i32, i32, i32
  }
  func.func @transform_1(%arg0: i32, %arg1: i32) -> (i32, i32) {
    %c0_i32 = arith.constant 0 : i32
    %c0_i32_0 = arith.constant 0 : i32
    %c0_i32_1 = arith.constant 0 : i32
    return %c0_i32, %c0_i32_0 : i32, i32
  }
  func.func @transform_2(%arg0: i32, %arg1: i32) -> (i32, i32) {
    %c0_i32 = arith.constant 0 : i32
    %c0_i32_0 = arith.constant 0 : i32
    %c0_i32_1 = arith.constant 0 : i32
    return %c0_i32, %c0_i32_0 : i32, i32
  }
  func.func @transform_3(%arg0: i32, %arg1: i32) -> (i32, i32) {
    %c0_i32 = arith.constant 0 : i32
    %c0_i32_0 = arith.constant 0 : i32
    %c0_i32_1 = arith.constant 0 : i32
    return %c0_i32, %c0_i32_0 : i32, i32
  }
  func.func @transform_4(%arg0: i32, %arg1: i32) -> (i32, i32) {
    %c0_i32 = arith.constant 0 : i32
    %c0_i32_0 = arith.constant 0 : i32
    %c0_i32_1 = arith.constant 0 : i32
    return %c0_i32, %c0_i32_0 : i32, i32
  }
  func.func @transform_5(%arg0: i32, %arg1: i32) -> (i32, i32) {
    %c0_i32 = arith.constant 0 : i32
    %c0_i32_0 = arith.constant 0 : i32
    %c0_i32_1 = arith.constant 0 : i32
    return %c0_i32, %c0_i32_0 : i32, i32
  }
  func.func @transform_6(%arg0: i32, %arg1: i32) -> (i32, i32) {
    %c0_i32 = arith.constant 0 : i32
    %c0_i32_0 = arith.constant 0 : i32
    %c0_i32_1 = arith.constant 0 : i32
    return %c0_i32, %c0_i32_0 : i32, i32
  }
  func.func @transform_7(%arg0: i32, %arg1: i32) -> (i32, i32) {
    %c0_i32 = arith.constant 0 : i32
    %c0_i32_0 = arith.constant 0 : i32
    return %c0_i32, %arg0 : i32, i32
  }
}

</mosaic_0001>

<llo_original>
// kernel: pamir_mlp_multiview_forward.1
$region0: #{pamir_mlp_multiview_forward.1}
  #allocation0 [shape = 'u32[]', space=smem, size = 0x4, offset = 0x4, fixed_abs, tag = 'smem constant byte address 0x4 - core index']
  #allocation1 [shape = 'u32[72,128]{1,0:T(1,128)}', space=vmem, size = 0x9000, scoped, tag = 'internal scratch']
  #allocation2 [shape = 'f32[1,2048]{1,0:T(1,128)}', space=vmem, size = 0x2000, scoped, tag = 'scratch operand']
  %s0 = inlined_call_operand.hbm [shape: f32[3,32,2048], index: 0, kind: input, shape index: {}]
  %s1 = inlined_call_operand.vmem [shape: bf16[160,32], index: 1, kind: input, shape index: {}]
  %s2 = inlined_call_operand.vmem [shape: f32[161,1], index: 2, kind: input, shape index: {}]
  %s3 = inlined_call_operand.vmem [shape: bf16[48,64], index: 3, kind: input, shape index: {}]
  %s4 = inlined_call_operand.vmem [shape: bf16[32,48], index: 4, kind: input, shape index: {}]
  %s5 = inlined_call_operand.vmem [shape: bf16[16,32], index: 5, kind: input, shape index: {}]
  %s6 = inlined_call_operand.vmem [shape: bf16[1,16], index: 6, kind: input, shape index: {}]
  %s7 = inlined_call_operand.hbm [shape: f32[1,2048], index: 7, kind: output, shape index: {}]
  %s8 = sld [smem:[#allocation0]]
  $region73: #{pamir_mlp_multiview_forward.1} parent=0
    _
  %s10 = ssub.s32 1, %s8
  %s11 = scalar_select 0, %s10, %s8
  $region1: #{pamir_mlp_multiview_forward.1} parent=0
    #allocation3 [shape = 'u8[524288]{0}', space=vmem, size = 0x80000, scoped, tag = 'input window, operand 0']
    #allocation4 [shape = 's32[2]{0}', space=sflag, size = 0x8, scoped, tag = 'scoped memory for pamir_mlp_multiview_forward.1']
    #allocation5 [shape = 's32[2]{0}', space=sflag, size = 0x8, scoped, tag = 'scoped memory for pamir_mlp_multiview_forward.1']
    #allocation6 [shape = 'u8[8192]{0}', space=vmem, size = 0x2000, scoped, tag = 'output window, operand 0, single buffered']
    %12 = vsyncpa [#allocation4], 0
    %s13 = scalar_lea.sflag [#allocation4], 1
    %14 = vsyncpa %s13, 0
    %15 = vsyncpa [#allocation5], 0
    loop: start=0, step=1, limit=5
    $region2: #{pamir_mlp_multiview_forward.1} parent=1 // loop_pre_header
      _
    $region3: #{pamir_mlp_multiview_forward.1} parent=1 // loop_header
      %s17 = sphi 0, %s21
      %p18 = scmp.ge.s32.totalorder %s17, 5
      %s24 = sphi 0, %s36
      %s25 = sphi 0, %s32
      %s26 = sphi 0, %s24
      %s27 = sphi 0, %s25
      %s28 = sphi 0, %s26
      %s29 = sphi 0, %s27
      %s41 = sphi 0, %s43
      %s44 = sphi 0, %s41
      %s45 = sphi 0, %s44
      %s61 = sphi 0, %s45
      %s65 = sphi 0, %s65
      %s67 = sphi 0, %s65
      %s68 = sphi 0, %s67
      %s82 = sphi 0, %s68
      %s86 = sphi 0, %s86
      %s88 = sphi 0, %s86
      %s89 = sphi 0, %s88
      %s103 = sphi 0, %s89
      %s107 = sphi 0, %s107
      %s109 = sphi 0, %s107
      %s110 = sphi 0, %s109
      %s124 = sphi 0, %s110
      %s128 = sphi 0, %s128
      %s130 = sphi 0, %s128
      %s131 = sphi 0, %s130
      %s145 = sphi 0, %s131
      %s149 = sphi 0, %s149
      %s151 = sphi 0, %s149
      %s152 = sphi 0, %s151
      %s166 = sphi 0, %s152
      %s170 = sphi 0, %s170
      %s172 = sphi 0, %s170
      %s173 = sphi 0, %s172
      %s187 = sphi 0, %s173
      %s193 = sphi 0, %s195
      %s196 = sphi 0, %s193
      %s197 = sphi 0, %s196
      %s213 = sphi 0, %s197
    $region4: #{pamir_mlp_multiview_forward.1} parent=1 // loop_header_branch
      %20 = sbr.rel (%p18) target = $region8
    $region5: #{pamir_mlp_multiview_forward.1} parent=1 // loop_body
      %s22 = ssub.s32 %s17, 1
      %s23 = ssub.s32 %s17, 2
      %s30 = sadd.s32 1, %s25
      %p31 = scmp.ge.s32.totalorder %s30, 3
      %s32 = scalar_select %p31, 0, %s30
      %s33 = sadd.s32 1, %s24
      %s34 = scalar_select %p31, %s33, %s24
      %p35 = scmp.ge.s32.totalorder %s34, 1
      %s36 = scalar_select %p35, 0, %s34
      %s37 = ssub.s32 %s25, %s32
      %s38 = ssub.s32 %s24, %s36
      %s39 = sor.u32 %s37, %s38
      %p40 = scmp.eq.s32.totalorder %s39, 0
      %s42 = sadd.s32 %s41, 1
      %s43 = scalar_select %p40, %s41, %s42
      %p46 = pneg %p40
      %p47 = scmp.eq.s32.totalorder %s17, 2
      %p48 = por %p46, %p47
      %p49 = scmp.ne.s32.totalorder %s41, %s44
      %p50 = scmp.eq.s32.totalorder %s17, 0
      %p51 = por %p49, %p50
      %p52 = scmp.ne.s32.totalorder %s41, %s44
      %p53 = scmp.eq.s32.totalorder %s22, 2
      %p54 = por %p52, %p53
      %p55 = scmp.ne.s32.totalorder %s44, %s45
      %p56 = scmp.eq.s32.totalorder %s22, 0
      %p57 = por %p55, %p56
      %p58 = scmp.ne.s32.totalorder %s44, %s45
      %p59 = scmp.eq.s32.totalorder %s23, 2
      %p60 = por %p58, %p59
      %p62 = scmp.ne.s32.totalorder %s45, %s61
      %p63 = scmp.eq.s32.totalorder %s23, 0
      %p64 = por %p62, %p63
      %s66 = sadd.s32 %s65, 1
      %p69 = scmp.eq.s32.totalorder %s17, 2
      %p70 = scmp.ne.s32.totalorder %s65, %s67
      %p71 = scmp.eq.s32.totalorder %s17, 0
      %p72 = por %p70, %p71
      %p73 = scmp.ne.s32.totalorder %s65, %s67
      %p74 = scmp.eq.s32.totalorder %s22, 2
      %p75 = por %p73, %p74
      %p76 = scmp.ne.s32.totalorder %s67, %s68
      %p77 = scmp.eq.s32.totalorder %s22, 0
      %p78 = por %p76, %p77
      %p79 = scmp.ne.s32.totalorder %s67, %s68
      %p80 = scmp.eq.s32.totalorder %s23, 2
      %p81 = por %p79, %p80
      %p83 = scmp.ne.s32.totalorder %s68, %s82
      %p84 = scmp.eq.s32.totalorder %s23, 0
      %p85 = por %p83, %p84
      %s87 = sadd.s32 %s86, 1
      %p90 = scmp.eq.s32.totalorder %s17, 2
      %p91 = scmp.ne.s32.totalorder %s86, %s88
      %p92 = scmp.eq.s32.totalorder %s17, 0
      %p93 = por %p91, %p92
      %p94 = scmp.ne.s32.totalorder %s86, %s88
      %p95 = scmp.eq.s32.totalorder %s22, 2
      %p96 = por %p94, %p95
      %p97 = scmp.ne.s32.totalorder %s88, %s89
      %p98 = scmp.eq.s32.totalorder %s22, 0
      %p99 = por %p97, %p98
      %p100 = scmp.ne.s32.totalorder %s88, %s89
      %p101 = scmp.eq.s32.totalorder %s23, 2
      %p102 = por %p100, %p101
      %p104 = scmp.ne.s32.totalorder %s89, %s103
      %p105 = scmp.eq.s32.totalorder %s23, 0
      %p106 = por %p104, %p105
      %s108 = sadd.s32 %s107, 1
      %p111 = scmp.eq.s32.totalorder %s17, 2
      %p112 = scmp.ne.s32.totalorder %s107, %s109
      %p113 = scmp.eq.s32.totalorder %s17, 0
      %p114 = por %p112, %p113
      %p115 = scmp.ne.s32.totalorder %s107, %s109
      %p116 = scmp.eq.s32.totalorder %s22, 2
      %p117 = por %p115, %p116
      %p118 = scmp.ne.s32.totalorder %s109, %s110
      %p119 = scmp.eq.s32.totalorder %s22, 0
      %p120 = por %p118, %p119
      %p121 = scmp.ne.s32.totalorder %s109, %s110
      %p122 = scmp.eq.s32.totalorder %s23, 2
      %p123 = por %p121, %p122
      %p125 = scmp.ne.s32.totalorder %s110, %s124
      %p126 = scmp.eq.s32.totalorder %s23, 0
      %p127 = por %p125, %p126
      %s129 = sadd.s32 %s128, 1
      %p132 = scmp.eq.s32.totalorder %s17, 2
      %p133 = scmp.ne.s32.totalorder %s128, %s130
      %p134 = scmp.eq.s32.totalorder %s17, 0
      %p135 = por %p133, %p134
      %p136 = scmp.ne.s32.totalorder %s128, %s130
      %p137 = scmp.eq.s32.totalorder %s22, 2
      %p138 = por %p136, %p137
      %p139 = scmp.ne.s32.totalorder %s130, %s131
      %p140 = scmp.eq.s32.totalorder %s22, 0
      %p141 = por %p139, %p140
      %p142 = scmp.ne.s32.totalorder %s130, %s131
      %p143 = scmp.eq.s32.totalorder %s23, 2
      %p144 = por %p142, %p143
      %p146 = scmp.ne.s32.totalorder %s131, %s145
      %p147 = scmp.eq.s32.totalorder %s23, 0
      %p148 = por %p146, %p147
      %s150 = sadd.s32 %s149, 1
      %p153 = scmp.eq.s32.totalorder %s17, 2
      %p154 = scmp.ne.s32.totalorder %s149, %s151
      %p155 = scmp.eq.s32.totalorder %s17, 0
      %p156 = por %p154, %p155
      %p157 = scmp.ne.s32.totalorder %s149, %s151
      %p158 = scmp.eq.s32.totalorder %s22, 2
      %p159 = por %p157, %p158
      %p160 = scmp.ne.s32.totalorder %s151, %s152
      %p161 = scmp.eq.s32.totalorder %s22, 0
      %p162 = por %p160, %p161
      %p163 = scmp.ne.s32.totalorder %s151, %s152
      %p164 = scmp.eq.s32.totalorder %s23, 2
      %p165 = por %p163, %p164
      %p167 = scmp.ne.s32.totalorder %s152, %s166
      %p168 = scmp.eq.s32.totalorder %s23, 0
      %p169 = por %p167, %p168
      %s171 = sadd.s32 %s170, 1
      %p174 = scmp.eq.s32.totalorder %s17, 2
      %p175 = scmp.ne.s32.totalorder %s170, %s172
      %p176 = scmp.eq.s32.totalorder %s17, 0
      %p177 = por %p175, %p176
      %p178 = scmp.ne.s32.totalorder %s170, %s172
      %p179 = scmp.eq.s32.totalorder %s22, 2
      %p180 = por %p178, %p179
      %p181 = scmp.ne.s32.totalorder %s172, %s173
      %p182 = scmp.eq.s32.totalorder %s22, 0
      %p183 = por %p181, %p182
      %p184 = scmp.ne.s32.totalorder %s172, %s173
      %p185 = scmp.eq.s32.totalorder %s23, 2
      %p186 = por %p184, %p185
      %p188 = scmp.ne.s32.totalorder %s173, %s187
      %p189 = scmp.eq.s32.totalorder %s23, 0
      %p190 = por %p188, %p189
      %s191 = ssub.s32 %s24, %s36
      %p192 = scmp.eq.s32.totalorder %s191, 0
      %s194 = sadd.s32 %s193, 1
      %s195 = scalar_select %p192, %s193, %s194
      %p198 = pneg %p192
      %p199 = scmp.eq.s32.totalorder %s17, 2
      %p200 = por %p198, %p199
      %p201 = scmp.ne.s32.totalorder %s193, %s196
      %p202 = scmp.eq.s32.totalorder %s17, 0
      %p203 = por %p201, %p202
      %p204 = scmp.ne.s32.totalorder %s193, %s196
      %p205 = scmp.eq.s32.totalorder %s22, 2
      %p206 = por %p204, %p205
      %p207 = scmp.ne.s32.totalorder %s196, %s197
      %p208 = scmp.eq.s32.totalorder %s22, 0
      %p209 = por %p207, %p208
      %p210 = scmp.ne.s32.totalorder %s196, %s197
      %p211 = scmp.eq.s32.totalorder %s23, 2
      %p212 = por %p210, %p211
      %p214 = scmp.ne.s32.totalorder %s197, %s213
      %p215 = scmp.eq.s32.totalorder %s23, 0
      %p216 = por %p214, %p215
      %p217 = scmp.le.s32.totalorder 1, %s17
      %p218 = scmp.lt.s32.totalorder %s17, 4
      %p219 = pnand %p217, %p218
      %p220 = pneg %p219
      // Predicated region
      $region9: #{pamir_mlp_multiview_forward.1} parent=5 // pred_check
        _
      $region10: #{pamir_mlp_multiview_forward.1} parent=5 // pred_check_branch
        %222 = sbr.rel (%p219) target = $region12
      $region11: #{pamir_mlp_multiview_forward.1} parent=5 // pred_region
        %s223 = ssub.s32 %s17, 1
        // Predicated region
        $region13: #{pamir_mlp_multiview_forward.1} parent=11 // pred_check
          %p224 = pneg %p78
        $region14: #{pamir_mlp_multiview_forward.1} parent=11 // pred_check_branch
          %226 = sbr.rel (%p224) target = $region16
        $region15: #{pamir_mlp_multiview_forward.1} parent=11 // pred_region
          _
        $region16: #{pamir_mlp_multiview_forward.1} parent=11 // pred_fallthru
          _
        // Predicated region
        $region17: #{pamir_mlp_multiview_forward.1} parent=11 // pred_check
          %p227 = pneg %p99
        $region18: #{pamir_mlp_multiview_forward.1} parent=11 // pred_check_branch
          %229 = sbr.rel (%p227) target = $region20
        $region19: #{pamir_mlp_multiview_forward.1} parent=11 // pred_region
          _
        $region20: #{pamir_mlp_multiview_forward.1} parent=11 // pred_fallthru
          _
        // Predicated region
        $region21: #{pamir_mlp_multiview_forward.1} parent=11 // pred_check
          %p230 = pneg %p120
        $region22: #{pamir_mlp_multiview_forward.1} parent=11 // pred_check_branch
          %232 = sbr.rel (%p230) target = $region24
        $region23: #{pamir_mlp_multiview_forward.1} parent=11 // pred_region
          _
        $region24: #{pamir_mlp_multiview_forward.1} parent=11 // pred_fallthru
          _
        // Predicated region
        $region25: #{pamir_mlp_multiview_forward.1} parent=11 // pred_check
          %p233 = pneg %p141
        $region26: #{pamir_mlp_multiview_forward.1} parent=11 // pred_check_branch
          %235 = sbr.rel (%p233) target = $region28
        $region27: #{pamir_mlp_multiview_forward.1} parent=11 // pred_region
          _
        $region28: #{pamir_mlp_multiview_forward.1} parent=11 // pred_fallthru
          _
        // Predicated region
        $region29: #{pamir_mlp_multiview_forward.1} parent=11 // pred_check
          %p236 = pneg %p162
        $region30: #{pamir_mlp_multiview_forward.1} parent=11 // pred_check_branch
          %238 = sbr.rel (%p236) target = $region32
        $region31: #{pamir_mlp_multiview_forward.1} parent=11 // pred_region
          _
        $region32: #{pamir_mlp_multiview_forward.1} parent=11 // pred_fallthru
          _
        // Predicated region
        $region33: #{pamir_mlp_multiview_forward.1} parent=11 // pred_check
          %p239 = pneg %p183
        $region34: #{pamir_mlp_multiview_forward.1} parent=11 // pred_check_branch
          %241 = sbr.rel (%p239) target = $region36
        $region35: #{pamir_mlp_multiview_forward.1} parent=11 // pred_region
          _
        $region36: #{pamir_mlp_multiview_forward.1} parent=11 // pred_fallthru
          _
      $region12: #{pamir_mlp_multiview_forward.1} parent=5 // pred_fallthru
        _
      %p242 = scmp.lt.s32.totalorder %s17, 3
      // Predicated region
      $region37: #{pamir_mlp_multiview_forward.1} parent=5 // pred_check
        %p243 = pneg %p242
      $region38: #{pamir_mlp_multiview_forward.1} parent=5 // pred_check_branch
        %245 = sbr.rel (%p243) target = $region40
      $region39: #{pamir_mlp_multiview_forward.1} parent=5 // pred_region
        // Predicated region
        $region41: #{pamir_mlp_multiview_forward.1} parent=39 // pred_check
          %p246 = pneg %p51
        $region42: #{pamir_mlp_multiview_forward.1} parent=39 // pred_check_branch
          %248 = sbr.rel (%p246) target = $region44
        $region43: #{pamir_mlp_multiview_forward.1} parent=39 // pred_region
          %s249 = sand.u32 %s41, 1
          %s250 = scalar_lea.sflag [#allocation4], %s249
          %s251 = sand.u32 %s41, 1
          %s252 = smul.addr %s251, 512
          %s253 = scalar_lea.vmem [#allocation3], %s252
          %s254 = smul.u32 16, %s24
          %256 = vsyncadd %s250, 0
          %s257 = smul.addr %s25, 64
          %s258 = sadd.s32 %s254, %s257
          %s259 = smul.addr %s258, 8
          %s260 = scalar_lea.hbm %s0, %s259
          %s261 = sshll.u32 %s260, 4
          %s262 = int_to_ptr.hbm [resolvable:$true] %s261
          %s263 = sshll.u32 %s253, 4
          %s264 = int_to_ptr.vmem [resolvable:$true] %s263
          %269 = dma.hbm_to_vmem [thread:$0]  %s262, 8192, %s264, %s250, 2048, 2048, 128
        $region44: #{pamir_mlp_multiview_forward.1} parent=39 // pred_fallthru
          _
      $region40: #{pamir_mlp_multiview_forward.1} parent=5 // pred_fallthru
        _
      %p270 = scmp.le.s32.totalorder 1, %s17
      %p271 = scmp.lt.s32.totalorder %s17, 4
      %p272 = pnand %p270, %p271
      %p273 = pneg %p272
      // Predicated region
      $region45: #{pamir_mlp_multiview_forward.1} parent=5 // pred_check
        _
      $region46: #{pamir_mlp_multiview_forward.1} parent=5 // pred_check_branch
        %275 = sbr.rel (%p272) target = $region48
      $region47: #{pamir_mlp_multiview_forward.1} parent=5 // pred_region
        %s276 = ssub.s32 %s17, 1
        %s277 = sand.u32 %s44, 1
        %s278 = scalar_lea.sflag [#allocation4], %s277
        %s279 = sand.u32 %s44, 1
        %s280 = smul.addr %s279, 512
        %s281 = scalar_lea.vmem [#allocation3], %s280
        // Predicated region
        $region49: #{pamir_mlp_multiview_forward.1} parent=47 // pred_check
          %p282 = pneg %p57
        $region50: #{pamir_mlp_multiview_forward.1} parent=47 // pred_check_branch
          %284 = sbr.rel (%p282) target = $region52
        $region51: #{pamir_mlp_multiview_forward.1} parent=47 // pred_region
          %286 = dma.done %s278, 8192
        $region52: #{pamir_mlp_multiview_forward.1} parent=47 // pred_fallthru
          _
        %s287 = sand.u32 %s44, 1
        %s288 = scalar_lea.sflag [#allocation4], %s287
        %s289 = sand.u32 %s44, 1
        %s290 = smul.addr %s289, 512
        %s291 = scalar_lea.vmem [#allocation3], %s290
        %p292 = pneg %p57
        %p293 = pneg %p54
        %p294 = pneg %p78
        %p295 = pneg %p75
        %p296 = pneg %p99
        %p297 = pneg %p96
        %p298 = pneg %p120
        %p299 = pneg %p117
        %p300 = pneg %p141
        %p301 = pneg %p138
        %p302 = pneg %p162
        %p303 = pneg %p159
        %p304 = pneg %p183
        %p305 = pneg %p180
        %p306 = pneg %p209
        %p307 = pneg %p206
        %s308 = smul.u32 16, %s26
        %s309 = smul.u32 16, %s26
        %p311 = scmp.eq.s32.totalorder %s27, 0
        // Predicated region
        $region53: #{pamir_mlp_multiview_forward.1} parent=47 // pred_check
          %p312 = pneg %p311
        $region54: #{pamir_mlp_multiview_forward.1} parent=47 // pred_check_branch
          %314 = sbr.rel (%p312) target = $region56
        $region55: #{pamir_mlp_multiview_forward.1} parent=47 // pred_region
          %315 = vst [vmem:[#allocation2] sm:$0xff] 0.0
          %316 = vst [vmem:[#allocation2 + $0x8] sm:$0xff] 0.0
        $region56: #{pamir_mlp_multiview_forward.1} parent=47 // pred_fallthru
          _
        %v317 = vld [vmem:[%s281] sm:$0xff]
        %v318 = vld [vmem:[%s281 + $0x8] sm:$0xff]
        %v319 = vld [vmem:[%s281 + $0x10] sm:$0xff]
        %v320 = vld [vmem:[%s281 + $0x18] sm:$0xff]
        %v321 = vld [vmem:[%s281 + $0x20] sm:$0xff]
        %v322 = vld [vmem:[%s281 + $0x28] sm:$0xff]
        %v323 = vld [vmem:[%s281 + $0x30] sm:$0xff]
        %v324 = vld [vmem:[%s281 + $0x38] sm:$0xff]
        %v325 = vld [vmem:[%s281 + $0x40] sm:$0xff]
        %v326 = vld [vmem:[%s281 + $0x48] sm:$0xff]
        %v327 = vld [vmem:[%s281 + $0x50] sm:$0xff]
        %v328 = vld [vmem:[%s281 + $0x58] sm:$0xff]
        %v329 = vld [vmem:[%s281 + $0x60] sm:$0xff]
        %v330 = vld [vmem:[%s281 + $0x68] sm:$0xff]
        %v331 = vld [vmem:[%s281 + $0x70] sm:$0xff]
        %v332 = vld [vmem:[%s281 + $0x78] sm:$0xff]
        %v333 = vld [vmem:[%s281 + $0x80] sm:$0xff]
        %v334 = vld [vmem:[%s281 + $0x88] sm:$0xff]
        %v335 = vld [vmem:[%s281 + $0x90] sm:$0xff]
        %v336 = vld [vmem:[%s281 + $0x98] sm:$0xff]
        %v337 = vld [vmem:[%s281 + $0xa0] sm:$0xff]
        %v338 = vld [vmem:[%s281 + $0xa8] sm:$0xff]
        %v339 = vld [vmem:[%s281 + $0xb0] sm:$0xff]
        %v340 = vld [vmem:[%s281 + $0xb8] sm:$0xff]
        %v341 = vld [vmem:[%s281 + $0xc0] sm:$0xff]
        %v342 = vld [vmem:[%s281 + $0xc8] sm:$0xff]
        %v343 = vld [vmem:[%s281 + $0xd0] sm:$0xff]
        %v344 = vld [vmem:[%s281 + $0xd8] sm:$0xff]
        %v345 = vld [vmem:[%s281 + $0xe0] sm:$0xff]
        %v346 = vld [vmem:[%s281 + $0xe8] sm:$0xff]
        %v347 = vld [vmem:[%s281 + $0xf0] sm:$0xff]
        %v348 = vld [vmem:[%s281 + $0xf8] sm:$0xff]
        %v349 = vld [vmem:[%s281 + $0x100] sm:$0xff]
        %v350 = vld [vmem:[%s281 + $0x108] sm:$0xff]
        %v351 = vld [vmem:[%s281 + $0x110] sm:$0xff]
        %v352 = vld [vmem:[%s281 + $0x118] sm:$0xff]
        %v353 = vld [vmem:[%s281 + $0x120] sm:$0xff]
        %v354 = vld [vmem:[%s281 + $0x128] sm:$0xff]
        %v355 = vld [vmem:[%s281 + $0x130] sm:$0xff]
        %v356 = vld [vmem:[%s281 + $0x138] sm:$0xff]
        %v357 = vld [vmem:[%s281 + $0x140] sm:$0xff]
        %v358 = vld [vmem:[%s281 + $0x148] sm:$0xff]
        %v359 = vld [vmem:[%s281 + $0x150] sm:$0xff]
        %v360 = vld [vmem:[%s281 + $0x158] sm:$0xff]
        %v361 = vld [vmem:[%s281 + $0x160] sm:$0xff]
        %v362 = vld [vmem:[%s281 + $0x168] sm:$0xff]
        %v363 = vld [vmem:[%s281 + $0x170] sm:$0xff]
        %v364 = vld [vmem:[%s281 + $0x178] sm:$0xff]
        %v365 = vld [vmem:[%s281 + $0x180] sm:$0xff]
        %v366 = vld [vmem:[%s281 + $0x188] sm:$0xff]
        %v367 = vld [vmem:[%s281 + $0x190] sm:$0xff]
        %v368 = vld [vmem:[%s281 + $0x198] sm:$0xff]
        %v369 = vld [vmem:[%s281 + $0x1a0] sm:$0xff]
        %v370 = vld [vmem:[%s281 + $0x1a8] sm:$0xff]
        %v371 = vld [vmem:[%s281 + $0x1b0] sm:$0xff]
        %v372 = vld [vmem:[%s281 + $0x1b8] sm:$0xff]
        %v373 = vld [vmem:[%s281 + $0x1c0] sm:$0xff]
        %v374 = vld [vmem:[%s281 + $0x1c8] sm:$0xff]
        %v375 = vld [vmem:[%s281 + $0x1d0] sm:$0xff]
        %v376 = vld [vmem:[%s281 + $0x1d8] sm:$0xff]
        %v377 = vld [vmem:[%s281 + $0x1e0] sm:$0xff]
        %v378 = vld [vmem:[%s281 + $0x1e8] sm:$0xff]
        %v379 = vld [vmem:[%s281 + $0x1f0] sm:$0xff]
        %v380 = vld [vmem:[%s281 + $0x1f8] sm:$0xff]
        %v381 = vpack.c.bf16 %v333, %v317
        %v382 = vpack.c.bf16 %v334, %v318
        %v383 = vpack.c.bf16 %v335, %v319
        %v384 = vpack.c.bf16 %v336, %v320
        %v385 = vpack.c.bf16 %v337, %v321
        %v386 = vpack.c.bf16 %v338, %v322
        %v387 = vpack.c.bf16 %v339, %v323
        %v388 = vpack.c.bf16 %v340, %v324
        %v389 = vpack.c.bf16 %v341, %v325
        %v390 = vpack.c.bf16 %v342, %v326
        %v391 = vpack.c.bf16 %v343, %v327
        %v392 = vpack.c.bf16 %v344, %v328
        %v393 = vpack.c.bf16 %v345, %v329
        %v394 = vpack.c.bf16 %v346, %v330
        %v395 = vpack.c.bf16 %v347, %v331
        %v396 = vpack.c.bf16 %v348, %v332
        %v397 = vpack.c.bf16 %v365, %v349
        %v398 = vpack.c.bf16 %v366, %v350
        %v399 = vpack.c.bf16 %v367, %v351
        %v400 = vpack.c.bf16 %v368, %v352
        %v401 = vpack.c.bf16 %v369, %v353
        %v402 = vpack.c.bf16 %v370, %v354
        %v403 = vpack.c.bf16 %v371, %v355
        %v404 = vpack.c.bf16 %v372, %v356
        %v405 = vpack.c.bf16 %v373, %v357
        %v406 = vpack.c.bf16 %v374, %v358
        %v407 = vpack.c.bf16 %v375, %v359
        %v408 = vpack.c.bf16 %v376, %v360
        %v409 = vpack.c.bf16 %v377, %v361
        %v410 = vpack.c.bf16 %v378, %v362
        %v411 = vpack.c.bf16 %v379, %v363
        %v412 = vpack.c.bf16 %v380, %v364
        %v413 = vld [vmem:[%s2] sm:$0xff]
        %v414 = vld [vmem:[%s2 + $0x8] sm:$0xff]
        %v415 = vld [vmem:[%s2 + $0x10] sm:$0xff]
        %v416 = vld [vmem:[%s2 + $0x18] sm:$0xff]
        %v417 = vld [vmem:[%s2 + $0x20] sm:$0xff]
        %v418 = vld [vmem:[%s2 + $0x28] sm:$0xff]
        %v419 = vld [vmem:[%s2 + $0x30] sm:$0xff]
        %v420 = vld [vmem:[%s2 + $0x38] sm:$0xff]
        %v421 = vld [vmem:[%s2 + $0x40] sm:$0xff]
        %v422 = vld [vmem:[%s2 + $0x48] sm:$0xff]
        %v423 = vld [vmem:[%s2 + $0x50] sm:$0xff]
        %v424 = vld [vmem:[%s2 + $0x58] sm:$0xff]
        %v425 = vld [vmem:[%s2 + $0x60] sm:$0xff]
        %v426 = vld [vmem:[%s2 + $0x68] sm:$0xff]
        %v427 = vld [vmem:[%s2 + $0x70] sm:$0xff]
        %v428 = vld [vmem:[%s2 + $0x78] sm:$0xff]
        %v429 = vld [vmem:[%s2 + $0x80] sm:$0xff]
        %v430 = vld [vmem:[%s2 + $0x88] sm:$0xff]
        %v431 = vld [vmem:[%s2 + $0x90] sm:$0xff]
        %v432 = vld [vmem:[%s2 + $0x98] sm:$0xff]
        %v433 = vld [vmem:[%s2 + $0xa0] sm:$0x1]
        %v434 = vld [vmem:[%s1] sm:$0xf]
        %v435 = vld [vmem:[%s1 + $0x4] sm:$0xf]
        %v436 = vld [vmem:[%s1 + $0x8] sm:$0xf]
        %v437 = vld [vmem:[%s1 + $0xc] sm:$0xf]
        %v438 = vld [vmem:[%s1 + $0x10] sm:$0xf]
        %v439 = vld [vmem:[%s1 + $0x14] sm:$0xf]
        %v440 = vld [vmem:[%s1 + $0x18] sm:$0xf]
        %v441 = vld [vmem:[%s1 + $0x1c] sm:$0xf]
        %v442 = vld [vmem:[%s1 + $0x20] sm:$0xf]
        %v443 = vld [vmem:[%s1 + $0x24] sm:$0xf]
        %v444 = vld [vmem:[%s1 + $0x28] sm:$0xf]
        %v445 = vld [vmem:[%s1 + $0x2c] sm:$0xf]
        %v446 = vld [vmem:[%s1 + $0x30] sm:$0xf]
        %v447 = vld [vmem:[%s1 + $0x34] sm:$0xf]
        %v448 = vld [vmem:[%s1 + $0x38] sm:$0xf]
        %v449 = vld [vmem:[%s1 + $0x3c] sm:$0xf]
        %v450 = vld [vmem:[%s1 + $0x40] sm:$0xf]
        %v451 = vld [vmem:[%s1 + $0x44] sm:$0xf]
        %v452 = vld [vmem:[%s1 + $0x48] sm:$0xf]
        %v453 = vld [vmem:[%s1 + $0x4c] sm:$0xf]
        %455 = vset.pattern.permute.xlu0 0
        %456 = vperm.xlu0 %455, %v413
        %v457 = vpop.permute.xlu0 %456
        %460 = vset.pattern.permute.xlu0 0
        %461 = vperm.xlu0 %460, %v414
        %v462 = vpop.permute.xlu0 %461
        %465 = vset.pattern.permute.xlu0 0
        %466 = vperm.xlu0 %465, %v415
        %v467 = vpop.permute.xlu0 %466
        %470 = vset.pattern.permute.xlu0 0
        %471 = vperm.xlu0 %470, %v416
        %v472 = vpop.permute.xlu0 %471
        %475 = vset.pattern.permute.xlu0 0
        %476 = vperm.xlu0 %475, %v417
        %v477 = vpop.permute.xlu0 %476
        %480 = vset.pattern.permute.xlu0 0
        %481 = vperm.xlu0 %480, %v418
        %v482 = vpop.permute.xlu0 %481
        %485 = vset.pattern.permute.xlu0 0
        %486 = vperm.xlu0 %485, %v419
        %v487 = vpop.permute.xlu0 %486
        %490 = vset.pattern.permute.xlu0 0
        %491 = vperm.xlu0 %490, %v420
        %v492 = vpop.permute.xlu0 %491
        %495 = vset.pattern.permute.xlu0 0
        %496 = vperm.xlu0 %495, %v421
        %v497 = vpop.permute.xlu0 %496
        %500 = vset.pattern.permute.xlu0 0
        %501 = vperm.xlu0 %500, %v422
        %v502 = vpop.permute.xlu0 %501
        %505 = vset.pattern.permute.xlu0 0
        %506 = vperm.xlu0 %505, %v423
        %v507 = vpop.permute.xlu0 %506
        %510 = vset.pattern.permute.xlu0 0
        %511 = vperm.xlu0 %510, %v424
        %v512 = vpop.permute.xlu0 %511
        %515 = vset.pattern.permute.xlu0 0
        %516 = vperm.xlu0 %515, %v425
        %v517 = vpop.permute.xlu0 %516
        %520 = vset.pattern.permute.xlu0 0
        %521 = vperm.xlu0 %520, %v426
        %v522 = vpop.permute.xlu0 %521
        %525 = vset.pattern.permute.xlu0 0
        %526 = vperm.xlu0 %525, %v427
        %v527 = vpop.permute.xlu0 %526
        %530 = vset.pattern.permute.xlu0 0
        %531 = vperm.xlu0 %530, %v428
        %v532 = vpop.permute.xlu0 %531
        %535 = vset.pattern.permute.xlu0 0
        %536 = vperm.xlu0 %535, %v429
        %v537 = vpop.permute.xlu0 %536
        %540 = vset.pattern.permute.xlu0 0
        %541 = vperm.xlu0 %540, %v430
        %v542 = vpop.permute.xlu0 %541
        %545 = vset.pattern.permute.xlu0 0
        %546 = vperm.xlu0 %545, %v431
        %v547 = vpop.permute.xlu0 %546
        %550 = vset.pattern.permute.xlu0 0
        %551 = vperm.xlu0 %550, %v432
        %v552 = vpop.permute.xlu0 %551
        %v574 = vunpack.c.l.b16 %v434
        %v575 = vunpack.c.l.b16 %v435
        %v576 = vunpack.c.l.b16 %v436
        %v577 = vunpack.c.l.b16 %v437
        %v578 = vunpack.c.l.b16 %v438
        %v579 = vunpack.c.l.b16 %v439
        %v580 = vunpack.c.l.b16 %v440
        %v581 = vunpack.c.l.b16 %v441
        %v582 = vunpack.c.l.b16 %v442
        %v583 = vunpack.c.l.b16 %v443
        %v584 = vunpack.c.l.b16 %v444
        %v585 = vunpack.c.l.b16 %v445
        %v586 = vunpack.c.l.b16 %v446
        %v587 = vunpack.c.l.b16 %v447
        %v588 = vunpack.c.l.b16 %v448
        %v589 = vunpack.c.l.b16 %v449
        %v590 = vunpack.c.l.b16 %v450
        %v591 = vunpack.c.l.b16 %v451
        %v592 = vunpack.c.l.b16 %v452
        %v593 = vunpack.c.l.b16 %v453
        %v594 = vpack.c.b16 %v575, %v574
        %v595 = vpack.c.b16 %v577, %v576
        %v596 = vpack.c.b16 %v579, %v578
        %v597 = vpack.c.b16 %v581, %v580
        %v598 = vpack.c.b16 %v583, %v582
        %v599 = vpack.c.b16 %v585, %v584
        %v600 = vpack.c.b16 %v587, %v586
        %v601 = vpack.c.b16 %v589, %v588
        %v602 = vpack.c.b16 %v591, %v590
        %v603 = vpack.c.b16 %v593, %v592
        %vm604 = vcmask 261120
        %v606 = vsel %vm604, %v594, 0
        %v609 = vsel %vm604, %v595, 0
        %v612 = vsel %vm604, %v596, 0
        %v615 = vsel %vm604, %v597, 0
        %v618 = vsel %vm604, %v598, 0
        %v621 = vsel %vm604, %v599, 0
        %v624 = vsel %vm604, %v600, 0
        %v627 = vsel %vm604, %v601, 0
        %v630 = vsel %vm604, %v602, 0
        %v633 = vsel %vm604, %v603, 0
        %635 = vmatpush.bf16.msra.mxu0 0
        %636 = vmatpush.bf16.msra.mxu0 0
        %637 = vmatpush.bf16.msra.mxu0 0
        %638 = vmatpush.bf16.msra.mxu0 0
        %639 = vmatpush.bf16.msra.mxu0 0
        %640 = vmatpush.bf16.msra.mxu0 0
        %641 = vmatpush.bf16.msra.mxu0 %v397
        %642 = vmatpush.bf16.msra.mxu0 %v381
        %643 = vmatmul.bf16.gmra.mxu0 %v606
        %v644 = vpop.f32.mrf.mxu0
        %v645 = vadd.f32 %v457, %v644
        %v646 = vpop.f32.mrf.mxu0
        %v647 = vadd.f32 %v462, %v646
        %648 = vmatmul.bf16.gmra.mxu0 %v609
        %v649 = vpop.f32.mrf.mxu0
        %v650 = vadd.f32 %v467, %v649
        %v651 = vpop.f32.mrf.mxu0
        %v652 = vadd.f32 %v472, %v651
        %653 = vmatmul.bf16.gmra.mxu0 %v612
        %v654 = vpop.f32.mrf.mxu0
        %v655 = vadd.f32 %v477, %v654
        %v656 = vpop.f32.mrf.mxu0
        %v657 = vadd.f32 %v482, %v656
        %658 = vmatmul.bf16.gmra.mxu0 %v615
        %v659 = vpop.f32.mrf.mxu0
        %v660 = vadd.f32 %v487, %v659
        %v661 = vpop.f32.mrf.mxu0
        %v662 = vadd.f32 %v492, %v661
        %663 = vmatmul.bf16.gmra.mxu0 %v618
        %v664 = vpop.f32.mrf.mxu0
        %v665 = vadd.f32 %v497, %v664
        %v666 = vpop.f32.mrf.mxu0
        %v667 = vadd.f32 %v502, %v666
        %668 = vmatmul.bf16.gmra.mxu0 %v621
        %v669 = vpop.f32.mrf.mxu0
        %v670 = vadd.f32 %v507, %v669
        %v671 = vpop.f32.mrf.mxu0
        %v672 = vadd.f32 %v512, %v671
        %673 = vmatmul.bf16.gmra.mxu0 %v624
        %v674 = vpop.f32.mrf.mxu0
        %v675 = vadd.f32 %v517, %v674
        %v676 = vpop.f32.mrf.mxu0
        %v677 = vadd.f32 %v522, %v676
        %678 = vmatmul.bf16.gmra.mxu0 %v627
        %v679 = vpop.f32.mrf.mxu0
        %v680 = vadd.f32 %v527, %v679
        %v681 = vpop.f32.mrf.mxu0
        %v682 = vadd.f32 %v532, %v681
        %683 = vmatmul.bf16.gmra.mxu0 %v630
        %v684 = vpop.f32.mrf.mxu0
        %v685 = vadd.f32 %v537, %v684
        %v686 = vpop.f32.mrf.mxu0
        %v687 = vadd.f32 %v542, %v686
        %688 = vmatmul.bf16.gmra.mxu0 %v633
        %v689 = vpop.f32.mrf.mxu0
        %v690 = vadd.f32 %v547, %v689
        %v691 = vpop.f32.mrf.mxu0
        %v692 = vadd.f32 %v552, %v691
        %693 = vdwg.mxu0
        %694 = vmatpush.bf16.msra.mxu0 0
        %695 = vmatpush.bf16.msra.mxu0 0
        %696 = vmatpush.bf16.msra.mxu0 0
        %697 = vmatpush.bf16.msra.mxu0 0
        %698 = vmatpush.bf16.msra.mxu0 0
        %699 = vmatpush.bf16.msra.mxu0 0
        %700 = vmatpush.bf16.msra.mxu0 %v398
        %701 = vmatpush.bf16.msra.mxu0 %v382
        %702 = vmatmul.bf16.gmra.mxu0 %v606
        %v703 = vpop.f32.mrf.mxu0
        %v704 = vadd.f32 %v457, %v703
        %v705 = vpop.f32.mrf.mxu0
        %v706 = vadd.f32 %v462, %v705
        %707 = vmatmul.bf16.gmra.mxu0 %v609
        %v708 = vpop.f32.mrf.mxu0
        %v709 = vadd.f32 %v467, %v708
        %v710 = vpop.f32.mrf.mxu0
        %v711 = vadd.f32 %v472, %v710
        %712 = vmatmul.bf16.gmra.mxu0 %v612
        %v713 = vpop.f32.mrf.mxu0
        %v714 = vadd.f32 %v477, %v713
        %v715 = vpop.f32.mrf.mxu0
        %v716 = vadd.f32 %v482, %v715
        %717 = vmatmul.bf16.gmra.mxu0 %v615
        %v718 = vpop.f32.mrf.mxu0
        %v719 = vadd.f32 %v487, %v718
        %v720 = vpop.f32.mrf.mxu0
        %v721 = vadd.f32 %v492, %v720
        %722 = vmatmul.bf16.gmra.mxu0 %v618
        %v723 = vpop.f32.mrf.mxu0
        %v724 = vadd.f32 %v497, %v723
        %v725 = vpop.f32.mrf.mxu0
        %v726 = vadd.f32 %v502, %v725
        %727 = vmatmul.bf16.gmra.mxu0 %v621
        %v728 = vpop.f32.mrf.mxu0
        %v729 = vadd.f32 %v507, %v728
        %v730 = vpop.f32.mrf.mxu0
        %v731 = vadd.f32 %v512, %v730
        %732 = vmatmul.bf16.gmra.mxu0 %v624
        %v733 = vpop.f32.mrf.mxu0
        %v734 = vadd.f32 %v517, %v733
        %v735 = vpop.f32.mrf.mxu0
        %v736 = vadd.f32 %v522, %v735
        %737 = vmatmul.bf16.gmra.mxu0 %v627
        %v738 = vpop.f32.mrf.mxu0
        %v739 = vadd.f32 %v527, %v738
        %v740 = vpop.f32.mrf.mxu0
        %v741 = vadd.f32 %v532, %v740
        %742 = vmatmul.bf16.gmra.mxu0 %v630
        %v743 = vpop.f32.mrf.mxu0
        %v744 = vadd.f32 %v537, %v743
        %v745 = vpop.f32.mrf.mxu0
        %v746 = vadd.f32 %v542, %v745
        %747 = vmatmul.bf16.gmra.mxu0 %v633
        %v748 = vpop.f32.mrf.mxu0
        %v749 = vadd.f32 %v547, %v748
        %v750 = vpop.f32.mrf.mxu0
        %v751 = vadd.f32 %v552, %v750
        %752 = vdwg.mxu0
        %753 = vmatpush.bf16.msra.mxu0 0
        %754 = vmatpush.bf16.msra.mxu0 0
        %755 = vmatpush.bf16.msra.mxu0 0
        %756 = vmatpush.bf16.msra.mxu0 0
        %757 = vmatpush.bf16.msra.mxu0 0
        %758 = vmatpush.bf16.msra.mxu0 0
        %759 = vmatpush.bf16.msra.mxu0 %v399
        %760 = vmatpush.bf16.msra.mxu0 %v383
        %761 = vmatmul.bf16.gmra.mxu0 %v606
        %v762 = vpop.f32.mrf.mxu0
        %v763 = vadd.f32 %v457, %v762
        %v764 = vpop.f32.mrf.mxu0
        %v765 = vadd.f32 %v462, %v764
        %766 = vmatmul.bf16.gmra.mxu0 %v609
        %v767 = vpop.f32.mrf.mxu0
        %v768 = vadd.f32 %v467, %v767
        %v769 = vpop.f32.mrf.mxu0
        %v770 = vadd.f32 %v472, %v769
        %771 = vmatmul.bf16.gmra.mxu0 %v612
        %v772 = vpop.f32.mrf.mxu0
        %v773 = vadd.f32 %v477, %v772
        %v774 = vpop.f32.mrf.mxu0
        %v775 = vadd.f32 %v482, %v774
        %776 = vmatmul.bf16.gmra.mxu0 %v615
        %v777 = vpop.f32.mrf.mxu0
        %v778 = vadd.f32 %v487, %v777
        %v779 = vpop.f32.mrf.mxu0
        %v780 = vadd.f32 %v492, %v779
        %781 = vmatmul.bf16.gmra.mxu0 %v618
        %v782 = vpop.f32.mrf.mxu0
        %v783 = vadd.f32 %v497, %v782
        %v784 = vpop.f32.mrf.mxu0
        %v785 = vadd.f32 %v502, %v784
        %786 = vmatmul.bf16.gmra.mxu0 %v621
        %v787 = vpop.f32.mrf.mxu0
        %v788 = vadd.f32 %v507, %v787
        %v789 = vpop.f32.mrf.mxu0
        %v790 = vadd.f32 %v512, %v789
        %791 = vmatmul.bf16.gmra.mxu0 %v624
        %v792 = vpop.f32.mrf.mxu0
        %v793 = vadd.f32 %v517, %v792
        %v794 = vpop.f32.mrf.mxu0
        %v795 = vadd.f32 %v522, %v794
        %796 = vmatmul.bf16.gmra.mxu0 %v627
        %v797 = vpop.f32.mrf.mxu0
        %v798 = vadd.f32 %v527, %v797
        %v799 = vpop.f32.mrf.mxu0
        %v800 = vadd.f32 %v532, %v799
        %801 = vmatmul.bf16.gmra.mxu0 %v630
        %v802 = vpop.f32.mrf.mxu0
        %v803 = vadd.f32 %v537, %v802
        %v804 = vpop.f32.mrf.mxu0
        %v805 = vadd.f32 %v542, %v804
        %806 = vmatmul.bf16.gmra.mxu0 %v633
        %v807 = vpop.f32.mrf.mxu0
        %v808 = vadd.f32 %v547, %v807
        %v809 = vpop.f32.mrf.mxu0
        %v810 = vadd.f32 %v552, %v809
        %811 = vdwg.mxu0
        %812 = vmatpush.bf16.msra.mxu0 0
        %813 = vmatpush.bf16.msra.mxu0 0
        %814 = vmatpush.bf16.msra.mxu0 0
        %815 = vmatpush.bf16.msra.mxu0 0
        %816 = vmatpush.bf16.msra.mxu0 0
        %817 = vmatpush.bf16.msra.mxu0 0
        %818 = vmatpush.bf16.msra.mxu0 %v400
        %819 = vmatpush.bf16.msra.mxu0 %v384
        %820 = vmatmul.bf16.gmra.mxu0 %v606
        %v821 = vpop.f32.mrf.mxu0
        %v822 = vadd.f32 %v457, %v821
        %v823 = vpop.f32.mrf.mxu0
        %v824 = vadd.f32 %v462, %v823
        %825 = vmatmul.bf16.gmra.mxu0 %v609
        %v826 = vpop.f32.mrf.mxu0
        %v827 = vadd.f32 %v467, %v826
        %v828 = vpop.f32.mrf.mxu0
        %v829 = vadd.f32 %v472, %v828
        %830 = vmatmul.bf16.gmra.mxu0 %v612
        %v831 = vpop.f32.mrf.mxu0
        %v832 = vadd.f32 %v477, %v831
        %v833 = vpop.f32.mrf.mxu0
        %v834 = vadd.f32 %v482, %v833
        %835 = vmatmul.bf16.gmra.mxu0 %v615
        %v836 = vpop.f32.mrf.mxu0
        %v837 = vadd.f32 %v487, %v836
        %v838 = vpop.f32.mrf.mxu0
        %v839 = vadd.f32 %v492, %v838
        %840 = vmatmul.bf16.gmra.mxu0 %v618
        %v841 = vpop.f32.mrf.mxu0
        %v842 = vadd.f32 %v497, %v841
        %v843 = vpop.f32.mrf.mxu0
        %v844 = vadd.f32 %v502, %v843
        %845 = vmatmul.bf16.gmra.mxu0 %v621
        %v846 = vpop.f32.mrf.mxu0
        %v847 = vadd.f32 %v507, %v846
        %v848 = vpop.f32.mrf.mxu0
        %v849 = vadd.f32 %v512, %v848
        %850 = vmatmul.bf16.gmra.mxu0 %v624
        %v851 = vpop.f32.mrf.mxu0
        %v852 = vadd.f32 %v517, %v851
        %v853 = vpop.f32.mrf.mxu0
        %v854 = vadd.f32 %v522, %v853
        %855 = vmatmul.bf16.gmra.mxu0 %v627
        %v856 = vpop.f32.mrf.mxu0
        %v857 = vadd.f32 %v527, %v856
        %v858 = vpop.f32.mrf.mxu0
        %v859 = vadd.f32 %v532, %v858
        %860 = vmatmul.bf16.gmra.mxu0 %v630
        %v861 = vpop.f32.mrf.mxu0
        %v862 = vadd.f32 %v537, %v861
        %v863 = vpop.f32.mrf.mxu0
        %v864 = vadd.f32 %v542, %v863
        %865 = vmatmul.bf16.gmra.mxu0 %v633
        %v866 = vpop.f32.mrf.mxu0
        %v867 = vadd.f32 %v547, %v866
        %v868 = vpop.f32.mrf.mxu0
        %v869 = vadd.f32 %v552, %v868
        %870 = vdwg.mxu0
        %871 = vmatpush.bf16.msra.mxu0 0
        %872 = vmatpush.bf16.msra.mxu0 0
        %873 = vmatpush.bf16.msra.mxu0 0
        %874 = vmatpush.bf16.msra.mxu0 0
        %875 = vmatpush.bf16.msra.mxu0 0
        %876 = vmatpush.bf16.msra.mxu0 0
        %877 = vmatpush.bf16.msra.mxu0 %v401
        %878 = vmatpush.bf16.msra.mxu0 %v385
        %879 = vmatmul.bf16.gmra.mxu0 %v606
        %v880 = vpop.f32.mrf.mxu0
        %v881 = vadd.f32 %v457, %v880
        %v882 = vpop.f32.mrf.mxu0
        %v883 = vadd.f32 %v462, %v882
        %884 = vmatmul.bf16.gmra.mxu0 %v609
        %v885 = vpop.f32.mrf.mxu0
        %v886 = vadd.f32 %v467, %v885
        %v887 = vpop.f32.mrf.mxu0
        %v888 = vadd.f32 %v472, %v887
        %889 = vmatmul.bf16.gmra.mxu0 %v612
        %v890 = vpop.f32.mrf.mxu0
        %v891 = vadd.f32 %v477, %v890
        %v892 = vpop.f32.mrf.mxu0
        %v893 = vadd.f32 %v482, %v892
        %894 = vmatmul.bf16.gmra.mxu0 %v615
        %v895 = vpop.f32.mrf.mxu0
        %v896 = vadd.f32 %v487, %v895
        %v897 = vpop.f32.mrf.mxu0
        %v898 = vadd.f32 %v492, %v897
        %899 = vmatmul.bf16.gmra.mxu0 %v618
        %v900 = vpop.f32.mrf.mxu0
        %v901 = vadd.f32 %v497, %v900
        %v902 = vpop.f32.mrf.mxu0
        %v903 = vadd.f32 %v502, %v902
        %904 = vmatmul.bf16.gmra.mxu0 %v621
        %v905 = vpop.f32.mrf.mxu0
        %v906 = vadd.f32 %v507, %v905
        %v907 = vpop.f32.mrf.mxu0
        %v908 = vadd.f32 %v512, %v907
        %909 = vmatmul.bf16.gmra.mxu0 %v624
        %v910 = vpop.f32.mrf.mxu0
        %v911 = vadd.f32 %v517, %v910
        %v912 = vpop.f32.mrf.mxu0
        %v913 = vadd.f32 %v522, %v912
        %914 = vmatmul.bf16.gmra.mxu0 %v627
        %v915 = vpop.f32.mrf.mxu0
        %v916 = vadd.f32 %v527, %v915
        %v917 = vpop.f32.mrf.mxu0
        %v918 = vadd.f32 %v532, %v917
        %919 = vmatmul.bf16.gmra.mxu0 %v630
        %v920 = vpop.f32.mrf.mxu0
        %v921 = vadd.f32 %v537, %v920
        %v922 = vpop.f32.mrf.mxu0
        %v923 = vadd.f32 %v542, %v922
        %924 = vmatmul.bf16.gmra.mxu0 %v633
        %v925 = vpop.f32.mrf.mxu0
        %v926 = vadd.f32 %v547, %v925
        %v927 = vpop.f32.mrf.mxu0
        %v928 = vadd.f32 %v552, %v927
        %929 = vdwg.mxu0
        %930 = vmatpush.bf16.msra.mxu0 0
        %931 = vmatpush.bf16.msra.mxu0 0
        %932 = vmatpush.bf16.msra.mxu0 0
        %933 = vmatpush.bf16.msra.mxu0 0
        %934 = vmatpush.bf16.msra.mxu0 0
        %935 = vmatpush.bf16.msra.mxu0 0
        %936 = vmatpush.bf16.msra.mxu0 %v402
        %937 = vmatpush.bf16.msra.mxu0 %v386
        %938 = vmatmul.bf16.gmra.mxu0 %v606
        %v939 = vpop.f32.mrf.mxu0
        %v940 = vadd.f32 %v457, %v939
        %v941 = vpop.f32.mrf.mxu0
        %v942 = vadd.f32 %v462, %v941
        %943 = vmatmul.bf16.gmra.mxu0 %v609
        %v944 = vpop.f32.mrf.mxu0
        %v945 = vadd.f32 %v467, %v944
        %v946 = vpop.f32.mrf.mxu0
        %v947 = vadd.f32 %v472, %v946
        %948 = vmatmul.bf16.gmra.mxu0 %v612
        %v949 = vpop.f32.mrf.mxu0
        %v950 = vadd.f32 %v477, %v949
        %v951 = vpop.f32.mrf.mxu0
        %v952 = vadd.f32 %v482, %v951
        %953 = vmatmul.bf16.gmra.mxu0 %v615
        %v954 = vpop.f32.mrf.mxu0
        %v955 = vadd.f32 %v487, %v954
        %v956 = vpop.f32.mrf.mxu0
        %v957 = vadd.f32 %v492, %v956
        %958 = vmatmul.bf16.gmra.mxu0 %v618
        %v959 = vpop.f32.mrf.mxu0
        %v960 = vadd.f32 %v497, %v959
        %v961 = vpop.f32.mrf.mxu0
        %v962 = vadd.f32 %v502, %v961
        %963 = vmatmul.bf16.gmra.mxu0 %v621
        %v964 = vpop.f32.mrf.mxu0
        %v965 = vadd.f32 %v507, %v964
        %v966 = vpop.f32.mrf.mxu0
        %v967 = vadd.f32 %v512, %v966
        %968 = vmatmul.bf16.gmra.mxu0 %v624
        %v969 = vpop.f32.mrf.mxu0
        %v970 = vadd.f32 %v517, %v969
        %v971 = vpop.f32.mrf.mxu0
        %v972 = vadd.f32 %v522, %v971
        %973 = vmatmul.bf16.gmra.mxu0 %v627
        %v974 = vpop.f32.mrf.mxu0
        %v975 = vadd.f32 %v527, %v974
        %v976 = vpop.f32.mrf.mxu0
        %v977 = vadd.f32 %v532, %v976
        %978 = vmatmul.bf16.gmra.mxu0 %v630
        %v979 = vpop.f32.mrf.mxu0
        %v980 = vadd.f32 %v537, %v979
        %v981 = vpop.f32.mrf.mxu0
        %v982 = vadd.f32 %v542, %v981
        %983 = vmatmul.bf16.gmra.mxu0 %v633
        %v984 = vpop.f32.mrf.mxu0
        %v985 = vadd.f32 %v547, %v984
        %v986 = vpop.f32.mrf.mxu0
        %v987 = vadd.f32 %v552, %v986
        %988 = vdwg.mxu0
        %989 = vmatpush.bf16.msra.mxu0 0
        %990 = vmatpush.bf16.msra.mxu0 0
        %991 = vmatpush.bf16.msra.mxu0 0
        %992 = vmatpush.bf16.msra.mxu0 0
        %993 = vmatpush.bf16.msra.mxu0 0
        %994 = vmatpush.bf16.msra.mxu0 0
        %995 = vmatpush.bf16.msra.mxu0 %v403
        %996 = vmatpush.bf16.msra.mxu0 %v387
        %997 = vmatmul.bf16.gmra.mxu0 %v606
        %v998 = vpop.f32.mrf.mxu0
        %v999 = vadd.f32 %v457, %v998
        %v1000 = vpop.f32.mrf.mxu0
        %v1001 = vadd.f32 %v462, %v1000
        %1002 = vmatmul.bf16.gmra.mxu0 %v609
        %v1003 = vpop.f32.mrf.mxu0
        %v1004 = vadd.f32 %v467, %v1003
        %v1005 = vpop.f32.mrf.mxu0
        %v1006 = vadd.f32 %v472, %v1005
        %1007 = vmatmul.bf16.gmra.mxu0 %v612
        %v1008 = vpop.f32.mrf.mxu0
        %v1009 = vadd.f32 %v477, %v1008
        %v1010 = vpop.f32.mrf.mxu0
        %v1011 = vadd.f32 %v482, %v1010
        %1012 = vmatmul.bf16.gmra.mxu0 %v615
        %v1013 = vpop.f32.mrf.mxu0
        %v1014 = vadd.f32 %v487, %v1013
        %v1015 = vpop.f32.mrf.mxu0
        %v1016 = vadd.f32 %v492, %v1015
        %1017 = vmatmul.bf16.gmra.mxu0 %v618
        %v1018 = vpop.f32.mrf.mxu0
        %v1019 = vadd.f32 %v497, %v1018
        %v1020 = vpop.f32.mrf.mxu0
        %v1021 = vadd.f32 %v502, %v1020
        %1022 = vmatmul.bf16.gmra.mxu0 %v621
        %v1023 = vpop.f32.mrf.mxu0
        %v1024 = vadd.f32 %v507, %v1023
        %v1025 = vpop.f32.mrf.mxu0
        %v1026 = vadd.f32 %v512, %v1025
        %1027 = vmatmul.bf16.gmra.mxu0 %v624
        %v1028 = vpop.f32.mrf.mxu0
        %v1029 = vadd.f32 %v517, %v1028
        %v1030 = vpop.f32.mrf.mxu0
        %v1031 = vadd.f32 %v522, %v1030
        %1032 = vmatmul.bf16.gmra.mxu0 %v627
        %v1033 = vpop.f32.mrf.mxu0
        %v1034 = vadd.f32 %v527, %v1033
        %v1035 = vpop.f32.mrf.mxu0
        %v1036 = vadd.f32 %v532, %v1035
        %1037 = vmatmul.bf16.gmra.mxu0 %v630
        %v1038 = vpop.f32.mrf.mxu0
        %v1039 = vadd.f32 %v537, %v1038
        %v1040 = vpop.f32.mrf.mxu0
        %v1041 = vadd.f32 %v542, %v1040
        %1042 = vmatmul.bf16.gmra.mxu0 %v633
        %v1043 = vpop.f32.mrf.mxu0
        %v1044 = vadd.f32 %v547, %v1043
        %v1045 = vpop.f32.mrf.mxu0
        %v1046 = vadd.f32 %v552, %v1045
        %1047 = vdwg.mxu0
        %1048 = vmatpush.bf16.msra.mxu0 0
        %1049 = vmatpush.bf16.msra.mxu0 0
        %1050 = vmatpush.bf16.msra.mxu0 0
        %1051 = vmatpush.bf16.msra.mxu0 0
        %1052 = vmatpush.bf16.msra.mxu0 0
        %1053 = vmatpush.bf16.msra.mxu0 0
        %1054 = vmatpush.bf16.msra.mxu0 %v404
        %1055 = vmatpush.bf16.msra.mxu0 %v388
        %1056 = vmatmul.bf16.gmra.mxu0 %v606
        %v1057 = vpop.f32.mrf.mxu0
        %v1058 = vadd.f32 %v457, %v1057
        %v1059 = vpop.f32.mrf.mxu0
        %v1060 = vadd.f32 %v462, %v1059
        %1061 = vmatmul.bf16.gmra.mxu0 %v609
        %v1062 = vpop.f32.mrf.mxu0
        %v1063 = vadd.f32 %v467, %v1062
        %v1064 = vpop.f32.mrf.mxu0
        %v1065 = vadd.f32 %v472, %v1064
        %1066 = vmatmul.bf16.gmra.mxu0 %v612
        %v1067 = vpop.f32.mrf.mxu0
        %v1068 = vadd.f32 %v477, %v1067
        %v1069 = vpop.f32.mrf.mxu0
        %v1070 = vadd.f32 %v482, %v1069
        %1071 = vmatmul.bf16.gmra.mxu0 %v615
        %v1072 = vpop.f32.mrf.mxu0
        %v1073 = vadd.f32 %v487, %v1072
        %v1074 = vpop.f32.mrf.mxu0
        %v1075 = vadd.f32 %v492, %v1074
        %1076 = vmatmul.bf16.gmra.mxu0 %v618
        %v1077 = vpop.f32.mrf.mxu0
        %v1078 = vadd.f32 %v497, %v1077
        %v1079 = vpop.f32.mrf.mxu0
        %v1080 = vadd.f32 %v502, %v1079
        %1081 = vmatmul.bf16.gmra.mxu0 %v621
        %v1082 = vpop.f32.mrf.mxu0
        %v1083 = vadd.f32 %v507, %v1082
        %v1084 = vpop.f32.mrf.mxu0
        %v1085 = vadd.f32 %v512, %v1084
        %1086 = vmatmul.bf16.gmra.mxu0 %v624
        %v1087 = vpop.f32.mrf.mxu0
        %v1088 = vadd.f32 %v517, %v1087
        %v1089 = vpop.f32.mrf.mxu0
        %v1090 = vadd.f32 %v522, %v1089
        %1091 = vmatmul.bf16.gmra.mxu0 %v627
        %v1092 = vpop.f32.mrf.mxu0
        %v1093 = vadd.f32 %v527, %v1092
        %v1094 = vpop.f32.mrf.mxu0
        %v1095 = vadd.f32 %v532, %v1094
        %1096 = vmatmul.bf16.gmra.mxu0 %v630
        %v1097 = vpop.f32.mrf.mxu0
        %v1098 = vadd.f32 %v537, %v1097
        %v1099 = vpop.f32.mrf.mxu0
        %v1100 = vadd.f32 %v542, %v1099
        %1101 = vmatmul.bf16.gmra.mxu0 %v633
        %v1102 = vpop.f32.mrf.mxu0
        %v1103 = vadd.f32 %v547, %v1102
        %v1104 = vpop.f32.mrf.mxu0
        %v1105 = vadd.f32 %v552, %v1104
        %1106 = vdwg.mxu0
        %1107 = vmatpush.bf16.msra.mxu0 0
        %1108 = vmatpush.bf16.msra.mxu0 0
        %1109 = vmatpush.bf16.msra.mxu0 0
        %1110 = vmatpush.bf16.msra.mxu0 0
        %1111 = vmatpush.bf16.msra.mxu0 0
        %1112 = vmatpush.bf16.msra.mxu0 0
        %1113 = vmatpush.bf16.msra.mxu0 %v405
        %1114 = vmatpush.bf16.msra.mxu0 %v389
        %1115 = vmatmul.bf16.gmra.mxu0 %v606
        %v1116 = vpop.f32.mrf.mxu0
        %v1117 = vadd.f32 %v457, %v1116
        %v1118 = vpop.f32.mrf.mxu0
        %v1119 = vadd.f32 %v462, %v1118
        %1120 = vmatmul.bf16.gmra.mxu0 %v609
        %v1121 = vpop.f32.mrf.mxu0
        %v1122 = vadd.f32 %v467, %v1121
        %v1123 = vpop.f32.mrf.mxu0
        %v1124 = vadd.f32 %v472, %v1123
        %1125 = vmatmul.bf16.gmra.mxu0 %v612
        %v1126 = vpop.f32.mrf.mxu0
        %v1127 = vadd.f32 %v477, %v1126
        %v1128 = vpop.f32.mrf.mxu0
        %v1129 = vadd.f32 %v482, %v1128
        %1130 = vmatmul.bf16.gmra.mxu0 %v615
        %v1131 = vpop.f32.mrf.mxu0
        %v1132 = vadd.f32 %v487, %v1131
        %v1133 = vpop.f32.mrf.mxu0
        %v1134 = vadd.f32 %v492, %v1133
        %1135 = vmatmul.bf16.gmra.mxu0 %v618
        %v1136 = vpop.f32.mrf.mxu0
        %v1137 = vadd.f32 %v497, %v1136
        %v1138 = vpop.f32.mrf.mxu0
        %v1139 = vadd.f32 %v502, %v1138
        %1140 = vmatmul.bf16.gmra.mxu0 %v621
        %v1141 = vpop.f32.mrf.mxu0
        %v1142 = vadd.f32 %v507, %v1141
        %v1143 = vpop.f32.mrf.mxu0
        %v1144 = vadd.f32 %v512, %v1143
        %1145 = vmatmul.bf16.gmra.mxu0 %v624
        %v1146 = vpop.f32.mrf.mxu0
        %v1147 = vadd.f32 %v517, %v1146
        %v1148 = vpop.f32.mrf.mxu0
        %v1149 = vadd.f32 %v522, %v1148
        %1150 = vmatmul.bf16.gmra.mxu0 %v627
        %v1151 = vpop.f32.mrf.mxu0
        %v1152 = vadd.f32 %v527, %v1151
        %v1153 = vpop.f32.mrf.mxu0
        %v1154 = vadd.f32 %v532, %v1153
        %1155 = vmatmul.bf16.gmra.mxu0 %v630
        %v1156 = vpop.f32.mrf.mxu0
        %v1157 = vadd.f32 %v537, %v1156
        %v1158 = vpop.f32.mrf.mxu0
        %v1159 = vadd.f32 %v542, %v1158
        %1160 = vmatmul.bf16.gmra.mxu0 %v633
        %v1161 = vpop.f32.mrf.mxu0
        %v1162 = vadd.f32 %v547, %v1161
        %v1163 = vpop.f32.mrf.mxu0
        %v1164 = vadd.f32 %v552, %v1163
        %1165 = vdwg.mxu0
        %1166 = vmatpush.bf16.msra.mxu0 0
        %1167 = vmatpush.bf16.msra.mxu0 0
        %1168 = vmatpush.bf16.msra.mxu0 0
        %1169 = vmatpush.bf16.msra.mxu0 0
        %1170 = vmatpush.bf16.msra.mxu0 0
        %1171 = vmatpush.bf16.msra.mxu0 0
        %1172 = vmatpush.bf16.msra.mxu0 %v406
        %1173 = vmatpush.bf16.msra.mxu0 %v390
        %1174 = vmatmul.bf16.gmra.mxu0 %v606
        %v1175 = vpop.f32.mrf.mxu0
        %v1176 = vadd.f32 %v457, %v1175
        %v1177 = vpop.f32.mrf.mxu0
        %v1178 = vadd.f32 %v462, %v1177
        %1179 = vmatmul.bf16.gmra.mxu0 %v609
        %v1180 = vpop.f32.mrf.mxu0
        %v1181 = vadd.f32 %v467, %v1180
        %v1182 = vpop.f32.mrf.mxu0
        %v1183 = vadd.f32 %v472, %v1182
        %1184 = vmatmul.bf16.gmra.mxu0 %v612
        %v1185 = vpop.f32.mrf.mxu0
        %v1186 = vadd.f32 %v477, %v1185
        %v1187 = vpop.f32.mrf.mxu0
        %v1188 = vadd.f32 %v482, %v1187
        %1189 = vmatmul.bf16.gmra.mxu0 %v615
        %v1190 = vpop.f32.mrf.mxu0
        %v1191 = vadd.f32 %v487, %v1190
        %v1192 = vpop.f32.mrf.mxu0
        %v1193 = vadd.f32 %v492, %v1192
        %1194 = vmatmul.bf16.gmra.mxu0 %v618
        %v1195 = vpop.f32.mrf.mxu0
        %v1196 = vadd.f32 %v497, %v1195
        %v1197 = vpop.f32.mrf.mxu0
        %v1198 = vadd.f32 %v502, %v1197
        %1199 = vmatmul.bf16.gmra.mxu0 %v621
        %v1200 = vpop.f32.mrf.mxu0
        %v1201 = vadd.f32 %v507, %v1200
        %v1202 = vpop.f32.mrf.mxu0
        %v1203 = vadd.f32 %v512, %v1202
        %1204 = vmatmul.bf16.gmra.mxu0 %v624
        %v1205 = vpop.f32.mrf.mxu0
        %v1206 = vadd.f32 %v517, %v1205
        %v1207 = vpop.f32.mrf.mxu0
        %v1208 = vadd.f32 %v522, %v1207
        %1209 = vmatmul.bf16.gmra.mxu0 %v627
        %v1210 = vpop.f32.mrf.mxu0
        %v1211 = vadd.f32 %v527, %v1210
        %v1212 = vpop.f32.mrf.mxu0
        %v1213 = vadd.f32 %v532, %v1212
        %1214 = vmatmul.bf16.gmra.mxu0 %v630
        %v1215 = vpop.f32.mrf.mxu0
        %v1216 = vadd.f32 %v537, %v1215
        %v1217 = vpop.f32.mrf.mxu0
        %v1218 = vadd.f32 %v542, %v1217
        %1219 = vmatmul.bf16.gmra.mxu0 %v633
        %v1220 = vpop.f32.mrf.mxu0
        %v1221 = vadd.f32 %v547, %v1220
        %v1222 = vpop.f32.mrf.mxu0
        %v1223 = vadd.f32 %v552, %v1222
        %1224 = vdwg.mxu0
        %1225 = vmatpush.bf16.msra.mxu0 0
        %1226 = vmatpush.bf16.msra.mxu0 0
        %1227 = vmatpush.bf16.msra.mxu0 0
        %1228 = vmatpush.bf16.msra.mxu0 0
        %1229 = vmatpush.bf16.msra.mxu0 0
        %1230 = vmatpush.bf16.msra.mxu0 0
        %1231 = vmatpush.bf16.msra.mxu0 %v407
        %1232 = vmatpush.bf16.msra.mxu0 %v391
        %1233 = vmatmul.bf16.gmra.mxu0 %v606
        %v1234 = vpop.f32.mrf.mxu0
        %v1235 = vadd.f32 %v457, %v1234
        %v1236 = vpop.f32.mrf.mxu0
        %v1237 = vadd.f32 %v462, %v1236
        %1238 = vmatmul.bf16.gmra.mxu0 %v609
        %v1239 = vpop.f32.mrf.mxu0
        %v1240 = vadd.f32 %v467, %v1239
        %v1241 = vpop.f32.mrf.mxu0
        %v1242 = vadd.f32 %v472, %v1241
        %1243 = vmatmul.bf16.gmra.mxu0 %v612
        %v1244 = vpop.f32.mrf.mxu0
        %v1245 = vadd.f32 %v477, %v1244
        %v1246 = vpop.f32.mrf.mxu0
        %v1247 = vadd.f32 %v482, %v1246
        %1248 = vmatmul.bf16.gmra.mxu0 %v615
        %v1249 = vpop.f32.mrf.mxu0
        %v1250 = vadd.f32 %v487, %v1249
        %v1251 = vpop.f32.mrf.mxu0
        %v1252 = vadd.f32 %v492, %v1251
        %1253 = vmatmul.bf16.gmra.mxu0 %v618
        %v1254 = vpop.f32.mrf.mxu0
        %v1255 = vadd.f32 %v497, %v1254
        %v1256 = vpop.f32.mrf.mxu0
        %v1257 = vadd.f32 %v502, %v1256
        %1258 = vmatmul.bf16.gmra.mxu0 %v621
        %v1259 = vpop.f32.mrf.mxu0
        %v1260 = vadd.f32 %v507, %v1259
        %v1261 = vpop.f32.mrf.mxu0
        %v1262 = vadd.f32 %v512, %v1261
        %1263 = vmatmul.bf16.gmra.mxu0 %v624
        %v1264 = vpop.f32.mrf.mxu0
        %v1265 = vadd.f32 %v517, %v1264
        %v1266 = vpop.f32.mrf.mxu0
        %v1267 = vadd.f32 %v522, %v1266
        %1268 = vmatmul.bf16.gmra.mxu0 %v627
        %v1269 = vpop.f32.mrf.mxu0
        %v1270 = vadd.f32 %v527, %v1269
        %v1271 = vpop.f32.mrf.mxu0
        %v1272 = vadd.f32 %v532, %v1271
        %1273 = vmatmul.bf16.gmra.mxu0 %v630
        %v1274 = vpop.f32.mrf.mxu0
        %v1275 = vadd.f32 %v537, %v1274
        %v1276 = vpop.f32.mrf.mxu0
        %v1277 = vadd.f32 %v542, %v1276
        %1278 = vmatmul.bf16.gmra.mxu0 %v633
        %v1279 = vpop.f32.mrf.mxu0
        %v1280 = vadd.f32 %v547, %v1279
        %v1281 = vpop.f32.mrf.mxu0
        %v1282 = vadd.f32 %v552, %v1281
        %1283 = vdwg.mxu0
        %1284 = vmatpush.bf16.msra.mxu0 0
        %1285 = vmatpush.bf16.msra.mxu0 0
        %1286 = vmatpush.bf16.msra.mxu0 0
        %1287 = vmatpush.bf16.msra.mxu0 0
        %1288 = vmatpush.bf16.msra.mxu0 0
        %1289 = vmatpush.bf16.msra.mxu0 0
        %1290 = vmatpush.bf16.msra.mxu0 %v408
        %1291 = vmatpush.bf16.msra.mxu0 %v392
        %1292 = vmatmul.bf16.gmra.mxu0 %v606
        %v1293 = vpop.f32.mrf.mxu0
        %v1294 = vadd.f32 %v457, %v1293
        %v1295 = vpop.f32.mrf.mxu0
        %v1296 = vadd.f32 %v462, %v1295
        %1297 = vmatmul.bf16.gmra.mxu0 %v609
        %v1298 = vpop.f32.mrf.mxu0
        %v1299 = vadd.f32 %v467, %v1298
        %v1300 = vpop.f32.mrf.mxu0
        %v1301 = vadd.f32 %v472, %v1300
        %1302 = vmatmul.bf16.gmra.mxu0 %v612
        %v1303 = vpop.f32.mrf.mxu0
        %v1304 = vadd.f32 %v477, %v1303
        %v1305 = vpop.f32.mrf.mxu0
        %v1306 = vadd.f32 %v482, %v1305
        %1307 = vmatmul.bf16.gmra.mxu0 %v615
        %v1308 = vpop.f32.mrf.mxu0
        %v1309 = vadd.f32 %v487, %v1308
        %v1310 = vpop.f32.mrf.mxu0
        %v1311 = vadd.f32 %v492, %v1310
        %1312 = vmatmul.bf16.gmra.mxu0 %v618
        %v1313 = vpop.f32.mrf.mxu0
        %v1314 = vadd.f32 %v497, %v1313
        %v1315 = vpop.f32.mrf.mxu0
        %v1316 = vadd.f32 %v502, %v1315
        %1317 = vmatmul.bf16.gmra.mxu0 %v621
        %v1318 = vpop.f32.mrf.mxu0
        %v1319 = vadd.f32 %v507, %v1318
        %v1320 = vpop.f32.mrf.mxu0
        %v1321 = vadd.f32 %v512, %v1320
        %1322 = vmatmul.bf16.gmra.mxu0 %v624
        %v1323 = vpop.f32.mrf.mxu0
        %v1324 = vadd.f32 %v517, %v1323
        %v1325 = vpop.f32.mrf.mxu0
        %v1326 = vadd.f32 %v522, %v1325
        %1327 = vmatmul.bf16.gmra.mxu0 %v627
        %v1328 = vpop.f32.mrf.mxu0
        %v1329 = vadd.f32 %v527, %v1328
        %v1330 = vpop.f32.mrf.mxu0
        %v1331 = vadd.f32 %v532, %v1330
        %1332 = vmatmul.bf16.gmra.mxu0 %v630
        %v1333 = vpop.f32.mrf.mxu0
        %v1334 = vadd.f32 %v537, %v1333
        %v1335 = vpop.f32.mrf.mxu0
        %v1336 = vadd.f32 %v542, %v1335
        %1337 = vmatmul.bf16.gmra.mxu0 %v633
        %v1338 = vpop.f32.mrf.mxu0
        %v1339 = vadd.f32 %v547, %v1338
        %v1340 = vpop.f32.mrf.mxu0
        %v1341 = vadd.f32 %v552, %v1340
        %1342 = vdwg.mxu0
        %1343 = vmatpush.bf16.msra.mxu0 0
        %1344 = vmatpush.bf16.msra.mxu0 0
        %1345 = vmatpush.bf16.msra.mxu0 0
        %1346 = vmatpush.bf16.msra.mxu0 0
        %1347 = vmatpush.bf16.msra.mxu0 0
        %1348 = vmatpush.bf16.msra.mxu0 0
        %1349 = vmatpush.bf16.msra.mxu0 %v409
        %1350 = vmatpush.bf16.msra.mxu0 %v393
        %1351 = vmatmul.bf16.gmra.mxu0 %v606
        %v1352 = vpop.f32.mrf.mxu0
        %v1353 = vadd.f32 %v457, %v1352
        %v1354 = vpop.f32.mrf.mxu0
        %v1355 = vadd.f32 %v462, %v1354
        %1356 = vmatmul.bf16.gmra.mxu0 %v609
        %v1357 = vpop.f32.mrf.mxu0
        %v1358 = vadd.f32 %v467, %v1357
        %v1359 = vpop.f32.mrf.mxu0
        %v1360 = vadd.f32 %v472, %v1359
        %1361 = vmatmul.bf16.gmra.mxu0 %v612
        %v1362 = vpop.f32.mrf.mxu0
        %v1363 = vadd.f32 %v477, %v1362
        %v1364 = vpop.f32.mrf.mxu0
        %v1365 = vadd.f32 %v482, %v1364
        %1366 = vmatmul.bf16.gmra.mxu0 %v615
        %v1367 = vpop.f32.mrf.mxu0
        %v1368 = vadd.f32 %v487, %v1367
        %v1369 = vpop.f32.mrf.mxu0
        %v1370 = vadd.f32 %v492, %v1369
        %1371 = vmatmul.bf16.gmra.mxu0 %v618
        %v1372 = vpop.f32.mrf.mxu0
        %v1373 = vadd.f32 %v497, %v1372
        %v1374 = vpop.f32.mrf.mxu0
        %v1375 = vadd.f32 %v502, %v1374
        %1376 = vmatmul.bf16.gmra.mxu0 %v621
        %v1377 = vpop.f32.mrf.mxu0
        %v1378 = vadd.f32 %v507, %v1377
        %v1379 = vpop.f32.mrf.mxu0
        %v1380 = vadd.f32 %v512, %v1379
        %1381 = vmatmul.bf16.gmra.mxu0 %v624
        %v1382 = vpop.f32.mrf.mxu0
        %v1383 = vadd.f32 %v517, %v1382
        %v1384 = vpop.f32.mrf.mxu0
        %v1385 = vadd.f32 %v522, %v1384
        %1386 = vmatmul.bf16.gmra.mxu0 %v627
        %v1387 = vpop.f32.mrf.mxu0
        %v1388 = vadd.f32 %v527, %v1387
        %v1389 = vpop.f32.mrf.mxu0
        %v1390 = vadd.f32 %v532, %v1389
        %1391 = vmatmul.bf16.gmra.mxu0 %v630
        %v1392 = vpop.f32.mrf.mxu0
        %v1393 = vadd.f32 %v537, %v1392
        %v1394 = vpop.f32.mrf.mxu0
        %v1395 = vadd.f32 %v542, %v1394
        %1396 = vmatmul.bf16.gmra.mxu0 %v633
        %v1397 = vpop.f32.mrf.mxu0
        %v1398 = vadd.f32 %v547, %v1397
        %v1399 = vpop.f32.mrf.mxu0
        %v1400 = vadd.f32 %v552, %v1399
        %1401 = vdwg.mxu0
        %1402 = vmatpush.bf16.msra.mxu0 0
        %1403 = vmatpush.bf16.msra.mxu0 0
        %1404 = vmatpush.bf16.msra.mxu0 0
        %1405 = vmatpush.bf16.msra.mxu0 0
        %1406 = vmatpush.bf16.msra.mxu0 0
        %1407 = vmatpush.bf16.msra.mxu0 0
        %1408 = vmatpush.bf16.msra.mxu0 %v410
        %1409 = vmatpush.bf16.msra.mxu0 %v394
        %1410 = vmatmul.bf16.gmra.mxu0 %v606
        %v1411 = vpop.f32.mrf.mxu0
        %v1412 = vadd.f32 %v457, %v1411
        %v1413 = vpop.f32.mrf.mxu0
        %v1414 = vadd.f32 %v462, %v1413
        %1415 = vmatmul.bf16.gmra.mxu0 %v609
        %v1416 = vpop.f32.mrf.mxu0
        %v1417 = vadd.f32 %v467, %v1416
        %v1418 = vpop.f32.mrf.mxu0
        %v1419 = vadd.f32 %v472, %v1418
        %1420 = vmatmul.bf16.gmra.mxu0 %v612
        %v1421 = vpop.f32.mrf.mxu0
        %v1422 = vadd.f32 %v477, %v1421
        %v1423 = vpop.f32.mrf.mxu0
        %v1424 = vadd.f32 %v482, %v1423
        %1425 = vmatmul.bf16.gmra.mxu0 %v615
        %v1426 = vpop.f32.mrf.mxu0
        %v1427 = vadd.f32 %v487, %v1426
        %v1428 = vpop.f32.mrf.mxu0
        %v1429 = vadd.f32 %v492, %v1428
        %1430 = vmatmul.bf16.gmra.mxu0 %v618
        %v1431 = vpop.f32.mrf.mxu0
        %v1432 = vadd.f32 %v497, %v1431
        %v1433 = vpop.f32.mrf.mxu0
        %v1434 = vadd.f32 %v502, %v1433
        %1435 = vmatmul.bf16.gmra.mxu0 %v621
        %v1436 = vpop.f32.mrf.mxu0
        %v1437 = vadd.f32 %v507, %v1436
        %v1438 = vpop.f32.mrf.mxu0
        %v1439 = vadd.f32 %v512, %v1438
        %1440 = vmatmul.bf16.gmra.mxu0 %v624
        %v1441 = vpop.f32.mrf.mxu0
        %v1442 = vadd.f32 %v517, %v1441
        %v1443 = vpop.f32.mrf.mxu0
        %v1444 = vadd.f32 %v522, %v1443
        %1445 = vmatmul.bf16.gmra.mxu0 %v627
        %v1446 = vpop.f32.mrf.mxu0
        %v1447 = vadd.f32 %v527, %v1446
        %v1448 = vpop.f32.mrf.mxu0
        %v1449 = vadd.f32 %v532, %v1448
        %1450 = vmatmul.bf16.gmra.mxu0 %v630
        %v1451 = vpop.f32.mrf.mxu0
        %v1452 = vadd.f32 %v537, %v1451
        %v1453 = vpop.f32.mrf.mxu0
        %v1454 = vadd.f32 %v542, %v1453
        %1455 = vmatmul.bf16.gmra.mxu0 %v633
        %v1456 = vpop.f32.mrf.mxu0
        %v1457 = vadd.f32 %v547, %v1456
        %v1458 = vpop.f32.mrf.mxu0
        %v1459 = vadd.f32 %v552, %v1458
        %1460 = vdwg.mxu0
        %1461 = vmatpush.bf16.msra.mxu0 0
        %1462 = vmatpush.bf16.msra.mxu0 0
        %1463 = vmatpush.bf16.msra.mxu0 0
        %1464 = vmatpush.bf16.msra.mxu0 0
        %1465 = vmatpush.bf16.msra.mxu0 0
        %1466 = vmatpush.bf16.msra.mxu0 0
        %1467 = vmatpush.bf16.msra.mxu0 %v411
        %1468 = vmatpush.bf16.msra.mxu0 %v395
        %1469 = vmatmul.bf16.gmra.mxu0 %v606
        %v1470 = vpop.f32.mrf.mxu0
        %v1471 = vadd.f32 %v457, %v1470
        %v1472 = vpop.f32.mrf.mxu0
        %v1473 = vadd.f32 %v462, %v1472
        %1474 = vmatmul.bf16.gmra.mxu0 %v609
        %v1475 = vpop.f32.mrf.mxu0
        %v1476 = vadd.f32 %v467, %v1475
        %v1477 = vpop.f32.mrf.mxu0
        %v1478 = vadd.f32 %v472, %v1477
        %1479 = vmatmul.bf16.gmra.mxu0 %v612
        %v1480 = vpop.f32.mrf.mxu0
        %v1481 = vadd.f32 %v477, %v1480
        %v1482 = vpop.f32.mrf.mxu0
        %v1483 = vadd.f32 %v482, %v1482
        %1484 = vmatmul.bf16.gmra.mxu0 %v615
        %v1485 = vpop.f32.mrf.mxu0
        %v1486 = vadd.f32 %v487, %v1485
        %v1487 = vpop.f32.mrf.mxu0
        %v1488 = vadd.f32 %v492, %v1487
        %1489 = vmatmul.bf16.gmra.mxu0 %v618
        %v1490 = vpop.f32.mrf.mxu0
        %v1491 = vadd.f32 %v497, %v1490
        %v1492 = vpop.f32.mrf.mxu0
        %v1493 = vadd.f32 %v502, %v1492
        %1494 = vmatmul.bf16.gmra.mxu0 %v621
        %v1495 = vpop.f32.mrf.mxu0
        %v1496 = vadd.f32 %v507, %v1495
        %v1497 = vpop.f32.mrf.mxu0
        %v1498 = vadd.f32 %v512, %v1497
        %1499 = vmatmul.bf16.gmra.mxu0 %v624
        %v1500 = vpop.f32.mrf.mxu0
        %v1501 = vadd.f32 %v517, %v1500
        %v1502 = vpop.f32.mrf.mxu0
        %v1503 = vadd.f32 %v522, %v1502
        %1504 = vmatmul.bf16.gmra.mxu0 %v627
        %v1505 = vpop.f32.mrf.mxu0
        %v1506 = vadd.f32 %v527, %v1505
        %v1507 = vpop.f32.mrf.mxu0
        %v1508 = vadd.f32 %v532, %v1507
        %1509 = vmatmul.bf16.gmra.mxu0 %v630
        %v1510 = vpop.f32.mrf.mxu0
        %v1511 = vadd.f32 %v537, %v1510
        %v1512 = vpop.f32.mrf.mxu0
        %v1513 = vadd.f32 %v542, %v1512
        %1514 = vmatmul.bf16.gmra.mxu0 %v633
        %v1515 = vpop.f32.mrf.mxu0
        %v1516 = vadd.f32 %v547, %v1515
        %v1517 = vpop.f32.mrf.mxu0
        %v1518 = vadd.f32 %v552, %v1517
        %1519 = vdwg.mxu0
        %1520 = vmatpush.bf16.msra.mxu0 0
        %1521 = vmatpush.bf16.msra.mxu0 0
        %1522 = vmatpush.bf16.msra.mxu0 0
        %1523 = vmatpush.bf16.msra.mxu0 0
        %1524 = vmatpush.bf16.msra.mxu0 0
        %1525 = vmatpush.bf16.msra.mxu0 0
        %1526 = vmatpush.bf16.msra.mxu0 %v412
        %1527 = vmatpush.bf16.msra.mxu0 %v396
        %1528 = vmatmul.bf16.gmra.mxu0 %v606
        %v1529 = vpop.f32.mrf.mxu0
        %v1530 = vadd.f32 %v457, %v1529
        %v1531 = vpop.f32.mrf.mxu0
        %v1532 = vadd.f32 %v462, %v1531
        %1533 = vmatmul.bf16.gmra.mxu0 %v609
        %v1534 = vpop.f32.mrf.mxu0
        %v1535 = vadd.f32 %v467, %v1534
        %v1536 = vpop.f32.mrf.mxu0
        %v1537 = vadd.f32 %v472, %v1536
        %1538 = vmatmul.bf16.gmra.mxu0 %v612
        %v1539 = vpop.f32.mrf.mxu0
        %v1540 = vadd.f32 %v477, %v1539
        %v1541 = vpop.f32.mrf.mxu0
        %v1542 = vadd.f32 %v482, %v1541
        %1543 = vmatmul.bf16.gmra.mxu0 %v615
        %v1544 = vpop.f32.mrf.mxu0
        %v1545 = vadd.f32 %v487, %v1544
        %v1546 = vpop.f32.mrf.mxu0
        %v1547 = vadd.f32 %v492, %v1546
        %1548 = vmatmul.bf16.gmra.mxu0 %v618
        %v1549 = vpop.f32.mrf.mxu0
        %v1550 = vadd.f32 %v497, %v1549
        %v1551 = vpop.f32.mrf.mxu0
        %v1552 = vadd.f32 %v502, %v1551
        %1553 = vmatmul.bf16.gmra.mxu0 %v621
        %v1554 = vpop.f32.mrf.mxu0
        %v1555 = vadd.f32 %v507, %v1554
        %v1556 = vpop.f32.mrf.mxu0
        %v1557 = vadd.f32 %v512, %v1556
        %1558 = vmatmul.bf16.gmra.mxu0 %v624
        %v1559 = vpop.f32.mrf.mxu0
        %v1560 = vadd.f32 %v517, %v1559
        %v1561 = vpop.f32.mrf.mxu0
        %v1562 = vadd.f32 %v522, %v1561
        %1563 = vmatmul.bf16.gmra.mxu0 %v627
        %v1564 = vpop.f32.mrf.mxu0
        %v1565 = vadd.f32 %v527, %v1564
        %v1566 = vpop.f32.mrf.mxu0
        %v1567 = vadd.f32 %v532, %v1566
        %1568 = vmatmul.bf16.gmra.mxu0 %v630
        %v1569 = vpop.f32.mrf.mxu0
        %v1570 = vadd.f32 %v537, %v1569
        %v1571 = vpop.f32.mrf.mxu0
        %v1572 = vadd.f32 %v542, %v1571
        %1573 = vmatmul.bf16.gmra.mxu0 %v633
        %v1574 = vpop.f32.mrf.mxu0
        %v1575 = vadd.f32 %v547, %v1574
        %v1576 = vpop.f32.mrf.mxu0
        %v1577 = vadd.f32 %v552, %v1576
        %1578 = vdwg.mxu0
        %v1579 = vpack.c.bf16 %v704, %v645
        %v1580 = vpack.c.bf16 %v822, %v763
        %v1581 = vpack.c.bf16 %v940, %v881
        %v1582 = vpack.c.bf16 %v1058, %v999
        %v1583 = vpack.c.bf16 %v1176, %v1117
        %v1584 = vpack.c.bf16 %v1294, %v1235
        %v1585 = vpack.c.bf16 %v1412, %v1353
        %v1586 = vpack.c.bf16 %v1530, %v1471
        %v1587 = vpack.c.bf16 %v706, %v647
        %v1588 = vpack.c.bf16 %v824, %v765
        %v1589 = vpack.c.bf16 %v942, %v883
        %v1590 = vpack.c.bf16 %v1060, %v1001
        %v1591 = vpack.c.bf16 %v1178, %v1119
        %v1592 = vpack.c.bf16 %v1296, %v1237
        %v1593 = vpack.c.bf16 %v1414, %v1355
        %v1594 = vpack.c.bf16 %v1532, %v1473
        %v1595 = vpack.c.bf16 %v709, %v650
        %v1596 = vpack.c.bf16 %v827, %v768
        %v1597 = vpack.c.bf16 %v945, %v886
        %v1598 = vpack.c.bf16 %v1063, %v1004
        %v1599 = vpack.c.bf16 %v1181, %v1122
        %v1600 = vpack.c.bf16 %v1299, %v1240
        %v1601 = vpack.c.bf16 %v1417, %v1358
        %v1602 = vpack.c.bf16 %v1535, %v1476
        %v1603 = vpack.c.bf16 %v711, %v652
        %v1604 = vpack.c.bf16 %v829, %v770
        %v1605 = vpack.c.bf16 %v947, %v888
        %v1606 = vpack.c.bf16 %v1065, %v1006
        %v1607 = vpack.c.bf16 %v1183, %v1124
        %v1608 = vpack.c.bf16 %v1301, %v1242
        %v1609 = vpack.c.bf16 %v1419, %v1360
        %v1610 = vpack.c.bf16 %v1537, %v1478
        %v1611 = vpack.c.bf16 %v714, %v655
        %v1612 = vpack.c.bf16 %v832, %v773
        %v1613 = vpack.c.bf16 %v950, %v891
        %v1614 = vpack.c.bf16 %v1068, %v1009
        %v1615 = vpack.c.bf16 %v1186, %v1127
        %v1616 = vpack.c.bf16 %v1304, %v1245
        %v1617 = vpack.c.bf16 %v1422, %v1363
        %v1618 = vpack.c.bf16 %v1540, %v1481
        %v1619 = vpack.c.bf16 %v716, %v657
        %v1620 = vpack.c.bf16 %v834, %v775
        %v1621 = vpack.c.bf16 %v952, %v893
        %v1622 = vpack.c.bf16 %v1070, %v1011
        %v1623 = vpack.c.bf16 %v1188, %v1129
        %v1624 = vpack.c.bf16 %v1306, %v1247
        %v1625 = vpack.c.bf16 %v1424, %v1365
        %v1626 = vpack.c.bf16 %v1542, %v1483
        %v1627 = vpack.c.bf16 %v719, %v660
        %v1628 = vpack.c.bf16 %v837, %v778
        %v1629 = vpack.c.bf16 %v955, %v896
        %v1630 = vpack.c.bf16 %v1073, %v1014
        %v1631 = vpack.c.bf16 %v1191, %v1132
        %v1632 = vpack.c.bf16 %v1309, %v1250
        %v1633 = vpack.c.bf16 %v1427, %v1368
        %v1634 = vpack.c.bf16 %v1545, %v1486
        %v1635 = vpack.c.bf16 %v721, %v662
        %v1636 = vpack.c.bf16 %v839, %v780
        %v1637 = vpack.c.bf16 %v957, %v898
        %v1638 = vpack.c.bf16 %v1075, %v1016
        %v1639 = vpack.c.bf16 %v1193, %v1134
        %v1640 = vpack.c.bf16 %v1311, %v1252
        %v1641 = vpack.c.bf16 %v1429, %v1370
        %v1642 = vpack.c.bf16 %v1547, %v1488
        %v1643 = vpack.c.bf16 %v724, %v665
        %v1644 = vpack.c.bf16 %v842, %v783
        %v1645 = vpack.c.bf16 %v960, %v901
        %v1646 = vpack.c.bf16 %v1078, %v1019
        %v1647 = vpack.c.bf16 %v1196, %v1137
        %v1648 = vpack.c.bf16 %v1314, %v1255
        %v1649 = vpack.c.bf16 %v1432, %v1373
        %v1650 = vpack.c.bf16 %v1550, %v1491
        %v1651 = vpack.c.bf16 %v726, %v667
        %v1652 = vpack.c.bf16 %v844, %v785
        %v1653 = vpack.c.bf16 %v962, %v903
        %v1654 = vpack.c.bf16 %v1080, %v1021
        %v1655 = vpack.c.bf16 %v1198, %v1139
        %v1656 = vpack.c.bf16 %v1316, %v1257
        %v1657 = vpack.c.bf16 %v1434, %v1375
        %v1658 = vpack.c.bf16 %v1552, %v1493
        %v1659 = vpack.c.bf16 %v729, %v670
        %v1660 = vpack.c.bf16 %v847, %v788
        %v1661 = vpack.c.bf16 %v965, %v906
        %v1662 = vpack.c.bf16 %v1083, %v1024
        %v1663 = vpack.c.bf16 %v1201, %v1142
        %v1664 = vpack.c.bf16 %v1319, %v1260
        %v1665 = vpack.c.bf16 %v1437, %v1378
        %v1666 = vpack.c.bf16 %v1555, %v1496
        %v1667 = vpack.c.bf16 %v731, %v672
        %v1668 = vpack.c.bf16 %v849, %v790
        %v1669 = vpack.c.bf16 %v967, %v908
        %v1670 = vpack.c.bf16 %v1085, %v1026
        %v1671 = vpack.c.bf16 %v1203, %v1144
        %v1672 = vpack.c.bf16 %v1321, %v1262
        %v1673 = vpack.c.bf16 %v1439, %v1380
        %v1674 = vpack.c.bf16 %v1557, %v1498
        %v1675 = vpack.c.bf16 %v734, %v675
        %v1676 = vpack.c.bf16 %v852, %v793
        %v1677 = vpack.c.bf16 %v970, %v911
        %v1678 = vpack.c.bf16 %v1088, %v1029
        %v1679 = vpack.c.bf16 %v1206, %v1147
        %v1680 = vpack.c.bf16 %v1324, %v1265
        %v1681 = vpack.c.bf16 %v1442, %v1383
        %v1682 = vpack.c.bf16 %v1560, %v1501
        %v1683 = vpack.c.bf16 %v736, %v677
        %v1684 = vpack.c.bf16 %v854, %v795
        %v1685 = vpack.c.bf16 %v972, %v913
        %v1686 = vpack.c.bf16 %v1090, %v1031
        %v1687 = vpack.c.bf16 %v1208, %v1149
        %v1688 = vpack.c.bf16 %v1326, %v1267
        %v1689 = vpack.c.bf16 %v1444, %v1385
        %v1690 = vpack.c.bf16 %v1562, %v1503
        %v1691 = vpack.c.bf16 %v739, %v680
        %v1692 = vpack.c.bf16 %v857, %v798
        %v1693 = vpack.c.bf16 %v975, %v916
        %v1694 = vpack.c.bf16 %v1093, %v1034
        %v1695 = vpack.c.bf16 %v1211, %v1152
        %v1696 = vpack.c.bf16 %v1329, %v1270
        %v1697 = vpack.c.bf16 %v1447, %v1388
        %v1698 = vpack.c.bf16 %v1565, %v1506
        %v1699 = vpack.c.bf16 %v741, %v682
        %v1700 = vpack.c.bf16 %v859, %v800
        %v1701 = vpack.c.bf16 %v977, %v918
        %v1702 = vpack.c.bf16 %v1095, %v1036
        %v1703 = vpack.c.bf16 %v1213, %v1154
        %v1704 = vpack.c.bf16 %v1331, %v1272
        %v1705 = vpack.c.bf16 %v1449, %v1390
        %v1706 = vpack.c.bf16 %v1567, %v1508
        %v1707 = vpack.c.bf16 %v744, %v685
        %v1708 = vpack.c.bf16 %v862, %v803
        %v1709 = vpack.c.bf16 %v980, %v921
        %v1710 = vpack.c.bf16 %v1098, %v1039
        %v1711 = vpack.c.bf16 %v1216, %v1157
        %v1712 = vpack.c.bf16 %v1334, %v1275
        %v1713 = vpack.c.bf16 %v1452, %v1393
        %v1714 = vpack.c.bf16 %v1570, %v1511
        %v1715 = vpack.c.bf16 %v746, %v687
        %v1716 = vpack.c.bf16 %v864, %v805
        %v1717 = vpack.c.bf16 %v982, %v923
        %v1718 = vpack.c.bf16 %v1100, %v1041
        %v1719 = vpack.c.bf16 %v1218, %v1159
        %v1720 = vpack.c.bf16 %v1336, %v1277
        %v1721 = vpack.c.bf16 %v1454, %v1395
        %v1722 = vpack.c.bf16 %v1572, %v1513
        %v1723 = vpack.c.bf16 %v749, %v690
        %v1724 = vpack.c.bf16 %v867, %v808
        %v1725 = vpack.c.bf16 %v985, %v926
        %v1726 = vpack.c.bf16 %v1103, %v1044
        %v1727 = vpack.c.bf16 %v1221, %v1162
        %v1728 = vpack.c.bf16 %v1339, %v1280
        %v1729 = vpack.c.bf16 %v1457, %v1398
        %v1730 = vpack.c.bf16 %v1575, %v1516
        %v1731 = vpack.c.bf16 %v751, %v692
        %v1732 = vpack.c.bf16 %v869, %v810
        %v1733 = vpack.c.bf16 %v987, %v928
        %v1734 = vpack.c.bf16 %v1105, %v1046
        %v1735 = vpack.c.bf16 %v1223, %v1164
        %v1736 = vpack.c.bf16 %v1341, %v1282
        %v1737 = vpack.c.bf16 %v1459, %v1400
        %v1738 = vpack.c.bf16 %v1577, %v1518
        %v1739 = vunpack.c.l.bf16 %v1579
        %v1740 = vunpack.c.h.bf16 %v1579
        %v1741 = vunpack.c.l.bf16 %v1580
        %v1742 = vunpack.c.h.bf16 %v1580
        %v1743 = vunpack.c.l.bf16 %v1581
        %v1744 = vunpack.c.h.bf16 %v1581
        %v1745 = vunpack.c.l.bf16 %v1582
        %v1746 = vunpack.c.h.bf16 %v1582
        %v1747 = vunpack.c.l.bf16 %v1583
        %v1748 = vunpack.c.h.bf16 %v1583
        %v1749 = vunpack.c.l.bf16 %v1584
        %v1750 = vunpack.c.h.bf16 %v1584
        %v1751 = vunpack.c.l.bf16 %v1585
        %v1752 = vunpack.c.h.bf16 %v1585
        %v1753 = vunpack.c.l.bf16 %v1586
        %v1754 = vunpack.c.h.bf16 %v1586
        %v1755 = vunpack.c.l.bf16 %v1587
        %v1756 = vunpack.c.h.bf16 %v1587
        %v1757 = vunpack.c.l.bf16 %v1588
        %v1758 = vunpack.c.h.bf16 %v1588
        %v1759 = vunpack.c.l.bf16 %v1589
        %v1760 = vunpack.c.h.bf16 %v1589
        %v1761 = vunpack.c.l.bf16 %v1590
        %v1762 = vunpack.c.h.bf16 %v1590
        %v1763 = vunpack.c.l.bf16 %v1591
        %v1764 = vunpack.c.h.bf16 %v1591
        %v1765 = vunpack.c.l.bf16 %v1592
        %v1766 = vunpack.c.h.bf16 %v1592
        %v1767 = vunpack.c.l.bf16 %v1593
        %v1768 = vunpack.c.h.bf16 %v1593
        %v1769 = vunpack.c.l.bf16 %v1594
        %v1770 = vunpack.c.h.bf16 %v1594
        %v1771 = vunpack.c.l.bf16 %v1595
        %v1772 = vunpack.c.h.bf16 %v1595
        %v1773 = vunpack.c.l.bf16 %v1596
        %v1774 = vunpack.c.h.bf16 %v1596
        %v1775 = vunpack.c.l.bf16 %v1597
        %v1776 = vunpack.c.h.bf16 %v1597
        %v1777 = vunpack.c.l.bf16 %v1598
        %v1778 = vunpack.c.h.bf16 %v1598
        %v1779 = vunpack.c.l.bf16 %v1599
        %v1780 = vunpack.c.h.bf16 %v1599
        %v1781 = vunpack.c.l.bf16 %v1600
        %v1782 = vunpack.c.h.bf16 %v1600
        %v1783 = vunpack.c.l.bf16 %v1601
        %v1784 = vunpack.c.h.bf16 %v1601
        %v1785 = vunpack.c.l.bf16 %v1602
        %v1786 = vunpack.c.h.bf16 %v1602
        %v1787 = vunpack.c.l.bf16 %v1603
        %v1788 = vunpack.c.h.bf16 %v1603
        %v1789 = vunpack.c.l.bf16 %v1604
        %v1790 = vunpack.c.h.bf16 %v1604
        %v1791 = vunpack.c.l.bf16 %v1605
        %v1792 = vunpack.c.h.bf16 %v1605
        %v1793 = vunpack.c.l.bf16 %v1606
        %v1794 = vunpack.c.h.bf16 %v1606
        %v1795 = vunpack.c.l.bf16 %v1607
        %v1796 = vunpack.c.h.bf16 %v1607
        %v1797 = vunpack.c.l.bf16 %v1608
        %v1798 = vunpack.c.h.bf16 %v1608
        %v1799 = vunpack.c.l.bf16 %v1609
        %v1800 = vunpack.c.h.bf16 %v1609
        %v1801 = vunpack.c.l.bf16 %v1610
        %v1802 = vunpack.c.h.bf16 %v1610
        %v1803 = vunpack.c.l.bf16 %v1611
        %v1804 = vunpack.c.h.bf16 %v1611
        %v1805 = vunpack.c.l.bf16 %v1612
        %v1806 = vunpack.c.h.bf16 %v1612
        %v1807 = vunpack.c.l.bf16 %v1613
        %v1808 = vunpack.c.h.bf16 %v1613
        %v1809 = vunpack.c.l.bf16 %v1614
        %v1810 = vunpack.c.h.bf16 %v1614
        %v1811 = vunpack.c.l.bf16 %v1615
        %v1812 = vunpack.c.h.bf16 %v1615
        %v1813 = vunpack.c.l.bf16 %v1616
        %v1814 = vunpack.c.h.bf16 %v1616
        %v1815 = vunpack.c.l.bf16 %v1617
        %v1816 = vunpack.c.h.bf16 %v1617
        %v1817 = vunpack.c.l.bf16 %v1618
        %v1818 = vunpack.c.h.bf16 %v1618
        %v1819 = vunpack.c.l.bf16 %v1619
        %v1820 = vunpack.c.h.bf16 %v1619
        %v1821 = vunpack.c.l.bf16 %v1620
        %v1822 = vunpack.c.h.bf16 %v1620
        %v1823 = vunpack.c.l.bf16 %v1621
        %v1824 = vunpack.c.h.bf16 %v1621
        %v1825 = vunpack.c.l.bf16 %v1622
        %v1826 = vunpack.c.h.bf16 %v1622
        %v1827 = vunpack.c.l.bf16 %v1623
        %v1828 = vunpack.c.h.bf16 %v1623
        %v1829 = vunpack.c.l.bf16 %v1624
        %v1830 = vunpack.c.h.bf16 %v1624
        %v1831 = vunpack.c.l.bf16 %v1625
        %v1832 = vunpack.c.h.bf16 %v1625
        %v1833 = vunpack.c.l.bf16 %v1626
        %v1834 = vunpack.c.h.bf16 %v1626
        %v1835 = vunpack.c.l.bf16 %v1627
        %v1836 = vunpack.c.h.bf16 %v1627
        %v1837 = vunpack.c.l.bf16 %v1628
        %v1838 = vunpack.c.h.bf16 %v1628
        %v1839 = vunpack.c.l.bf16 %v1629
        %v1840 = vunpack.c.h.bf16 %v1629
        %v1841 = vunpack.c.l.bf16 %v1630
        %v1842 = vunpack.c.h.bf16 %v1630
        %v1843 = vunpack.c.l.bf16 %v1631
        %v1844 = vunpack.c.h.bf16 %v1631
        %v1845 = vunpack.c.l.bf16 %v1632
        %v1846 = vunpack.c.h.bf16 %v1632
        %v1847 = vunpack.c.l.bf16 %v1633
        %v1848 = vunpack.c.h.bf16 %v1633
        %v1849 = vunpack.c.l.bf16 %v1634
        %v1850 = vunpack.c.h.bf16 %v1634
        %v1851 = vunpack.c.l.bf16 %v1635
        %v1852 = vunpack.c.h.bf16 %v1635
        %v1853 = vunpack.c.l.bf16 %v1636
        %v1854 = vunpack.c.h.bf16 %v1636
        %v1855 = vunpack.c.l.bf16 %v1637
        %v1856 = vunpack.c.h.bf16 %v1637
        %v1857 = vunpack.c.l.bf16 %v1638
        %v1858 = vunpack.c.h.bf16 %v1638
        %v1859 = vunpack.c.l.bf16 %v1639
        %v1860 = vunpack.c.h.bf16 %v1639
        %v1861 = vunpack.c.l.bf16 %v1640
        %v1862 = vunpack.c.h.bf16 %v1640
        %v1863 = vunpack.c.l.bf16 %v1641
        %v1864 = vunpack.c.h.bf16 %v1641
        %v1865 = vunpack.c.l.bf16 %v1642
        %v1866 = vunpack.c.h.bf16 %v1642
        %v1867 = vmul.f32 %v1739, 0.2
        %v1868 = vmul.f32 %v1740, 0.2
        %v1869 = vmul.f32 %v1741, 0.2
        %v1870 = vmul.f32 %v1742, 0.2
        %v1871 = vmul.f32 %v1743, 0.2
        %v1872 = vmul.f32 %v1744, 0.2
        %v1873 = vmul.f32 %v1745, 0.2
        %v1874 = vmul.f32 %v1746, 0.2
        %v1875 = vmul.f32 %v1747, 0.2
        %v1876 = vmul.f32 %v1748, 0.2
        %v1877 = vmul.f32 %v1749, 0.2
        %v1878 = vmul.f32 %v1750, 0.2
        %v1879 = vmul.f32 %v1751, 0.2
        %v1880 = vmul.f32 %v1752, 0.2
        %v1881 = vmul.f32 %v1753, 0.2
        %v1882 = vmul.f32 %v1754, 0.2
        %v1883 = vmul.f32 %v1755, 0.2
        %v1884 = vmul.f32 %v1756, 0.2
        %v1885 = vmul.f32 %v1757, 0.2
        %v1886 = vmul.f32 %v1758, 0.2
        %v1887 = vmul.f32 %v1759, 0.2
        %v1888 = vmul.f32 %v1760, 0.2
        %v1889 = vmul.f32 %v1761, 0.2
        %v1890 = vmul.f32 %v1762, 0.2
        %v1891 = vmul.f32 %v1763, 0.2
        %v1892 = vmul.f32 %v1764, 0.2
        %v1893 = vmul.f32 %v1765, 0.2
        %v1894 = vmul.f32 %v1766, 0.2
        %v1895 = vmul.f32 %v1767, 0.2
        %v1896 = vmul.f32 %v1768, 0.2
        %v1897 = vmul.f32 %v1769, 0.2
        %v1898 = vmul.f32 %v1770, 0.2
        %v1899 = vmul.f32 %v1771, 0.2
        %v1900 = vmul.f32 %v1772, 0.2
        %v1901 = vmul.f32 %v1773, 0.2
        %v1902 = vmul.f32 %v1774, 0.2
        %v1903 = vmul.f32 %v1775, 0.2
        %v1904 = vmul.f32 %v1776, 0.2
        %v1905 = vmul.f32 %v1777, 0.2
        %v1906 = vmul.f32 %v1778, 0.2
        %v1907 = vmul.f32 %v1779, 0.2
        %v1908 = vmul.f32 %v1780, 0.2
        %v1909 = vmul.f32 %v1781, 0.2
        %v1910 = vmul.f32 %v1782, 0.2
        %v1911 = vmul.f32 %v1783, 0.2
        %v1912 = vmul.f32 %v1784, 0.2
        %v1913 = vmul.f32 %v1785, 0.2
        %v1914 = vmul.f32 %v1786, 0.2
        %v1915 = vmul.f32 %v1787, 0.2
        %v1916 = vmul.f32 %v1788, 0.2
        %v1917 = vmul.f32 %v1789, 0.2
        %v1918 = vmul.f32 %v1790, 0.2
        %v1919 = vmul.f32 %v1791, 0.2
        %v1920 = vmul.f32 %v1792, 0.2
        %v1921 = vmul.f32 %v1793, 0.2
        %v1922 = vmul.f32 %v1794, 0.2
        %v1923 = vmul.f32 %v1795, 0.2
        %v1924 = vmul.f32 %v1796, 0.2
        %v1925 = vmul.f32 %v1797, 0.2
        %v1926 = vmul.f32 %v1798, 0.2
        %v1927 = vmul.f32 %v1799, 0.2
        %v1928 = vmul.f32 %v1800, 0.2
        %v1929 = vmul.f32 %v1801, 0.2
        %v1930 = vmul.f32 %v1802, 0.2
        %v1931 = vmul.f32 %v1803, 0.2
        %v1932 = vmul.f32 %v1804, 0.2
        %v1933 = vmul.f32 %v1805, 0.2
        %v1934 = vmul.f32 %v1806, 0.2
        %v1935 = vmul.f32 %v1807, 0.2
        %v1936 = vmul.f32 %v1808, 0.2
        %v1937 = vmul.f32 %v1809, 0.2
        %v1938 = vmul.f32 %v1810, 0.2
        %v1939 = vmul.f32 %v1811, 0.2
        %v1940 = vmul.f32 %v1812, 0.2
        %v1941 = vmul.f32 %v1813, 0.2
        %v1942 = vmul.f32 %v1814, 0.2
        %v1943 = vmul.f32 %v1815, 0.2
        %v1944 = vmul.f32 %v1816, 0.2
        %v1945 = vmul.f32 %v1817, 0.2
        %v1946 = vmul.f32 %v1818, 0.2
        %v1947 = vmul.f32 %v1819, 0.2
        %v1948 = vmul.f32 %v1820, 0.2
        %v1949 = vmul.f32 %v1821, 0.2
        %v1950 = vmul.f32 %v1822, 0.2
        %v1951 = vmul.f32 %v1823, 0.2
        %v1952 = vmul.f32 %v1824, 0.2
        %v1953 = vmul.f32 %v1825, 0.2
        %v1954 = vmul.f32 %v1826, 0.2
        %v1955 = vmul.f32 %v1827, 0.2
        %v1956 = vmul.f32 %v1828, 0.2
        %v1957 = vmul.f32 %v1829, 0.2
        %v1958 = vmul.f32 %v1830, 0.2
        %v1959 = vmul.f32 %v1831, 0.2
        %v1960 = vmul.f32 %v1832, 0.2
        %v1961 = vmul.f32 %v1833, 0.2
        %v1962 = vmul.f32 %v1834, 0.2
        %v1963 = vmul.f32 %v1835, 0.2
        %v1964 = vmul.f32 %v1836, 0.2
        %v1965 = vmul.f32 %v1837, 0.2
        %v1966 = vmul.f32 %v1838, 0.2
        %v1967 = vmul.f32 %v1839, 0.2
        %v1968 = vmul.f32 %v1840, 0.2
        %v1969 = vmul.f32 %v1841, 0.2
        %v1970 = vmul.f32 %v1842, 0.2
        %v1971 = vmul.f32 %v1843, 0.2
        %v1972 = vmul.f32 %v1844, 0.2
        %v1973 = vmul.f32 %v1845, 0.2
        %v1974 = vmul.f32 %v1846, 0.2
        %v1975 = vmul.f32 %v1847, 0.2
        %v1976 = vmul.f32 %v1848, 0.2
        %v1977 = vmul.f32 %v1849, 0.2
        %v1978 = vmul.f32 %v1850, 0.2
        %v1979 = vmul.f32 %v1851, 0.2
        %v1980 = vmul.f32 %v1852, 0.2
        %v1981 = vmul.f32 %v1853, 0.2
        %v1982 = vmul.f32 %v1854, 0.2
        %v1983 = vmul.f32 %v1855, 0.2
        %v1984 = vmul.f32 %v1856, 0.2
        %v1985 = vmul.f32 %v1857, 0.2
        %v1986 = vmul.f32 %v1858, 0.2
        %v1987 = vmul.f32 %v1859, 0.2
        %v1988 = vmul.f32 %v1860, 0.2
        %v1989 = vmul.f32 %v1861, 0.2
        %v1990 = vmul.f32 %v1862, 0.2
        %v1991 = vmul.f32 %v1863, 0.2
        %v1992 = vmul.f32 %v1864, 0.2
        %v1993 = vmul.f32 %v1865, 0.2
        %v1994 = vmul.f32 %v1866, 0.2
        %v1995 = vmax.f32 %v1739, %v1867
        %v1996 = vmax.f32 %v1740, %v1868
        %v1997 = vmax.f32 %v1741, %v1869
        %v1998 = vmax.f32 %v1742, %v1870
        %v1999 = vmax.f32 %v1743, %v1871
        %v2000 = vmax.f32 %v1744, %v1872
        %v2001 = vmax.f32 %v1745, %v1873
        %v2002 = vmax.f32 %v1746, %v1874
        %v2003 = vmax.f32 %v1747, %v1875
        %v2004 = vmax.f32 %v1748, %v1876
        %v2005 = vmax.f32 %v1749, %v1877
        %v2006 = vmax.f32 %v1750, %v1878
        %v2007 = vmax.f32 %v1751, %v1879
        %v2008 = vmax.f32 %v1752, %v1880
        %v2009 = vmax.f32 %v1753, %v1881
        %v2010 = vmax.f32 %v1754, %v1882
        %v2011 = vmax.f32 %v1755, %v1883
        %v2012 = vmax.f32 %v1756, %v1884
        %v2013 = vmax.f32 %v1757, %v1885
        %v2014 = vmax.f32 %v1758, %v1886
        %v2015 = vmax.f32 %v1759, %v1887
        %v2016 = vmax.f32 %v1760, %v1888
        %v2017 = vmax.f32 %v1761, %v1889
        %v2018 = vmax.f32 %v1762, %v1890
        %v2019 = vmax.f32 %v1763, %v1891
        %v2020 = vmax.f32 %v1764, %v1892
        %v2021 = vmax.f32 %v1765, %v1893
        %v2022 = vmax.f32 %v1766, %v1894
        %v2023 = vmax.f32 %v1767, %v1895
        %v2024 = vmax.f32 %v1768, %v1896
        %v2025 = vmax.f32 %v1769, %v1897
        %v2026 = vmax.f32 %v1770, %v1898
        %v2027 = vmax.f32 %v1771, %v1899
        %v2028 = vmax.f32 %v1772, %v1900
        %v2029 = vmax.f32 %v1773, %v1901
        %v2030 = vmax.f32 %v1774, %v1902
        %v2031 = vmax.f32 %v1775, %v1903
        %v2032 = vmax.f32 %v1776, %v1904
        %v2033 = vmax.f32 %v1777, %v1905
        %v2034 = vmax.f32 %v1778, %v1906
        %v2035 = vmax.f32 %v1779, %v1907
        %v2036 = vmax.f32 %v1780, %v1908
        %v2037 = vmax.f32 %v1781, %v1909
        %v2038 = vmax.f32 %v1782, %v1910
        %v2039 = vmax.f32 %v1783, %v1911
        %v2040 = vmax.f32 %v1784, %v1912
        %v2041 = vmax.f32 %v1785, %v1913
        %v2042 = vmax.f32 %v1786, %v1914
        %v2043 = vmax.f32 %v1787, %v1915
        %v2044 = vmax.f32 %v1788, %v1916
        %v2045 = vmax.f32 %v1789, %v1917
        %v2046 = vmax.f32 %v1790, %v1918
        %v2047 = vmax.f32 %v1791, %v1919
        %v2048 = vmax.f32 %v1792, %v1920
        %v2049 = vmax.f32 %v1793, %v1921
        %v2050 = vmax.f32 %v1794, %v1922
        %v2051 = vmax.f32 %v1795, %v1923
        %v2052 = vmax.f32 %v1796, %v1924
        %v2053 = vmax.f32 %v1797, %v1925
        %v2054 = vmax.f32 %v1798, %v1926
        %v2055 = vmax.f32 %v1799, %v1927
        %v2056 = vmax.f32 %v1800, %v1928
        %v2057 = vmax.f32 %v1801, %v1929
        %v2058 = vmax.f32 %v1802, %v1930
        %v2059 = vmax.f32 %v1803, %v1931
        %v2060 = vmax.f32 %v1804, %v1932
        %v2061 = vmax.f32 %v1805, %v1933
        %v2062 = vmax.f32 %v1806, %v1934
        %v2063 = vmax.f32 %v1807, %v1935
        %v2064 = vmax.f32 %v1808, %v1936
        %v2065 = vmax.f32 %v1809, %v1937
        %v2066 = vmax.f32 %v1810, %v1938
        %v2067 = vmax.f32 %v1811, %v1939
        %v2068 = vmax.f32 %v1812, %v1940
        %v2069 = vmax.f32 %v1813, %v1941
        %v2070 = vmax.f32 %v1814, %v1942
        %v2071 = vmax.f32 %v1815, %v1943
        %v2072 = vmax.f32 %v1816, %v1944
        %v2073 = vmax.f32 %v1817, %v1945
        %v2074 = vmax.f32 %v1818, %v1946
        %v2075 = vmax.f32 %v1819, %v1947
        %v2076 = vmax.f32 %v1820, %v1948
        %v2077 = vmax.f32 %v1821, %v1949
        %v2078 = vmax.f32 %v1822, %v1950
        %v2079 = vmax.f32 %v1823, %v1951
        %v2080 = vmax.f32 %v1824, %v1952
        %v2081 = vmax.f32 %v1825, %v1953
        %v2082 = vmax.f32 %v1826, %v1954
        %v2083 = vmax.f32 %v1827, %v1955
        %v2084 = vmax.f32 %v1828, %v1956
        %v2085 = vmax.f32 %v1829, %v1957
        %v2086 = vmax.f32 %v1830, %v1958
        %v2087 = vmax.f32 %v1831, %v1959
        %v2088 = vmax.f32 %v1832, %v1960
        %v2089 = vmax.f32 %v1833, %v1961
        %v2090 = vmax.f32 %v1834, %v1962
        %v2091 = vmax.f32 %v1835, %v1963
        %v2092 = vmax.f32 %v1836, %v1964
        %v2093 = vmax.f32 %v1837, %v1965
        %v2094 = vmax.f32 %v1838, %v1966
        %v2095 = vmax.f32 %v1839, %v1967
        %v2096 = vmax.f32 %v1840, %v1968
        %v2097 = vmax.f32 %v1841, %v1969
        %v2098 = vmax.f32 %v1842, %v1970
        %v2099 = vmax.f32 %v1843, %v1971
        %v2100 = vmax.f32 %v1844, %v1972
        %v2101 = vmax.f32 %v1845, %v1973
        %v2102 = vmax.f32 %v1846, %v1974
        %v2103 = vmax.f32 %v1847, %v1975
        %v2104 = vmax.f32 %v1848, %v1976
        %v2105 = vmax.f32 %v1849, %v1977
        %v2106 = vmax.f32 %v1850, %v1978
        %v2107 = vmax.f32 %v1851, %v1979
        %v2108 = vmax.f32 %v1852, %v1980
        %v2109 = vmax.f32 %v1853, %v1981
        %v2110 = vmax.f32 %v1854, %v1982
        %v2111 = vmax.f32 %v1855, %v1983
        %v2112 = vmax.f32 %v1856, %v1984
        %v2113 = vmax.f32 %v1857, %v1985
        %v2114 = vmax.f32 %v1858, %v1986
        %v2115 = vmax.f32 %v1859, %v1987
        %v2116 = vmax.f32 %v1860, %v1988
        %v2117 = vmax.f32 %v1861, %v1989
        %v2118 = vmax.f32 %v1862, %v1990
        %v2119 = vmax.f32 %v1863, %v1991
        %v2120 = vmax.f32 %v1864, %v1992
        %v2121 = vmax.f32 %v1865, %v1993
        %v2122 = vmax.f32 %v1866, %v1994
        %v2123 = vunpack.c.l.bf16 %v1643
        %v2124 = vunpack.c.h.bf16 %v1643
        %v2125 = vunpack.c.l.bf16 %v1644
        %v2126 = vunpack.c.h.bf16 %v1644
        %v2127 = vunpack.c.l.bf16 %v1645
        %v2128 = vunpack.c.h.bf16 %v1645
        %v2129 = vunpack.c.l.bf16 %v1646
        %v2130 = vunpack.c.h.bf16 %v1646
        %v2131 = vunpack.c.l.bf16 %v1647
        %v2132 = vunpack.c.h.bf16 %v1647
        %v2133 = vunpack.c.l.bf16 %v1648
        %v2134 = vunpack.c.h.bf16 %v1648
        %v2135 = vunpack.c.l.bf16 %v1649
        %v2136 = vunpack.c.h.bf16 %v1649
        %v2137 = vunpack.c.l.bf16 %v1650
        %v2138 = vunpack.c.h.bf16 %v1650
        %v2139 = vunpack.c.l.bf16 %v1651
        %v2140 = vunpack.c.h.bf16 %v1651
        %v2141 = vunpack.c.l.bf16 %v1652
        %v2142 = vunpack.c.h.bf16 %v1652
        %v2143 = vunpack.c.l.bf16 %v1653
        %v2144 = vunpack.c.h.bf16 %v1653
        %v2145 = vunpack.c.l.bf16 %v1654
        %v2146 = vunpack.c.h.bf16 %v1654
        %v2147 = vunpack.c.l.bf16 %v1655
        %v2148 = vunpack.c.h.bf16 %v1655
        %v2149 = vunpack.c.l.bf16 %v1656
        %v2150 = vunpack.c.h.bf16 %v1656
        %v2151 = vunpack.c.l.bf16 %v1657
        %v2152 = vunpack.c.h.bf16 %v1657
        %v2153 = vunpack.c.l.bf16 %v1658
        %v2154 = vunpack.c.h.bf16 %v1658
        %v2155 = vunpack.c.l.bf16 %v1659
        %v2156 = vunpack.c.h.bf16 %v1659
        %v2157 = vunpack.c.l.bf16 %v1660
        %v2158 = vunpack.c.h.bf16 %v1660
        %v2159 = vunpack.c.l.bf16 %v1661
        %v2160 = vunpack.c.h.bf16 %v1661
        %v2161 = vunpack.c.l.bf16 %v1662
        %v2162 = vunpack.c.h.bf16 %v1662
        %v2163 = vunpack.c.l.bf16 %v1663
        %v2164 = vunpack.c.h.bf16 %v1663
        %v2165 = vunpack.c.l.bf16 %v1664
        %v2166 = vunpack.c.h.bf16 %v1664
        %v2167 = vunpack.c.l.bf16 %v1665
        %v2168 = vunpack.c.h.bf16 %v1665
        %v2169 = vunpack.c.l.bf16 %v1666
        %v2170 = vunpack.c.h.bf16 %v1666
        %v2171 = vunpack.c.l.bf16 %v1667
        %v2172 = vunpack.c.h.bf16 %v1667
        %v2173 = vunpack.c.l.bf16 %v1668
        %v2174 = vunpack.c.h.bf16 %v1668
        %v2175 = vunpack.c.l.bf16 %v1669
        %v2176 = vunpack.c.h.bf16 %v1669
        %v2177 = vunpack.c.l.bf16 %v1670
        %v2178 = vunpack.c.h.bf16 %v1670
        %v2179 = vunpack.c.l.bf16 %v1671
        %v2180 = vunpack.c.h.bf16 %v1671
        %v2181 = vunpack.c.l.bf16 %v1672
        %v2182 = vunpack.c.h.bf16 %v1672
        %v2183 = vunpack.c.l.bf16 %v1673
        %v2184 = vunpack.c.h.bf16 %v1673
        %v2185 = vunpack.c.l.bf16 %v1674
        %v2186 = vunpack.c.h.bf16 %v1674
        %v2187 = vunpack.c.l.bf16 %v1675
        %v2188 = vunpack.c.h.bf16 %v1675
        %v2189 = vunpack.c.l.bf16 %v1676
        %v2190 = vunpack.c.h.bf16 %v1676
        %v2191 = vunpack.c.l.bf16 %v1677
        %v2192 = vunpack.c.h.bf16 %v1677
        %v2193 = vunpack.c.l.bf16 %v1678
        %v2194 = vunpack.c.h.bf16 %v1678
        %v2195 = vunpack.c.l.bf16 %v1679
        %v2196 = vunpack.c.h.bf16 %v1679
        %v2197 = vunpack.c.l.bf16 %v1680
        %v2198 = vunpack.c.h.bf16 %v1680
        %v2199 = vunpack.c.l.bf16 %v1681
        %v2200 = vunpack.c.h.bf16 %v1681
        %v2201 = vunpack.c.l.bf16 %v1682
        %v2202 = vunpack.c.h.bf16 %v1682
        %v2203 = vunpack.c.l.bf16 %v1683
        %v2204 = vunpack.c.h.bf16 %v1683
        %v2205 = vunpack.c.l.bf16 %v1684
        %v2206 = vunpack.c.h.bf16 %v1684
        %v2207 = vunpack.c.l.bf16 %v1685
        %v2208 = vunpack.c.h.bf16 %v1685
        %v2209 = vunpack.c.l.bf16 %v1686
        %v2210 = vunpack.c.h.bf16 %v1686
        %v2211 = vunpack.c.l.bf16 %v1687
        %v2212 = vunpack.c.h.bf16 %v1687
        %v2213 = vunpack.c.l.bf16 %v1688
        %v2214 = vunpack.c.h.bf16 %v1688
        %v2215 = vunpack.c.l.bf16 %v1689
        %v2216 = vunpack.c.h.bf16 %v1689
        %v2217 = vunpack.c.l.bf16 %v1690
        %v2218 = vunpack.c.h.bf16 %v1690
        %v2219 = vld [vmem:[%s3] sm:$0xf]
        %v2220 = vld [vmem:[%s3 + $0x4] sm:$0xf]
        %v2221 = vld [vmem:[%s3 + $0x8] sm:$0xf]
        %v2222 = vld [vmem:[%s3 + $0xc] sm:$0xf]
        %v2223 = vld [vmem:[%s3 + $0x10] sm:$0xf]
        %v2224 = vld [vmem:[%s3 + $0x14] sm:$0xf]
        %v2225 = vpack.c.bf16 %v2011, %v1995
        %v2226 = vpack.c.bf16 %v2012, %v1996
        %v2227 = vpack.c.bf16 %v2013, %v1997
        %v2228 = vpack.c.bf16 %v2014, %v1998
        %v2229 = vpack.c.bf16 %v2015, %v1999
        %v2230 = vpack.c.bf16 %v2016, %v2000
        %v2231 = vpack.c.bf16 %v2017, %v2001
        %v2232 = vpack.c.bf16 %v2018, %v2002
        %v2233 = vpack.c.bf16 %v2019, %v2003
        %v2234 = vpack.c.bf16 %v2020, %v2004
        %v2235 = vpack.c.bf16 %v2021, %v2005
        %v2236 = vpack.c.bf16 %v2022, %v2006
        %v2237 = vpack.c.bf16 %v2023, %v2007
        %v2238 = vpack.c.bf16 %v2024, %v2008
        %v2239 = vpack.c.bf16 %v2025, %v2009
        %v2240 = vpack.c.bf16 %v2026, %v2010
        %v2241 = vpack.c.bf16 %v2043, %v2027
        %v2242 = vpack.c.bf16 %v2044, %v2028
        %v2243 = vpack.c.bf16 %v2045, %v2029
        %v2244 = vpack.c.bf16 %v2046, %v2030
        %v2245 = vpack.c.bf16 %v2047, %v2031
        %v2246 = vpack.c.bf16 %v2048, %v2032
        %v2247 = vpack.c.bf16 %v2049, %v2033
        %v2248 = vpack.c.bf16 %v2050, %v2034
        %v2249 = vpack.c.bf16 %v2051, %v2035
        %v2250 = vpack.c.bf16 %v2052, %v2036
        %v2251 = vpack.c.bf16 %v2053, %v2037
        %v2252 = vpack.c.bf16 %v2054, %v2038
        %v2253 = vpack.c.bf16 %v2055, %v2039
        %v2254 = vpack.c.bf16 %v2056, %v2040
        %v2255 = vpack.c.bf16 %v2057, %v2041
        %v2256 = vpack.c.bf16 %v2058, %v2042
        %v2257 = vpack.c.bf16 %v2075, %v2059
        %v2258 = vpack.c.bf16 %v2076, %v2060
        %v2259 = vpack.c.bf16 %v2077, %v2061
        %v2260 = vpack.c.bf16 %v2078, %v2062
        %v2261 = vpack.c.bf16 %v2079, %v2063
        %v2262 = vpack.c.bf16 %v2080, %v2064
        %v2263 = vpack.c.bf16 %v2081, %v2065
        %v2264 = vpack.c.bf16 %v2082, %v2066
        %v2265 = vpack.c.bf16 %v2083, %v2067
        %v2266 = vpack.c.bf16 %v2084, %v2068
        %v2267 = vpack.c.bf16 %v2085, %v2069
        %v2268 = vpack.c.bf16 %v2086, %v2070
        %v2269 = vpack.c.bf16 %v2087, %v2071
        %v2270 = vpack.c.bf16 %v2088, %v2072
        %v2271 = vpack.c.bf16 %v2089, %v2073
        %v2272 = vpack.c.bf16 %v2090, %v2074
        %v2273 = vpack.c.bf16 %v2107, %v2091
        %v2274 = vpack.c.bf16 %v2108, %v2092
        %v2275 = vpack.c.bf16 %v2109, %v2093
        %v2276 = vpack.c.bf16 %v2110, %v2094
        %v2277 = vpack.c.bf16 %v2111, %v2095
        %v2278 = vpack.c.bf16 %v2112, %v2096
        %v2279 = vpack.c.bf16 %v2113, %v2097
        %v2280 = vpack.c.bf16 %v2114, %v2098
        %v2281 = vpack.c.bf16 %v2115, %v2099
        %v2282 = vpack.c.bf16 %v2116, %v2100
        %v2283 = vpack.c.bf16 %v2117, %v2101
        %v2284 = vpack.c.bf16 %v2118, %v2102
        %v2285 = vpack.c.bf16 %v2119, %v2103
        %v2286 = vpack.c.bf16 %v2120, %v2104
        %v2287 = vpack.c.bf16 %v2121, %v2105
        %v2288 = vpack.c.bf16 %v2122, %v2106
        %v2295 = vunpack.c.l.b16 %v2219
        %v2296 = vunpack.c.l.b16 %v2220
        %v2297 = vunpack.c.l.b16 %v2221
        %v2298 = vunpack.c.l.b16 %v2222
        %v2299 = vunpack.c.l.b16 %v2223
        %v2300 = vunpack.c.l.b16 %v2224
        %v2301 = vpack.c.b16 %v2296, %v2295
        %v2302 = vpack.c.b16 %v2298, %v2297
        %v2303 = vpack.c.b16 %v2300, %v2299
        %vm2304 = vcmask 523264
        %v2306 = vsel %vm2304, %v2301, 0
        %v2309 = vsel %vm2304, %v2302, 0
        %v2312 = vsel %vm2304, %v2303, 0
        %2314 = vmatpush.bf16.msra.mxu0 0
        %2315 = vmatpush.bf16.msra.mxu0 0
        %2316 = vmatpush.bf16.msra.mxu0 0
        %2317 = vmatpush.bf16.msra.mxu0 0
        %2318 = vmatpush.bf16.msra.mxu0 %v2273
        %2319 = vmatpush.bf16.msra.mxu0 %v2257
        %2320 = vmatpush.bf16.msra.mxu0 %v2241
        %2321 = vmatpush.bf16.msra.mxu0 %v2225
        %2322 = vmatmul.bf16.gmra.mxu0 %v2306
        %v2323 = vpop.f32.mrf.mxu0
        %v2324 = vadd.f32 0.0, %v2323
        %v2325 = vpop.f32.mrf.mxu0
        %v2326 = vadd.f32 0.0, %v2325
        %2327 = vmatmul.bf16.gmra.mxu0 %v2309
        %v2328 = vpop.f32.mrf.mxu0
        %v2329 = vadd.f32 0.0, %v2328
        %v2330 = vpop.f32.mrf.mxu0
        %v2331 = vadd.f32 0.0, %v2330
        %2332 = vmatmul.bf16.gmra.mxu0 %v2312
        %v2333 = vpop.f32.mrf.mxu0
        %v2334 = vadd.f32 0.0, %v2333
        %v2335 = vpop.f32.mrf.mxu0
        %v2336 = vadd.f32 0.0, %v2335
        %2337 = vdwg.mxu0
        %2338 = vmatpush.bf16.msra.mxu0 0
        %2339 = vmatpush.bf16.msra.mxu0 0
        %2340 = vmatpush.bf16.msra.mxu0 0
        %2341 = vmatpush.bf16.msra.mxu0 0
        %2342 = vmatpush.bf16.msra.mxu0 %v2274
        %2343 = vmatpush.bf16.msra.mxu0 %v2258
        %2344 = vmatpush.bf16.msra.mxu0 %v2242
        %2345 = vmatpush.bf16.msra.mxu0 %v2226
        %2346 = vmatmul.bf16.gmra.mxu0 %v2306
        %v2347 = vpop.f32.mrf.mxu0
        %v2348 = vadd.f32 0.0, %v2347
        %v2349 = vpop.f32.mrf.mxu0
        %v2350 = vadd.f32 0.0, %v2349
        %2351 = vmatmul.bf16.gmra.mxu0 %v2309
        %v2352 = vpop.f32.mrf.mxu0
        %v2353 = vadd.f32 0.0, %v2352
        %v2354 = vpop.f32.mrf.mxu0
        %v2355 = vadd.f32 0.0, %v2354
        %2356 = vmatmul.bf16.gmra.mxu0 %v2312
        %v2357 = vpop.f32.mrf.mxu0
        %v2358 = vadd.f32 0.0, %v2357
        %v2359 = vpop.f32.mrf.mxu0
        %v2360 = vadd.f32 0.0, %v2359
        %2361 = vdwg.mxu0
        %2362 = vmatpush.bf16.msra.mxu0 0
        %2363 = vmatpush.bf16.msra.mxu0 0
        %2364 = vmatpush.bf16.msra.mxu0 0
        %2365 = vmatpush.bf16.msra.mxu0 0
        %2366 = vmatpush.bf16.msra.mxu0 %v2275
        %2367 = vmatpush.bf16.msra.mxu0 %v2259
        %2368 = vmatpush.bf16.msra.mxu0 %v2243
        %2369 = vmatpush.bf16.msra.mxu0 %v2227
        %2370 = vmatmul.bf16.gmra.mxu0 %v2306
        %v2371 = vpop.f32.mrf.mxu0
        %v2372 = vadd.f32 0.0, %v2371
        %v2373 = vpop.f32.mrf.mxu0
        %v2374 = vadd.f32 0.0, %v2373
        %2375 = vmatmul.bf16.gmra.mxu0 %v2309
        %v2376 = vpop.f32.mrf.mxu0
        %v2377 = vadd.f32 0.0, %v2376
        %v2378 = vpop.f32.mrf.mxu0
        %v2379 = vadd.f32 0.0, %v2378
        %2380 = vmatmul.bf16.gmra.mxu0 %v2312
        %v2381 = vpop.f32.mrf.mxu0
        %v2382 = vadd.f32 0.0, %v2381
        %v2383 = vpop.f32.mrf.mxu0
        %v2384 = vadd.f32 0.0, %v2383
        %2385 = vdwg.mxu0
        %2386 = vmatpush.bf16.msra.mxu0 0
        %2387 = vmatpush.bf16.msra.mxu0 0
        %2388 = vmatpush.bf16.msra.mxu0 0
        %2389 = vmatpush.bf16.msra.mxu0 0
        %2390 = vmatpush.bf16.msra.mxu0 %v2276
        %2391 = vmatpush.bf16.msra.mxu0 %v2260
        %2392 = vmatpush.bf16.msra.mxu0 %v2244
        %2393 = vmatpush.bf16.msra.mxu0 %v2228
        %2394 = vmatmul.bf16.gmra.mxu0 %v2306
        %v2395 = vpop.f32.mrf.mxu0
        %v2396 = vadd.f32 0.0, %v2395
        %v2397 = vpop.f32.mrf.mxu0
        %v2398 = vadd.f32 0.0, %v2397
        %2399 = vmatmul.bf16.gmra.mxu0 %v2309
        %v2400 = vpop.f32.mrf.mxu0
        %v2401 = vadd.f32 0.0, %v2400
        %v2402 = vpop.f32.mrf.mxu0
        %v2403 = vadd.f32 0.0, %v2402
        %2404 = vmatmul.bf16.gmra.mxu0 %v2312
        %v2405 = vpop.f32.mrf.mxu0
        %v2406 = vadd.f32 0.0, %v2405
        %v2407 = vpop.f32.mrf.mxu0
        %v2408 = vadd.f32 0.0, %v2407
        %2409 = vdwg.mxu0
        %2410 = vmatpush.bf16.msra.mxu0 0
        %2411 = vmatpush.bf16.msra.mxu0 0
        %2412 = vmatpush.bf16.msra.mxu0 0
        %2413 = vmatpush.bf16.msra.mxu0 0
        %2414 = vmatpush.bf16.msra.mxu0 %v2277
        %2415 = vmatpush.bf16.msra.mxu0 %v2261
        %2416 = vmatpush.bf16.msra.mxu0 %v2245
        %2417 = vmatpush.bf16.msra.mxu0 %v2229
        %2418 = vmatmul.bf16.gmra.mxu0 %v2306
        %v2419 = vpop.f32.mrf.mxu0
        %v2420 = vadd.f32 0.0, %v2419
        %v2421 = vpop.f32.mrf.mxu0
        %v2422 = vadd.f32 0.0, %v2421
        %2423 = vmatmul.bf16.gmra.mxu0 %v2309
        %v2424 = vpop.f32.mrf.mxu0
        %v2425 = vadd.f32 0.0, %v2424
        %v2426 = vpop.f32.mrf.mxu0
        %v2427 = vadd.f32 0.0, %v2426
        %2428 = vmatmul.bf16.gmra.mxu0 %v2312
        %v2429 = vpop.f32.mrf.mxu0
        %v2430 = vadd.f32 0.0, %v2429
        %v2431 = vpop.f32.mrf.mxu0
        %v2432 = vadd.f32 0.0, %v2431
        %2433 = vdwg.mxu0
        %2434 = vmatpush.bf16.msra.mxu0 0
        %2435 = vmatpush.bf16.msra.mxu0 0
        %2436 = vmatpush.bf16.msra.mxu0 0
        %2437 = vmatpush.bf16.msra.mxu0 0
        %2438 = vmatpush.bf16.msra.mxu0 %v2278
        %2439 = vmatpush.bf16.msra.mxu0 %v2262
        %2440 = vmatpush.bf16.msra.mxu0 %v2246
        %2441 = vmatpush.bf16.msra.mxu0 %v2230
        %2442 = vmatmul.bf16.gmra.mxu0 %v2306
        %v2443 = vpop.f32.mrf.mxu0
        %v2444 = vadd.f32 0.0, %v2443
        %v2445 = vpop.f32.mrf.mxu0
        %v2446 = vadd.f32 0.0, %v2445
        %2447 = vmatmul.bf16.gmra.mxu0 %v2309
        %v2448 = vpop.f32.mrf.mxu0
        %v2449 = vadd.f32 0.0, %v2448
        %v2450 = vpop.f32.mrf.mxu0
        %v2451 = vadd.f32 0.0, %v2450
        %2452 = vmatmul.bf16.gmra.mxu0 %v2312
        %v2453 = vpop.f32.mrf.mxu0
        %v2454 = vadd.f32 0.0, %v2453
        %v2455 = vpop.f32.mrf.mxu0
        %v2456 = vadd.f32 0.0, %v2455
        %2457 = vdwg.mxu0
        %2458 = vmatpush.bf16.msra.mxu0 0
        %2459 = vmatpush.bf16.msra.mxu0 0
        %2460 = vmatpush.bf16.msra.mxu0 0
        %2461 = vmatpush.bf16.msra.mxu0 0
        %2462 = vmatpush.bf16.msra.mxu0 %v2279
        %2463 = vmatpush.bf16.msra.mxu0 %v2263
        %2464 = vmatpush.bf16.msra.mxu0 %v2247
        %2465 = vmatpush.bf16.msra.mxu0 %v2231
        %2466 = vmatmul.bf16.gmra.mxu0 %v2306
        %v2467 = vpop.f32.mrf.mxu0
        %v2468 = vadd.f32 0.0, %v2467
        %v2469 = vpop.f32.mrf.mxu0
        %v2470 = vadd.f32 0.0, %v2469
        %2471 = vmatmul.bf16.gmra.mxu0 %v2309
        %v2472 = vpop.f32.mrf.mxu0
        %v2473 = vadd.f32 0.0, %v2472
        %v2474 = vpop.f32.mrf.mxu0
        %v2475 = vadd.f32 0.0, %v2474
        %2476 = vmatmul.bf16.gmra.mxu0 %v2312
        %v2477 = vpop.f32.mrf.mxu0
        %v2478 = vadd.f32 0.0, %v2477
        %v2479 = vpop.f32.mrf.mxu0
        %v2480 = vadd.f32 0.0, %v2479
        %2481 = vdwg.mxu0
        %2482 = vmatpush.bf16.msra.mxu0 0
        %2483 = vmatpush.bf16.msra.mxu0 0
        %2484 = vmatpush.bf16.msra.mxu0 0
        %2485 = vmatpush.bf16.msra.mxu0 0
        %2486 = vmatpush.bf16.msra.mxu0 %v2280
        %2487 = vmatpush.bf16.msra.mxu0 %v2264
        %2488 = vmatpush.bf16.msra.mxu0 %v2248
        %2489 = vmatpush.bf16.msra.mxu0 %v2232
        %2490 = vmatmul.bf16.gmra.mxu0 %v2306
        %v2491 = vpop.f32.mrf.mxu0
        %v2492 = vadd.f32 0.0, %v2491
        %v2493 = vpop.f32.mrf.mxu0
        %v2494 = vadd.f32 0.0, %v2493
        %2495 = vmatmul.bf16.gmra.mxu0 %v2309
        %v2496 = vpop.f32.mrf.mxu0
        %v2497 = vadd.f32 0.0, %v2496
        %v2498 = vpop.f32.mrf.mxu0
        %v2499 = vadd.f32 0.0, %v2498
        %2500 = vmatmul.bf16.gmra.mxu0 %v2312
        %v2501 = vpop.f32.mrf.mxu0
        %v2502 = vadd.f32 0.0, %v2501
        %v2503 = vpop.f32.mrf.mxu0
        %v2504 = vadd.f32 0.0, %v2503
        %2505 = vdwg.mxu0
        %2506 = vmatpush.bf16.msra.mxu0 0
        %2507 = vmatpush.bf16.msra.mxu0 0
        %2508 = vmatpush.bf16.msra.mxu0 0
        %2509 = vmatpush.bf16.msra.mxu0 0
        %2510 = vmatpush.bf16.msra.mxu0 %v2281
        %2511 = vmatpush.bf16.msra.mxu0 %v2265
        %2512 = vmatpush.bf16.msra.mxu0 %v2249
        %2513 = vmatpush.bf16.msra.mxu0 %v2233
        %2514 = vmatmul.bf16.gmra.mxu0 %v2306
        %v2515 = vpop.f32.mrf.mxu0
        %v2516 = vadd.f32 0.0, %v2515
        %v2517 = vpop.f32.mrf.mxu0
        %v2518 = vadd.f32 0.0, %v2517
        %2519 = vmatmul.bf16.gmra.mxu0 %v2309
        %v2520 = vpop.f32.mrf.mxu0
        %v2521 = vadd.f32 0.0, %v2520
        %v2522 = vpop.f32.mrf.mxu0
        %v2523 = vadd.f32 0.0, %v2522
        %2524 = vmatmul.bf16.gmra.mxu0 %v2312
        %v2525 = vpop.f32.mrf.mxu0
        %v2526 = vadd.f32 0.0, %v2525
        %v2527 = vpop.f32.mrf.mxu0
        %v2528 = vadd.f32 0.0, %v2527
        %2529 = vdwg.mxu0
        %2530 = vmatpush.bf16.msra.mxu0 0
        %2531 = vmatpush.bf16.msra.mxu0 0
        %2532 = vmatpush.bf16.msra.mxu0 0
        %2533 = vmatpush.bf16.msra.mxu0 0
        %2534 = vmatpush.bf16.msra.mxu0 %v2282
        %2535 = vmatpush.bf16.msra.mxu0 %v2266
        %2536 = vmatpush.bf16.msra.mxu0 %v2250
        %2537 = vmatpush.bf16.msra.mxu0 %v2234
        %2538 = vmatmul.bf16.gmra.mxu0 %v2306
        %v2539 = vpop.f32.mrf.mxu0
        %v2540 = vadd.f32 0.0, %v2539
        %v2541 = vpop.f32.mrf.mxu0
        %v2542 = vadd.f32 0.0, %v2541
        %2543 = vmatmul.bf16.gmra.mxu0 %v2309
        %v2544 = vpop.f32.mrf.mxu0
        %v2545 = vadd.f32 0.0, %v2544
        %v2546 = vpop.f32.mrf.mxu0
        %v2547 = vadd.f32 0.0, %v2546
        %2548 = vmatmul.bf16.gmra.mxu0 %v2312
        %v2549 = vpop.f32.mrf.mxu0
        %v2550 = vadd.f32 0.0, %v2549
        %v2551 = vpop.f32.mrf.mxu0
        %v2552 = vadd.f32 0.0, %v2551
        %2553 = vdwg.mxu0
        %2554 = vmatpush.bf16.msra.mxu0 0
        %2555 = vmatpush.bf16.msra.mxu0 0
        %2556 = vmatpush.bf16.msra.mxu0 0
        %2557 = vmatpush.bf16.msra.mxu0 0
        %2558 = vmatpush.bf16.msra.mxu0 %v2283
        %2559 = vmatpush.bf16.msra.mxu0 %v2267
        %2560 = vmatpush.bf16.msra.mxu0 %v2251
        %2561 = vmatpush.bf16.msra.mxu0 %v2235
        %2562 = vmatmul.bf16.gmra.mxu0 %v2306
        %v2563 = vpop.f32.mrf.mxu0
        %v2564 = vadd.f32 0.0, %v2563
        %v2565 = vpop.f32.mrf.mxu0
        %v2566 = vadd.f32 0.0, %v2565
        %2567 = vmatmul.bf16.gmra.mxu0 %v2309
        %v2568 = vpop.f32.mrf.mxu0
        %v2569 = vadd.f32 0.0, %v2568
        %v2570 = vpop.f32.mrf.mxu0
        %v2571 = vadd.f32 0.0, %v2570
        %2572 = vmatmul.bf16.gmra.mxu0 %v2312
        %v2573 = vpop.f32.mrf.mxu0
        %v2574 = vadd.f32 0.0, %v2573
        %v2575 = vpop.f32.mrf.mxu0
        %v2576 = vadd.f32 0.0, %v2575
        %2577 = vdwg.mxu0
        %2578 = vmatpush.bf16.msra.mxu0 0
        %2579 = vmatpush.bf16.msra.mxu0 0
        %2580 = vmatpush.bf16.msra.mxu0 0
        %2581 = vmatpush.bf16.msra.mxu0 0
        %2582 = vmatpush.bf16.msra.mxu0 %v2284
        %2583 = vmatpush.bf16.msra.mxu0 %v2268
        %2584 = vmatpush.bf16.msra.mxu0 %v2252
        %2585 = vmatpush.bf16.msra.mxu0 %v2236
        %2586 = vmatmul.bf16.gmra.mxu0 %v2306
        %v2587 = vpop.f32.mrf.mxu0
        %v2588 = vadd.f32 0.0, %v2587
        %v2589 = vpop.f32.mrf.mxu0
        %v2590 = vadd.f32 0.0, %v2589
        %2591 = vmatmul.bf16.gmra.mxu0 %v2309
        %v2592 = vpop.f32.mrf.mxu0
        %v2593 = vadd.f32 0.0, %v2592
        %v2594 = vpop.f32.mrf.mxu0
        %v2595 = vadd.f32 0.0, %v2594
        %2596 = vmatmul.bf16.gmra.mxu0 %v2312
        %v2597 = vpop.f32.mrf.mxu0
        %v2598 = vadd.f32 0.0, %v2597
        %v2599 = vpop.f32.mrf.mxu0
        %v2600 = vadd.f32 0.0, %v2599
        %2601 = vdwg.mxu0
        %2602 = vmatpush.bf16.msra.mxu0 0
        %2603 = vmatpush.bf16.msra.mxu0 0
        %2604 = vmatpush.bf16.msra.mxu0 0
        %2605 = vmatpush.bf16.msra.mxu0 0
        %2606 = vmatpush.bf16.msra.mxu0 %v2285
        %2607 = vmatpush.bf16.msra.mxu0 %v2269
        %2608 = vmatpush.bf16.msra.mxu0 %v2253
        %2609 = vmatpush.bf16.msra.mxu0 %v2237
        %2610 = vmatmul.bf16.gmra.mxu0 %v2306
        %v2611 = vpop.f32.mrf.mxu0
        %v2612 = vadd.f32 0.0, %v2611
        %v2613 = vpop.f32.mrf.mxu0
        %v2614 = vadd.f32 0.0, %v2613
        %2615 = vmatmul.bf16.gmra.mxu0 %v2309
        %v2616 = vpop.f32.mrf.mxu0
        %v2617 = vadd.f32 0.0, %v2616
        %v2618 = vpop.f32.mrf.mxu0
        %v2619 = vadd.f32 0.0, %v2618
        %2620 = vmatmul.bf16.gmra.mxu0 %v2312
        %v2621 = vpop.f32.mrf.mxu0
        %v2622 = vadd.f32 0.0, %v2621
        %v2623 = vpop.f32.mrf.mxu0
        %v2624 = vadd.f32 0.0, %v2623
        %2625 = vdwg.mxu0
        %2626 = vmatpush.bf16.msra.mxu0 0
        %2627 = vmatpush.bf16.msra.mxu0 0
        %2628 = vmatpush.bf16.msra.mxu0 0
        %2629 = vmatpush.bf16.msra.mxu0 0
        %2630 = vmatpush.bf16.msra.mxu0 %v2286
        %2631 = vmatpush.bf16.msra.mxu0 %v2270
        %2632 = vmatpush.bf16.msra.mxu0 %v2254
        %2633 = vmatpush.bf16.msra.mxu0 %v2238
        %2634 = vmatmul.bf16.gmra.mxu0 %v2306
        %v2635 = vpop.f32.mrf.mxu0
        %v2636 = vadd.f32 0.0, %v2635
        %v2637 = vpop.f32.mrf.mxu0
        %v2638 = vadd.f32 0.0, %v2637
        %2639 = vmatmul.bf16.gmra.mxu0 %v2309
        %v2640 = vpop.f32.mrf.mxu0
        %v2641 = vadd.f32 0.0, %v2640
        %v2642 = vpop.f32.mrf.mxu0
        %v2643 = vadd.f32 0.0, %v2642
        %2644 = vmatmul.bf16.gmra.mxu0 %v2312
        %v2645 = vpop.f32.mrf.mxu0
        %v2646 = vadd.f32 0.0, %v2645
        %v2647 = vpop.f32.mrf.mxu0
        %v2648 = vadd.f32 0.0, %v2647
        %2649 = vdwg.mxu0
        %2650 = vmatpush.bf16.msra.mxu0 0
        %2651 = vmatpush.bf16.msra.mxu0 0
        %2652 = vmatpush.bf16.msra.mxu0 0
        %2653 = vmatpush.bf16.msra.mxu0 0
        %2654 = vmatpush.bf16.msra.mxu0 %v2287
        %2655 = vmatpush.bf16.msra.mxu0 %v2271
        %2656 = vmatpush.bf16.msra.mxu0 %v2255
        %2657 = vmatpush.bf16.msra.mxu0 %v2239
        %2658 = vmatmul.bf16.gmra.mxu0 %v2306
        %v2659 = vpop.f32.mrf.mxu0
        %v2660 = vadd.f32 0.0, %v2659
        %v2661 = vpop.f32.mrf.mxu0
        %v2662 = vadd.f32 0.0, %v2661
        %2663 = vmatmul.bf16.gmra.mxu0 %v2309
        %v2664 = vpop.f32.mrf.mxu0
        %v2665 = vadd.f32 0.0, %v2664
        %v2666 = vpop.f32.mrf.mxu0
        %v2667 = vadd.f32 0.0, %v2666
        %2668 = vmatmul.bf16.gmra.mxu0 %v2312
        %v2669 = vpop.f32.mrf.mxu0
        %v2670 = vadd.f32 0.0, %v2669
        %v2671 = vpop.f32.mrf.mxu0
        %v2672 = vadd.f32 0.0, %v2671
        %2673 = vdwg.mxu0
        %2674 = vmatpush.bf16.msra.mxu0 0
        %2675 = vmatpush.bf16.msra.mxu0 0
        %2676 = vmatpush.bf16.msra.mxu0 0
        %2677 = vmatpush.bf16.msra.mxu0 0
        %2678 = vmatpush.bf16.msra.mxu0 %v2288
        %2679 = vmatpush.bf16.msra.mxu0 %v2272
        %2680 = vmatpush.bf16.msra.mxu0 %v2256
        %2681 = vmatpush.bf16.msra.mxu0 %v2240
        %2682 = vmatmul.bf16.gmra.mxu0 %v2306
        %v2683 = vpop.f32.mrf.mxu0
        %v2684 = vadd.f32 0.0, %v2683
        %v2685 = vpop.f32.mrf.mxu0
        %v2686 = vadd.f32 0.0, %v2685
        %2687 = vmatmul.bf16.gmra.mxu0 %v2309
        %v2688 = vpop.f32.mrf.mxu0
        %v2689 = vadd.f32 0.0, %v2688
        %v2690 = vpop.f32.mrf.mxu0
        %v2691 = vadd.f32 0.0, %v2690
        %2692 = vmatmul.bf16.gmra.mxu0 %v2312
        %v2693 = vpop.f32.mrf.mxu0
        %v2694 = vadd.f32 0.0, %v2693
        %v2695 = vpop.f32.mrf.mxu0
        %v2696 = vadd.f32 0.0, %v2695
        %2697 = vdwg.mxu0
        %v2698 = vadd.f32 %v2123, %v2324
        %v2699 = vadd.f32 %v2124, %v2348
        %v2700 = vadd.f32 %v2125, %v2372
        %v2701 = vadd.f32 %v2126, %v2396
        %v2702 = vadd.f32 %v2127, %v2420
        %v2703 = vadd.f32 %v2128, %v2444
        %v2704 = vadd.f32 %v2129, %v2468
        %v2705 = vadd.f32 %v2130, %v2492
        %v2706 = vadd.f32 %v2131, %v2516
        %v2707 = vadd.f32 %v2132, %v2540
        %v2708 = vadd.f32 %v2133, %v2564
        %v2709 = vadd.f32 %v2134, %v2588
        %v2710 = vadd.f32 %v2135, %v2612
        %v2711 = vadd.f32 %v2136, %v2636
        %v2712 = vadd.f32 %v2137, %v2660
        %v2713 = vadd.f32 %v2138, %v2684
        %v2714 = vadd.f32 %v2139, %v2326
        %v2715 = vadd.f32 %v2140, %v2350
        %v2716 = vadd.f32 %v2141, %v2374
        %v2717 = vadd.f32 %v2142, %v2398
        %v2718 = vadd.f32 %v2143, %v2422
        %v2719 = vadd.f32 %v2144, %v2446
        %v2720 = vadd.f32 %v2145, %v2470
        %v2721 = vadd.f32 %v2146, %v2494
        %v2722 = vadd.f32 %v2147, %v2518
        %v2723 = vadd.f32 %v2148, %v2542
        %v2724 = vadd.f32 %v2149, %v2566
        %v2725 = vadd.f32 %v2150, %v2590
        %v2726 = vadd.f32 %v2151, %v2614
        %v2727 = vadd.f32 %v2152, %v2638
        %v2728 = vadd.f32 %v2153, %v2662
        %v2729 = vadd.f32 %v2154, %v2686
        %v2730 = vadd.f32 %v2155, %v2329
        %v2731 = vadd.f32 %v2156, %v2353
        %v2732 = vadd.f32 %v2157, %v2377
        %v2733 = vadd.f32 %v2158, %v2401
        %v2734 = vadd.f32 %v2159, %v2425
        %v2735 = vadd.f32 %v2160, %v2449
        %v2736 = vadd.f32 %v2161, %v2473
        %v2737 = vadd.f32 %v2162, %v2497
        %v2738 = vadd.f32 %v2163, %v2521
        %v2739 = vadd.f32 %v2164, %v2545
        %v2740 = vadd.f32 %v2165, %v2569
        %v2741 = vadd.f32 %v2166, %v2593
        %v2742 = vadd.f32 %v2167, %v2617
        %v2743 = vadd.f32 %v2168, %v2641
        %v2744 = vadd.f32 %v2169, %v2665
        %v2745 = vadd.f32 %v2170, %v2689
        %v2746 = vadd.f32 %v2171, %v2331
        %v2747 = vadd.f32 %v2172, %v2355
        %v2748 = vadd.f32 %v2173, %v2379
        %v2749 = vadd.f32 %v2174, %v2403
        %v2750 = vadd.f32 %v2175, %v2427
        %v2751 = vadd.f32 %v2176, %v2451
        %v2752 = vadd.f32 %v2177, %v2475
        %v2753 = vadd.f32 %v2178, %v2499
        %v2754 = vadd.f32 %v2179, %v2523
        %v2755 = vadd.f32 %v2180, %v2547
        %v2756 = vadd.f32 %v2181, %v2571
        %v2757 = vadd.f32 %v2182, %v2595
        %v2758 = vadd.f32 %v2183, %v2619
        %v2759 = vadd.f32 %v2184, %v2643
        %v2760 = vadd.f32 %v2185, %v2667
        %v2761 = vadd.f32 %v2186, %v2691
        %v2762 = vadd.f32 %v2187, %v2334
        %v2763 = vadd.f32 %v2188, %v2358
        %v2764 = vadd.f32 %v2189, %v2382
        %v2765 = vadd.f32 %v2190, %v2406
        %v2766 = vadd.f32 %v2191, %v2430
        %v2767 = vadd.f32 %v2192, %v2454
        %v2768 = vadd.f32 %v2193, %v2478
        %v2769 = vadd.f32 %v2194, %v2502
        %v2770 = vadd.f32 %v2195, %v2526
        %v2771 = vadd.f32 %v2196, %v2550
        %v2772 = vadd.f32 %v2197, %v2574
        %v2773 = vadd.f32 %v2198, %v2598
        %v2774 = vadd.f32 %v2199, %v2622
        %v2775 = vadd.f32 %v2200, %v2646
        %v2776 = vadd.f32 %v2201, %v2670
        %v2777 = vadd.f32 %v2202, %v2694
        %v2778 = vadd.f32 %v2203, %v2336
        %v2779 = vadd.f32 %v2204, %v2360
        %v2780 = vadd.f32 %v2205, %v2384
        %v2781 = vadd.f32 %v2206, %v2408
        %v2782 = vadd.f32 %v2207, %v2432
        %v2783 = vadd.f32 %v2208, %v2456
        %v2784 = vadd.f32 %v2209, %v2480
        %v2785 = vadd.f32 %v2210, %v2504
        %v2786 = vadd.f32 %v2211, %v2528
        %v2787 = vadd.f32 %v2212, %v2552
        %v2788 = vadd.f32 %v2213, %v2576
        %v2789 = vadd.f32 %v2214, %v2600
        %v2790 = vadd.f32 %v2215, %v2624
        %v2791 = vadd.f32 %v2216, %v2648
        %v2792 = vadd.f32 %v2217, %v2672
        %v2793 = vadd.f32 %v2218, %v2696
        %v2794 = vmul.f32 %v2698, 0.2
        %v2795 = vmul.f32 %v2699, 0.2
        %v2796 = vmul.f32 %v2700, 0.2
        %v2797 = vmul.f32 %v2701, 0.2
        %v2798 = vmul.f32 %v2702, 0.2
        %v2799 = vmul.f32 %v2703, 0.2
        %v2800 = vmul.f32 %v2704, 0.2
        %v2801 = vmul.f32 %v2705, 0.2
        %v2802 = vmul.f32 %v2706, 0.2
        %v2803 = vmul.f32 %v2707, 0.2
        %v2804 = vmul.f32 %v2708, 0.2
        %v2805 = vmul.f32 %v2709, 0.2
        %v2806 = vmul.f32 %v2710, 0.2
        %v2807 = vmul.f32 %v2711, 0.2
        %v2808 = vmul.f32 %v2712, 0.2
        %v2809 = vmul.f32 %v2713, 0.2
        %v2810 = vmul.f32 %v2714, 0.2
        %v2811 = vmul.f32 %v2715, 0.2
        %v2812 = vmul.f32 %v2716, 0.2
        %v2813 = vmul.f32 %v2717, 0.2
        %v2814 = vmul.f32 %v2718, 0.2
        %v2815 = vmul.f32 %v2719, 0.2
        %v2816 = vmul.f32 %v2720, 0.2
        %v2817 = vmul.f32 %v2721, 0.2
        %v2818 = vmul.f32 %v2722, 0.2
        %v2819 = vmul.f32 %v2723, 0.2
        %v2820 = vmul.f32 %v2724, 0.2
        %v2821 = vmul.f32 %v2725, 0.2
        %v2822 = vmul.f32 %v2726, 0.2
        %v2823 = vmul.f32 %v2727, 0.2
        %v2824 = vmul.f32 %v2728, 0.2
        %v2825 = vmul.f32 %v2729, 0.2
        %v2826 = vmul.f32 %v2730, 0.2
        %v2827 = vmul.f32 %v2731, 0.2
        %v2828 = vmul.f32 %v2732, 0.2
        %v2829 = vmul.f32 %v2733, 0.2
        %v2830 = vmul.f32 %v2734, 0.2
        %v2831 = vmul.f32 %v2735, 0.2
        %v2832 = vmul.f32 %v2736, 0.2
        %v2833 = vmul.f32 %v2737, 0.2
        %v2834 = vmul.f32 %v2738, 0.2
        %v2835 = vmul.f32 %v2739, 0.2
        %v2836 = vmul.f32 %v2740, 0.2
        %v2837 = vmul.f32 %v2741, 0.2
        %v2838 = vmul.f32 %v2742, 0.2
        %v2839 = vmul.f32 %v2743, 0.2
        %v2840 = vmul.f32 %v2744, 0.2
        %v2841 = vmul.f32 %v2745, 0.2
        %v2842 = vmul.f32 %v2746, 0.2
        %v2843 = vmul.f32 %v2747, 0.2
        %v2844 = vmul.f32 %v2748, 0.2
        %v2845 = vmul.f32 %v2749, 0.2
        %v2846 = vmul.f32 %v2750, 0.2
        %v2847 = vmul.f32 %v2751, 0.2
        %v2848 = vmul.f32 %v2752, 0.2
        %v2849 = vmul.f32 %v2753, 0.2
        %v2850 = vmul.f32 %v2754, 0.2
        %v2851 = vmul.f32 %v2755, 0.2
        %v2852 = vmul.f32 %v2756, 0.2
        %v2853 = vmul.f32 %v2757, 0.2
        %v2854 = vmul.f32 %v2758, 0.2
        %v2855 = vmul.f32 %v2759, 0.2
        %v2856 = vmul.f32 %v2760, 0.2
        %v2857 = vmul.f32 %v2761, 0.2
        %v2858 = vmul.f32 %v2762, 0.2
        %v2859 = vmul.f32 %v2763, 0.2
        %v2860 = vmul.f32 %v2764, 0.2
        %v2861 = vmul.f32 %v2765, 0.2
        %v2862 = vmul.f32 %v2766, 0.2
        %v2863 = vmul.f32 %v2767, 0.2
        %v2864 = vmul.f32 %v2768, 0.2
        %v2865 = vmul.f32 %v2769, 0.2
        %v2866 = vmul.f32 %v2770, 0.2
        %v2867 = vmul.f32 %v2771, 0.2
        %v2868 = vmul.f32 %v2772, 0.2
        %v2869 = vmul.f32 %v2773, 0.2
        %v2870 = vmul.f32 %v2774, 0.2
        %v2871 = vmul.f32 %v2775, 0.2
        %v2872 = vmul.f32 %v2776, 0.2
        %v2873 = vmul.f32 %v2777, 0.2
        %v2874 = vmul.f32 %v2778, 0.2
        %v2875 = vmul.f32 %v2779, 0.2
        %v2876 = vmul.f32 %v2780, 0.2
        %v2877 = vmul.f32 %v2781, 0.2
        %v2878 = vmul.f32 %v2782, 0.2
        %v2879 = vmul.f32 %v2783, 0.2
        %v2880 = vmul.f32 %v2784, 0.2
        %v2881 = vmul.f32 %v2785, 0.2
        %v2882 = vmul.f32 %v2786, 0.2
        %v2883 = vmul.f32 %v2787, 0.2
        %v2884 = vmul.f32 %v2788, 0.2
        %v2885 = vmul.f32 %v2789, 0.2
        %v2886 = vmul.f32 %v2790, 0.2
        %v2887 = vmul.f32 %v2791, 0.2
        %v2888 = vmul.f32 %v2792, 0.2
        %v2889 = vmul.f32 %v2793, 0.2
        %v2890 = vmax.f32 %v2698, %v2794
        %v2891 = vmax.f32 %v2699, %v2795
        %v2892 = vmax.f32 %v2700, %v2796
        %v2893 = vmax.f32 %v2701, %v2797
        %v2894 = vmax.f32 %v2702, %v2798
        %v2895 = vmax.f32 %v2703, %v2799
        %v2896 = vmax.f32 %v2704, %v2800
        %v2897 = vmax.f32 %v2705, %v2801
        %v2898 = vmax.f32 %v2706, %v2802
        %v2899 = vmax.f32 %v2707, %v2803
        %v2900 = vmax.f32 %v2708, %v2804
        %v2901 = vmax.f32 %v2709, %v2805
        %v2902 = vmax.f32 %v2710, %v2806
        %v2903 = vmax.f32 %v2711, %v2807
        %v2904 = vmax.f32 %v2712, %v2808
        %v2905 = vmax.f32 %v2713, %v2809
        %v2906 = vmax.f32 %v2714, %v2810
        %v2907 = vmax.f32 %v2715, %v2811
        %v2908 = vmax.f32 %v2716, %v2812
        %v2909 = vmax.f32 %v2717, %v2813
        %v2910 = vmax.f32 %v2718, %v2814
        %v2911 = vmax.f32 %v2719, %v2815
        %v2912 = vmax.f32 %v2720, %v2816
        %v2913 = vmax.f32 %v2721, %v2817
        %v2914 = vmax.f32 %v2722, %v2818
        %v2915 = vmax.f32 %v2723, %v2819
        %v2916 = vmax.f32 %v2724, %v2820
        %v2917 = vmax.f32 %v2725, %v2821
        %v2918 = vmax.f32 %v2726, %v2822
        %v2919 = vmax.f32 %v2727, %v2823
        %v2920 = vmax.f32 %v2728, %v2824
        %v2921 = vmax.f32 %v2729, %v2825
        %v2922 = vmax.f32 %v2730, %v2826
        %v2923 = vmax.f32 %v2731, %v2827
        %v2924 = vmax.f32 %v2732, %v2828
        %v2925 = vmax.f32 %v2733, %v2829
        %v2926 = vmax.f32 %v2734, %v2830
        %v2927 = vmax.f32 %v2735, %v2831
        %v2928 = vmax.f32 %v2736, %v2832
        %v2929 = vmax.f32 %v2737, %v2833
        %v2930 = vmax.f32 %v2738, %v2834
        %v2931 = vmax.f32 %v2739, %v2835
        %v2932 = vmax.f32 %v2740, %v2836
        %v2933 = vmax.f32 %v2741, %v2837
        %v2934 = vmax.f32 %v2742, %v2838
        %v2935 = vmax.f32 %v2743, %v2839
        %v2936 = vmax.f32 %v2744, %v2840
        %v2937 = vmax.f32 %v2745, %v2841
        %v2938 = vmax.f32 %v2746, %v2842
        %v2939 = vmax.f32 %v2747, %v2843
        %v2940 = vmax.f32 %v2748, %v2844
        %v2941 = vmax.f32 %v2749, %v2845
        %v2942 = vmax.f32 %v2750, %v2846
        %v2943 = vmax.f32 %v2751, %v2847
        %v2944 = vmax.f32 %v2752, %v2848
        %v2945 = vmax.f32 %v2753, %v2849
        %v2946 = vmax.f32 %v2754, %v2850
        %v2947 = vmax.f32 %v2755, %v2851
        %v2948 = vmax.f32 %v2756, %v2852
        %v2949 = vmax.f32 %v2757, %v2853
        %v2950 = vmax.f32 %v2758, %v2854
        %v2951 = vmax.f32 %v2759, %v2855
        %v2952 = vmax.f32 %v2760, %v2856
        %v2953 = vmax.f32 %v2761, %v2857
        %v2954 = vmax.f32 %v2762, %v2858
        %v2955 = vmax.f32 %v2763, %v2859
        %v2956 = vmax.f32 %v2764, %v2860
        %v2957 = vmax.f32 %v2765, %v2861
        %v2958 = vmax.f32 %v2766, %v2862
        %v2959 = vmax.f32 %v2767, %v2863
        %v2960 = vmax.f32 %v2768, %v2864
        %v2961 = vmax.f32 %v2769, %v2865
        %v2962 = vmax.f32 %v2770, %v2866
        %v2963 = vmax.f32 %v2771, %v2867
        %v2964 = vmax.f32 %v2772, %v2868
        %v2965 = vmax.f32 %v2773, %v2869
        %v2966 = vmax.f32 %v2774, %v2870
        %v2967 = vmax.f32 %v2775, %v2871
        %v2968 = vmax.f32 %v2776, %v2872
        %v2969 = vmax.f32 %v2777, %v2873
        %v2970 = vmax.f32 %v2778, %v2874
        %v2971 = vmax.f32 %v2779, %v2875
        %v2972 = vmax.f32 %v2780, %v2876
        %v2973 = vmax.f32 %v2781, %v2877
        %v2974 = vmax.f32 %v2782, %v2878
        %v2975 = vmax.f32 %v2783, %v2879
        %v2976 = vmax.f32 %v2784, %v2880
        %v2977 = vmax.f32 %v2785, %v2881
        %v2978 = vmax.f32 %v2786, %v2882
        %v2979 = vmax.f32 %v2787, %v2883
        %v2980 = vmax.f32 %v2788, %v2884
        %v2981 = vmax.f32 %v2789, %v2885
        %v2982 = vmax.f32 %v2790, %v2886
        %v2983 = vmax.f32 %v2791, %v2887
        %v2984 = vmax.f32 %v2792, %v2888
        %v2985 = vmax.f32 %v2793, %v2889
        %v2986 = vunpack.c.l.bf16 %v1691
        %v2987 = vunpack.c.h.bf16 %v1691
        %v2988 = vunpack.c.l.bf16 %v1692
        %v2989 = vunpack.c.h.bf16 %v1692
        %v2990 = vunpack.c.l.bf16 %v1693
        %v2991 = vunpack.c.h.bf16 %v1693
        %v2992 = vunpack.c.l.bf16 %v1694
        %v2993 = vunpack.c.h.bf16 %v1694
        %v2994 = vunpack.c.l.bf16 %v1695
        %v2995 = vunpack.c.h.bf16 %v1695
        %v2996 = vunpack.c.l.bf16 %v1696
        %v2997 = vunpack.c.h.bf16 %v1696
        %v2998 = vunpack.c.l.bf16 %v1697
        %v2999 = vunpack.c.h.bf16 %v1697
        %v3000 = vunpack.c.l.bf16 %v1698
        %v3001 = vunpack.c.h.bf16 %v1698
        %v3002 = vunpack.c.l.bf16 %v1699
        %v3003 = vunpack.c.h.bf16 %v1699
        %v3004 = vunpack.c.l.bf16 %v1700
        %v3005 = vunpack.c.h.bf16 %v1700
        %v3006 = vunpack.c.l.bf16 %v1701
        %v3007 = vunpack.c.h.bf16 %v1701
        %v3008 = vunpack.c.l.bf16 %v1702
        %v3009 = vunpack.c.h.bf16 %v1702
        %v3010 = vunpack.c.l.bf16 %v1703
        %v3011 = vunpack.c.h.bf16 %v1703
        %v3012 = vunpack.c.l.bf16 %v1704
        %v3013 = vunpack.c.h.bf16 %v1704
        %v3014 = vunpack.c.l.bf16 %v1705
        %v3015 = vunpack.c.h.bf16 %v1705
        %v3016 = vunpack.c.l.bf16 %v1706
        %v3017 = vunpack.c.h.bf16 %v1706
        %v3018 = vunpack.c.l.bf16 %v1707
        %v3019 = vunpack.c.h.bf16 %v1707
        %v3020 = vunpack.c.l.bf16 %v1708
        %v3021 = vunpack.c.h.bf16 %v1708
        %v3022 = vunpack.c.l.bf16 %v1709
        %v3023 = vunpack.c.h.bf16 %v1709
        %v3024 = vunpack.c.l.bf16 %v1710
        %v3025 = vunpack.c.h.bf16 %v1710
        %v3026 = vunpack.c.l.bf16 %v1711
        %v3027 = vunpack.c.h.bf16 %v1711
        %v3028 = vunpack.c.l.bf16 %v1712
        %v3029 = vunpack.c.h.bf16 %v1712
        %v3030 = vunpack.c.l.bf16 %v1713
        %v3031 = vunpack.c.h.bf16 %v1713
        %v3032 = vunpack.c.l.bf16 %v1714
        %v3033 = vunpack.c.h.bf16 %v1714
        %v3034 = vunpack.c.l.bf16 %v1715
        %v3035 = vunpack.c.h.bf16 %v1715
        %v3036 = vunpack.c.l.bf16 %v1716
        %v3037 = vunpack.c.h.bf16 %v1716
        %v3038 = vunpack.c.l.bf16 %v1717
        %v3039 = vunpack.c.h.bf16 %v1717
        %v3040 = vunpack.c.l.bf16 %v1718
        %v3041 = vunpack.c.h.bf16 %v1718
        %v3042 = vunpack.c.l.bf16 %v1719
        %v3043 = vunpack.c.h.bf16 %v1719
        %v3044 = vunpack.c.l.bf16 %v1720
        %v3045 = vunpack.c.h.bf16 %v1720
        %v3046 = vunpack.c.l.bf16 %v1721
        %v3047 = vunpack.c.h.bf16 %v1721
        %v3048 = vunpack.c.l.bf16 %v1722
        %v3049 = vunpack.c.h.bf16 %v1722
        %v3050 = vld [vmem:[%s4] sm:$0xf]
        %v3051 = vld [vmem:[%s4 + $0x4] sm:$0xf]
        %v3052 = vld [vmem:[%s4 + $0x8] sm:$0xf]
        %v3053 = vld [vmem:[%s4 + $0xc] sm:$0xf]
        %v3054 = vpack.c.bf16 %v2906, %v2890
        %v3055 = vpack.c.bf16 %v2907, %v2891
        %v3056 = vpack.c.bf16 %v2908, %v2892
        %v3057 = vpack.c.bf16 %v2909, %v2893
        %v3058 = vpack.c.bf16 %v2910, %v2894
        %v3059 = vpack.c.bf16 %v2911, %v2895
        %v3060 = vpack.c.bf16 %v2912, %v2896
        %v3061 = vpack.c.bf16 %v2913, %v2897
        %v3062 = vpack.c.bf16 %v2914, %v2898
        %v3063 = vpack.c.bf16 %v2915, %v2899
        %v3064 = vpack.c.bf16 %v2916, %v2900
        %v3065 = vpack.c.bf16 %v2917, %v2901
        %v3066 = vpack.c.bf16 %v2918, %v2902
        %v3067 = vpack.c.bf16 %v2919, %v2903
        %v3068 = vpack.c.bf16 %v2920, %v2904
        %v3069 = vpack.c.bf16 %v2921, %v2905
        %v3070 = vpack.c.bf16 %v2938, %v2922
        %v3071 = vpack.c.bf16 %v2939, %v2923
        %v3072 = vpack.c.bf16 %v2940, %v2924
        %v3073 = vpack.c.bf16 %v2941, %v2925
        %v3074 = vpack.c.bf16 %v2942, %v2926
        %v3075 = vpack.c.bf16 %v2943, %v2927
        %v3076 = vpack.c.bf16 %v2944, %v2928
        %v3077 = vpack.c.bf16 %v2945, %v2929
        %v3078 = vpack.c.bf16 %v2946, %v2930
        %v3079 = vpack.c.bf16 %v2947, %v2931
        %v3080 = vpack.c.bf16 %v2948, %v2932
        %v3081 = vpack.c.bf16 %v2949, %v2933
        %v3082 = vpack.c.bf16 %v2950, %v2934
        %v3083 = vpack.c.bf16 %v2951, %v2935
        %v3084 = vpack.c.bf16 %v2952, %v2936
        %v3085 = vpack.c.bf16 %v2953, %v2937
        %v3086 = vpack.c.bf16 %v2970, %v2954
        %v3087 = vpack.c.bf16 %v2971, %v2955
        %v3088 = vpack.c.bf16 %v2972, %v2956
        %v3089 = vpack.c.bf16 %v2973, %v2957
        %v3090 = vpack.c.bf16 %v2974, %v2958
        %v3091 = vpack.c.bf16 %v2975, %v2959
        %v3092 = vpack.c.bf16 %v2976, %v2960
        %v3093 = vpack.c.bf16 %v2977, %v2961
        %v3094 = vpack.c.bf16 %v2978, %v2962
        %v3095 = vpack.c.bf16 %v2979, %v2963
        %v3096 = vpack.c.bf16 %v2980, %v2964
        %v3097 = vpack.c.bf16 %v2981, %v2965
        %v3098 = vpack.c.bf16 %v2982, %v2966
        %v3099 = vpack.c.bf16 %v2983, %v2967
        %v3100 = vpack.c.bf16 %v2984, %v2968
        %v3101 = vpack.c.bf16 %v2985, %v2969
        %v3106 = vunpack.c.l.b16 %v3050
        %v3107 = vunpack.c.l.b16 %v3051
        %v3108 = vunpack.c.l.b16 %v3052
        %v3109 = vunpack.c.l.b16 %v3053
        %v3110 = vpack.c.b16 %v3107, %v3106
        %v3111 = vpack.c.b16 %v3109, %v3108
        %vm3112 = vcmask 392192
        %v3114 = vsel %vm3112, %v3110, 0
        %v3117 = vsel %vm3112, %v3111, 0
        %3119 = vmatpush.bf16.msra.mxu0 0
        %3120 = vmatpush.bf16.msra.mxu0 0
        %3121 = vmatpush.bf16.msra.mxu0 0
        %3122 = vmatpush.bf16.msra.mxu0 0
        %3123 = vmatpush.bf16.msra.mxu0 0
        %3124 = vmatpush.bf16.msra.mxu0 %v3086
        %3125 = vmatpush.bf16.msra.mxu0 %v3070
        %3126 = vmatpush.bf16.msra.mxu0 %v3054
        %3127 = vmatmul.bf16.gmra.mxu0 %v3114
        %v3128 = vpop.f32.mrf.mxu0
        %v3129 = vadd.f32 0.0, %v3128
        %v3130 = vpop.f32.mrf.mxu0
        %v3131 = vadd.f32 0.0, %v3130
        %3132 = vmatmul.bf16.gmra.mxu0 %v3117
        %v3133 = vpop.f32.mrf.mxu0
        %v3134 = vadd.f32 0.0, %v3133
        %v3135 = vpop.f32.mrf.mxu0
        %v3136 = vadd.f32 0.0, %v3135
        %3137 = vdwg.mxu0
        %3138 = vmatpush.bf16.msra.mxu0 0
        %3139 = vmatpush.bf16.msra.mxu0 0
        %3140 = vmatpush.bf16.msra.mxu0 0
        %3141 = vmatpush.bf16.msra.mxu0 0
        %3142 = vmatpush.bf16.msra.mxu0 0
        %3143 = vmatpush.bf16.msra.mxu0 %v3087
        %3144 = vmatpush.bf16.msra.mxu0 %v3071
        %3145 = vmatpush.bf16.msra.mxu0 %v3055
        %3146 = vmatmul.bf16.gmra.mxu0 %v3114
        %v3147 = vpop.f32.mrf.mxu0
        %v3148 = vadd.f32 0.0, %v3147
        %v3149 = vpop.f32.mrf.mxu0
        %v3150 = vadd.f32 0.0, %v3149
        %3151 = vmatmul.bf16.gmra.mxu0 %v3117
        %v3152 = vpop.f32.mrf.mxu0
        %v3153 = vadd.f32 0.0, %v3152
        %v3154 = vpop.f32.mrf.mxu0
        %v3155 = vadd.f32 0.0, %v3154
        %3156 = vdwg.mxu0
        %3157 = vmatpush.bf16.msra.mxu0 0
        %3158 = vmatpush.bf16.msra.mxu0 0
        %3159 = vmatpush.bf16.msra.mxu0 0
        %3160 = vmatpush.bf16.msra.mxu0 0
        %3161 = vmatpush.bf16.msra.mxu0 0
        %3162 = vmatpush.bf16.msra.mxu0 %v3088
        %3163 = vmatpush.bf16.msra.mxu0 %v3072
        %3164 = vmatpush.bf16.msra.mxu0 %v3056
        %3165 = vmatmul.bf16.gmra.mxu0 %v3114
        %v3166 = vpop.f32.mrf.mxu0
        %v3167 = vadd.f32 0.0, %v3166
        %v3168 = vpop.f32.mrf.mxu0
        %v3169 = vadd.f32 0.0, %v3168
        %3170 = vmatmul.bf16.gmra.mxu0 %v3117
        %v3171 = vpop.f32.mrf.mxu0
        %v3172 = vadd.f32 0.0, %v3171
        %v3173 = vpop.f32.mrf.mxu0
        %v3174 = vadd.f32 0.0, %v3173
        %3175 = vdwg.mxu0
        %3176 = vmatpush.bf16.msra.mxu0 0
        %3177 = vmatpush.bf16.msra.mxu0 0
        %3178 = vmatpush.bf16.msra.mxu0 0
        %3179 = vmatpush.bf16.msra.mxu0 0
        %3180 = vmatpush.bf16.msra.mxu0 0
        %3181 = vmatpush.bf16.msra.mxu0 %v3089
        %3182 = vmatpush.bf16.msra.mxu0 %v3073
        %3183 = vmatpush.bf16.msra.mxu0 %v3057
        %3184 = vmatmul.bf16.gmra.mxu0 %v3114
        %v3185 = vpop.f32.mrf.mxu0
        %v3186 = vadd.f32 0.0, %v3185
        %v3187 = vpop.f32.mrf.mxu0
        %v3188 = vadd.f32 0.0, %v3187
        %3189 = vmatmul.bf16.gmra.mxu0 %v3117
        %v3190 = vpop.f32.mrf.mxu0
        %v3191 = vadd.f32 0.0, %v3190
        %v3192 = vpop.f32.mrf.mxu0
        %v3193 = vadd.f32 0.0, %v3192
        %3194 = vdwg.mxu0
        %3195 = vmatpush.bf16.msra.mxu0 0
        %3196 = vmatpush.bf16.msra.mxu0 0
        %3197 = vmatpush.bf16.msra.mxu0 0
        %3198 = vmatpush.bf16.msra.mxu0 0
        %3199 = vmatpush.bf16.msra.mxu0 0
        %3200 = vmatpush.bf16.msra.mxu0 %v3090
        %3201 = vmatpush.bf16.msra.mxu0 %v3074
        %3202 = vmatpush.bf16.msra.mxu0 %v3058
        %3203 = vmatmul.bf16.gmra.mxu0 %v3114
        %v3204 = vpop.f32.mrf.mxu0
        %v3205 = vadd.f32 0.0, %v3204
        %v3206 = vpop.f32.mrf.mxu0
        %v3207 = vadd.f32 0.0, %v3206
        %3208 = vmatmul.bf16.gmra.mxu0 %v3117
        %v3209 = vpop.f32.mrf.mxu0
        %v3210 = vadd.f32 0.0, %v3209
        %v3211 = vpop.f32.mrf.mxu0
        %v3212 = vadd.f32 0.0, %v3211
        %3213 = vdwg.mxu0
        %3214 = vmatpush.bf16.msra.mxu0 0
        %3215 = vmatpush.bf16.msra.mxu0 0
        %3216 = vmatpush.bf16.msra.mxu0 0
        %3217 = vmatpush.bf16.msra.mxu0 0
        %3218 = vmatpush.bf16.msra.mxu0 0
        %3219 = vmatpush.bf16.msra.mxu0 %v3091
        %3220 = vmatpush.bf16.msra.mxu0 %v3075
        %3221 = vmatpush.bf16.msra.mxu0 %v3059
        %3222 = vmatmul.bf16.gmra.mxu0 %v3114
        %v3223 = vpop.f32.mrf.mxu0
        %v3224 = vadd.f32 0.0, %v3223
        %v3225 = vpop.f32.mrf.mxu0
        %v3226 = vadd.f32 0.0, %v3225
        %3227 = vmatmul.bf16.gmra.mxu0 %v3117
        %v3228 = vpop.f32.mrf.mxu0
        %v3229 = vadd.f32 0.0, %v3228
        %v3230 = vpop.f32.mrf.mxu0
        %v3231 = vadd.f32 0.0, %v3230
        %3232 = vdwg.mxu0
        %3233 = vmatpush.bf16.msra.mxu0 0
        %3234 = vmatpush.bf16.msra.mxu0 0
        %3235 = vmatpush.bf16.msra.mxu0 0
        %3236 = vmatpush.bf16.msra.mxu0 0
        %3237 = vmatpush.bf16.msra.mxu0 0
        %3238 = vmatpush.bf16.msra.mxu0 %v3092
        %3239 = vmatpush.bf16.msra.mxu0 %v3076
        %3240 = vmatpush.bf16.msra.mxu0 %v3060
        %3241 = vmatmul.bf16.gmra.mxu0 %v3114
        %v3242 = vpop.f32.mrf.mxu0
        %v3243 = vadd.f32 0.0, %v3242
        %v3244 = vpop.f32.mrf.mxu0
        %v3245 = vadd.f32 0.0, %v3244
        %3246 = vmatmul.bf16.gmra.mxu0 %v3117
        %v3247 = vpop.f32.mrf.mxu0
        %v3248 = vadd.f32 0.0, %v3247
        %v3249 = vpop.f32.mrf.mxu0
        %v3250 = vadd.f32 0.0, %v3249
        %3251 = vdwg.mxu0
        %3252 = vmatpush.bf16.msra.mxu0 0
        %3253 = vmatpush.bf16.msra.mxu0 0
        %3254 = vmatpush.bf16.msra.mxu0 0
        %3255 = vmatpush.bf16.msra.mxu0 0
        %3256 = vmatpush.bf16.msra.mxu0 0
        %3257 = vmatpush.bf16.msra.mxu0 %v3093
        %3258 = vmatpush.bf16.msra.mxu0 %v3077
        %3259 = vmatpush.bf16.msra.mxu0 %v3061
        %3260 = vmatmul.bf16.gmra.mxu0 %v3114
        %v3261 = vpop.f32.mrf.mxu0
        %v3262 = vadd.f32 0.0, %v3261
        %v3263 = vpop.f32.mrf.mxu0
        %v3264 = vadd.f32 0.0, %v3263
        %3265 = vmatmul.bf16.gmra.mxu0 %v3117
        %v3266 = vpop.f32.mrf.mxu0
        %v3267 = vadd.f32 0.0, %v3266
        %v3268 = vpop.f32.mrf.mxu0
        %v3269 = vadd.f32 0.0, %v3268
        %3270 = vdwg.mxu0
        %3271 = vmatpush.bf16.msra.mxu0 0
        %3272 = vmatpush.bf16.msra.mxu0 0
        %3273 = vmatpush.bf16.msra.mxu0 0
        %3274 = vmatpush.bf16.msra.mxu0 0
        %3275 = vmatpush.bf16.msra.mxu0 0
        %3276 = vmatpush.bf16.msra.mxu0 %v3094
        %3277 = vmatpush.bf16.msra.mxu0 %v3078
        %3278 = vmatpush.bf16.msra.mxu0 %v3062
        %3279 = vmatmul.bf16.gmra.mxu0 %v3114
        %v3280 = vpop.f32.mrf.mxu0
        %v3281 = vadd.f32 0.0, %v3280
        %v3282 = vpop.f32.mrf.mxu0
        %v3283 = vadd.f32 0.0, %v3282
        %3284 = vmatmul.bf16.gmra.mxu0 %v3117
        %v3285 = vpop.f32.mrf.mxu0
        %v3286 = vadd.f32 0.0, %v3285
        %v3287 = vpop.f32.mrf.mxu0
        %v3288 = vadd.f32 0.0, %v3287
        %3289 = vdwg.mxu0
        %3290 = vmatpush.bf16.msra.mxu0 0
        %3291 = vmatpush.bf16.msra.mxu0 0
        %3292 = vmatpush.bf16.msra.mxu0 0
        %3293 = vmatpush.bf16.msra.mxu0 0
        %3294 = vmatpush.bf16.msra.mxu0 0
        %3295 = vmatpush.bf16.msra.mxu0 %v3095
        %3296 = vmatpush.bf16.msra.mxu0 %v3079
        %3297 = vmatpush.bf16.msra.mxu0 %v3063
        %3298 = vmatmul.bf16.gmra.mxu0 %v3114
        %v3299 = vpop.f32.mrf.mxu0
        %v3300 = vadd.f32 0.0, %v3299
        %v3301 = vpop.f32.mrf.mxu0
        %v3302 = vadd.f32 0.0, %v3301
        %3303 = vmatmul.bf16.gmra.mxu0 %v3117
        %v3304 = vpop.f32.mrf.mxu0
        %v3305 = vadd.f32 0.0, %v3304
        %v3306 = vpop.f32.mrf.mxu0
        %v3307 = vadd.f32 0.0, %v3306
        %3308 = vdwg.mxu0
        %3309 = vmatpush.bf16.msra.mxu0 0
        %3310 = vmatpush.bf16.msra.mxu0 0
        %3311 = vmatpush.bf16.msra.mxu0 0
        %3312 = vmatpush.bf16.msra.mxu0 0
        %3313 = vmatpush.bf16.msra.mxu0 0
        %3314 = vmatpush.bf16.msra.mxu0 %v3096
        %3315 = vmatpush.bf16.msra.mxu0 %v3080
        %3316 = vmatpush.bf16.msra.mxu0 %v3064
        %3317 = vmatmul.bf16.gmra.mxu0 %v3114
        %v3318 = vpop.f32.mrf.mxu0
        %v3319 = vadd.f32 0.0, %v3318
        %v3320 = vpop.f32.mrf.mxu0
        %v3321 = vadd.f32 0.0, %v3320
        %3322 = vmatmul.bf16.gmra.mxu0 %v3117
        %v3323 = vpop.f32.mrf.mxu0
        %v3324 = vadd.f32 0.0, %v3323
        %v3325 = vpop.f32.mrf.mxu0
        %v3326 = vadd.f32 0.0, %v3325
        %3327 = vdwg.mxu0
        %3328 = vmatpush.bf16.msra.mxu0 0
        %3329 = vmatpush.bf16.msra.mxu0 0
        %3330 = vmatpush.bf16.msra.mxu0 0
        %3331 = vmatpush.bf16.msra.mxu0 0
        %3332 = vmatpush.bf16.msra.mxu0 0
        %3333 = vmatpush.bf16.msra.mxu0 %v3097
        %3334 = vmatpush.bf16.msra.mxu0 %v3081
        %3335 = vmatpush.bf16.msra.mxu0 %v3065
        %3336 = vmatmul.bf16.gmra.mxu0 %v3114
        %v3337 = vpop.f32.mrf.mxu0
        %v3338 = vadd.f32 0.0, %v3337
        %v3339 = vpop.f32.mrf.mxu0
        %v3340 = vadd.f32 0.0, %v3339
        %3341 = vmatmul.bf16.gmra.mxu0 %v3117
        %v3342 = vpop.f32.mrf.mxu0
        %v3343 = vadd.f32 0.0, %v3342
        %v3344 = vpop.f32.mrf.mxu0
        %v3345 = vadd.f32 0.0, %v3344
        %3346 = vdwg.mxu0
        %3347 = vmatpush.bf16.msra.mxu0 0
        %3348 = vmatpush.bf16.msra.mxu0 0
        %3349 = vmatpush.bf16.msra.mxu0 0
        %3350 = vmatpush.bf16.msra.mxu0 0
        %3351 = vmatpush.bf16.msra.mxu0 0
        %3352 = vmatpush.bf16.msra.mxu0 %v3098
        %3353 = vmatpush.bf16.msra.mxu0 %v3082
        %3354 = vmatpush.bf16.msra.mxu0 %v3066
        %3355 = vmatmul.bf16.gmra.mxu0 %v3114
        %v3356 = vpop.f32.mrf.mxu0
        %v3357 = vadd.f32 0.0, %v3356
        %v3358 = vpop.f32.mrf.mxu0
        %v3359 = vadd.f32 0.0, %v3358
        %3360 = vmatmul.bf16.gmra.mxu0 %v3117
        %v3361 = vpop.f32.mrf.mxu0
        %v3362 = vadd.f32 0.0, %v3361
        %v3363 = vpop.f32.mrf.mxu0
        %v3364 = vadd.f32 0.0, %v3363
        %3365 = vdwg.mxu0
        %3366 = vmatpush.bf16.msra.mxu0 0
        %3367 = vmatpush.bf16.msra.mxu0 0
        %3368 = vmatpush.bf16.msra.mxu0 0
        %3369 = vmatpush.bf16.msra.mxu0 0
        %3370 = vmatpush.bf16.msra.mxu0 0
        %3371 = vmatpush.bf16.msra.mxu0 %v3099
        %3372 = vmatpush.bf16.msra.mxu0 %v3083
        %3373 = vmatpush.bf16.msra.mxu0 %v3067
        %3374 = vmatmul.bf16.gmra.mxu0 %v3114
        %v3375 = vpop.f32.mrf.mxu0
        %v3376 = vadd.f32 0.0, %v3375
        %v3377 = vpop.f32.mrf.mxu0
        %v3378 = vadd.f32 0.0, %v3377
        %3379 = vmatmul.bf16.gmra.mxu0 %v3117
        %v3380 = vpop.f32.mrf.mxu0
        %v3381 = vadd.f32 0.0, %v3380
        %v3382 = vpop.f32.mrf.mxu0
        %v3383 = vadd.f32 0.0, %v3382
        %3384 = vdwg.mxu0
        %3385 = vmatpush.bf16.msra.mxu0 0
        %3386 = vmatpush.bf16.msra.mxu0 0
        %3387 = vmatpush.bf16.msra.mxu0 0
        %3388 = vmatpush.bf16.msra.mxu0 0
        %3389 = vmatpush.bf16.msra.mxu0 0
        %3390 = vmatpush.bf16.msra.mxu0 %v3100
        %3391 = vmatpush.bf16.msra.mxu0 %v3084
        %3392 = vmatpush.bf16.msra.mxu0 %v3068
        %3393 = vmatmul.bf16.gmra.mxu0 %v3114
        %v3394 = vpop.f32.mrf.mxu0
        %v3395 = vadd.f32 0.0, %v3394
        %v3396 = vpop.f32.mrf.mxu0
        %v3397 = vadd.f32 0.0, %v3396
        %3398 = vmatmul.bf16.gmra.mxu0 %v3117
        %v3399 = vpop.f32.mrf.mxu0
        %v3400 = vadd.f32 0.0, %v3399
        %v3401 = vpop.f32.mrf.mxu0
        %v3402 = vadd.f32 0.0, %v3401
        %3403 = vdwg.mxu0
        %3404 = vmatpush.bf16.msra.mxu0 0
        %3405 = vmatpush.bf16.msra.mxu0 0
        %3406 = vmatpush.bf16.msra.mxu0 0
        %3407 = vmatpush.bf16.msra.mxu0 0
        %3408 = vmatpush.bf16.msra.mxu0 0
        %3409 = vmatpush.bf16.msra.mxu0 %v3101
        %3410 = vmatpush.bf16.msra.mxu0 %v3085
        %3411 = vmatpush.bf16.msra.mxu0 %v3069
        %3412 = vmatmul.bf16.gmra.mxu0 %v3114
        %v3413 = vpop.f32.mrf.mxu0
        %v3414 = vadd.f32 0.0, %v3413
        %v3415 = vpop.f32.mrf.mxu0
        %v3416 = vadd.f32 0.0, %v3415
        %3417 = vmatmul.bf16.gmra.mxu0 %v3117
        %v3418 = vpop.f32.mrf.mxu0
        %v3419 = vadd.f32 0.0, %v3418
        %v3420 = vpop.f32.mrf.mxu0
        %v3421 = vadd.f32 0.0, %v3420
        %3422 = vdwg.mxu0
        %v3423 = vadd.f32 %v2986, %v3129
        %v3424 = vadd.f32 %v2987, %v3148
        %v3425 = vadd.f32 %v2988, %v3167
        %v3426 = vadd.f32 %v2989, %v3186
        %v3427 = vadd.f32 %v2990, %v3205
        %v3428 = vadd.f32 %v2991, %v3224
        %v3429 = vadd.f32 %v2992, %v3243
        %v3430 = vadd.f32 %v2993, %v3262
        %v3431 = vadd.f32 %v2994, %v3281
        %v3432 = vadd.f32 %v2995, %v3300
        %v3433 = vadd.f32 %v2996, %v3319
        %v3434 = vadd.f32 %v2997, %v3338
        %v3435 = vadd.f32 %v2998, %v3357
        %v3436 = vadd.f32 %v2999, %v3376
        %v3437 = vadd.f32 %v3000, %v3395
        %v3438 = vadd.f32 %v3001, %v3414
        %v3439 = vadd.f32 %v3002, %v3131
        %v3440 = vadd.f32 %v3003, %v3150
        %v3441 = vadd.f32 %v3004, %v3169
        %v3442 = vadd.f32 %v3005, %v3188
        %v3443 = vadd.f32 %v3006, %v3207
        %v3444 = vadd.f32 %v3007, %v3226
        %v3445 = vadd.f32 %v3008, %v3245
        %v3446 = vadd.f32 %v3009, %v3264
        %v3447 = vadd.f32 %v3010, %v3283
        %v3448 = vadd.f32 %v3011, %v3302
        %v3449 = vadd.f32 %v3012, %v3321
        %v3450 = vadd.f32 %v3013, %v3340
        %v3451 = vadd.f32 %v3014, %v3359
        %v3452 = vadd.f32 %v3015, %v3378
        %v3453 = vadd.f32 %v3016, %v3397
        %v3454 = vadd.f32 %v3017, %v3416
        %v3455 = vadd.f32 %v3018, %v3134
        %v3456 = vadd.f32 %v3019, %v3153
        %v3457 = vadd.f32 %v3020, %v3172
        %v3458 = vadd.f32 %v3021, %v3191
        %v3459 = vadd.f32 %v3022, %v3210
        %v3460 = vadd.f32 %v3023, %v3229
        %v3461 = vadd.f32 %v3024, %v3248
        %v3462 = vadd.f32 %v3025, %v3267
        %v3463 = vadd.f32 %v3026, %v3286
        %v3464 = vadd.f32 %v3027, %v3305
        %v3465 = vadd.f32 %v3028, %v3324
        %v3466 = vadd.f32 %v3029, %v3343
        %v3467 = vadd.f32 %v3030, %v3362
        %v3468 = vadd.f32 %v3031, %v3381
        %v3469 = vadd.f32 %v3032, %v3400
        %v3470 = vadd.f32 %v3033, %v3419
        %v3471 = vadd.f32 %v3034, %v3136
        %v3472 = vadd.f32 %v3035, %v3155
        %v3473 = vadd.f32 %v3036, %v3174
        %v3474 = vadd.f32 %v3037, %v3193
        %v3475 = vadd.f32 %v3038, %v3212
        %v3476 = vadd.f32 %v3039, %v3231
        %v3477 = vadd.f32 %v3040, %v3250
        %v3478 = vadd.f32 %v3041, %v3269
        %v3479 = vadd.f32 %v3042, %v3288
        %v3480 = vadd.f32 %v3043, %v3307
        %v3481 = vadd.f32 %v3044, %v3326
        %v3482 = vadd.f32 %v3045, %v3345
        %v3483 = vadd.f32 %v3046, %v3364
        %v3484 = vadd.f32 %v3047, %v3383
        %v3485 = vadd.f32 %v3048, %v3402
        %v3486 = vadd.f32 %v3049, %v3421
        %v3487 = vmul.f32 %v3423, 0.2
        %v3488 = vmul.f32 %v3424, 0.2
        %v3489 = vmul.f32 %v3425, 0.2
        %v3490 = vmul.f32 %v3426, 0.2
        %v3491 = vmul.f32 %v3427, 0.2
        %v3492 = vmul.f32 %v3428, 0.2
        %v3493 = vmul.f32 %v3429, 0.2
        %v3494 = vmul.f32 %v3430, 0.2
        %v3495 = vmul.f32 %v3431, 0.2
        %v3496 = vmul.f32 %v3432, 0.2
        %v3497 = vmul.f32 %v3433, 0.2
        %v3498 = vmul.f32 %v3434, 0.2
        %v3499 = vmul.f32 %v3435, 0.2
        %v3500 = vmul.f32 %v3436, 0.2
        %v3501 = vmul.f32 %v3437, 0.2
        %v3502 = vmul.f32 %v3438, 0.2
        %v3503 = vmul.f32 %v3439, 0.2
        %v3504 = vmul.f32 %v3440, 0.2
        %v3505 = vmul.f32 %v3441, 0.2
        %v3506 = vmul.f32 %v3442, 0.2
        %v3507 = vmul.f32 %v3443, 0.2
        %v3508 = vmul.f32 %v3444, 0.2
        %v3509 = vmul.f32 %v3445, 0.2
        %v3510 = vmul.f32 %v3446, 0.2
        %v3511 = vmul.f32 %v3447, 0.2
        %v3512 = vmul.f32 %v3448, 0.2
        %v3513 = vmul.f32 %v3449, 0.2
        %v3514 = vmul.f32 %v3450, 0.2
        %v3515 = vmul.f32 %v3451, 0.2
        %v3516 = vmul.f32 %v3452, 0.2
        %v3517 = vmul.f32 %v3453, 0.2
        %v3518 = vmul.f32 %v3454, 0.2
        %v3519 = vmul.f32 %v3455, 0.2
        %v3520 = vmul.f32 %v3456, 0.2
        %v3521 = vmul.f32 %v3457, 0.2
        %v3522 = vmul.f32 %v3458, 0.2
        %v3523 = vmul.f32 %v3459, 0.2
        %v3524 = vmul.f32 %v3460, 0.2
        %v3525 = vmul.f32 %v3461, 0.2
        %v3526 = vmul.f32 %v3462, 0.2
        %v3527 = vmul.f32 %v3463, 0.2
        %v3528 = vmul.f32 %v3464, 0.2
        %v3529 = vmul.f32 %v3465, 0.2
        %v3530 = vmul.f32 %v3466, 0.2
        %v3531 = vmul.f32 %v3467, 0.2
        %v3532 = vmul.f32 %v3468, 0.2
        %v3533 = vmul.f32 %v3469, 0.2
        %v3534 = vmul.f32 %v3470, 0.2
        %v3535 = vmul.f32 %v3471, 0.2
        %v3536 = vmul.f32 %v3472, 0.2
        %v3537 = vmul.f32 %v3473, 0.2
        %v3538 = vmul.f32 %v3474, 0.2
        %v3539 = vmul.f32 %v3475, 0.2
        %v3540 = vmul.f32 %v3476, 0.2
        %v3541 = vmul.f32 %v3477, 0.2
        %v3542 = vmul.f32 %v3478, 0.2
        %v3543 = vmul.f32 %v3479, 0.2
        %v3544 = vmul.f32 %v3480, 0.2
        %v3545 = vmul.f32 %v3481, 0.2
        %v3546 = vmul.f32 %v3482, 0.2
        %v3547 = vmul.f32 %v3483, 0.2
        %v3548 = vmul.f32 %v3484, 0.2
        %v3549 = vmul.f32 %v3485, 0.2
        %v3550 = vmul.f32 %v3486, 0.2
        %v3551 = vmax.f32 %v3423, %v3487
        %v3552 = vmax.f32 %v3424, %v3488
        %v3553 = vmax.f32 %v3425, %v3489
        %v3554 = vmax.f32 %v3426, %v3490
        %v3555 = vmax.f32 %v3427, %v3491
        %v3556 = vmax.f32 %v3428, %v3492
        %v3557 = vmax.f32 %v3429, %v3493
        %v3558 = vmax.f32 %v3430, %v3494
        %v3559 = vmax.f32 %v3431, %v3495
        %v3560 = vmax.f32 %v3432, %v3496
        %v3561 = vmax.f32 %v3433, %v3497
        %v3562 = vmax.f32 %v3434, %v3498
        %v3563 = vmax.f32 %v3435, %v3499
        %v3564 = vmax.f32 %v3436, %v3500
        %v3565 = vmax.f32 %v3437, %v3501
        %v3566 = vmax.f32 %v3438, %v3502
        %v3567 = vmax.f32 %v3439, %v3503
        %v3568 = vmax.f32 %v3440, %v3504
        %v3569 = vmax.f32 %v3441, %v3505
        %v3570 = vmax.f32 %v3442, %v3506
        %v3571 = vmax.f32 %v3443, %v3507
        %v3572 = vmax.f32 %v3444, %v3508
        %v3573 = vmax.f32 %v3445, %v3509
        %v3574 = vmax.f32 %v3446, %v3510
        %v3575 = vmax.f32 %v3447, %v3511
        %v3576 = vmax.f32 %v3448, %v3512
        %v3577 = vmax.f32 %v3449, %v3513
        %v3578 = vmax.f32 %v3450, %v3514
        %v3579 = vmax.f32 %v3451, %v3515
        %v3580 = vmax.f32 %v3452, %v3516
        %v3581 = vmax.f32 %v3453, %v3517
        %v3582 = vmax.f32 %v3454, %v3518
        %v3583 = vmax.f32 %v3455, %v3519
        %v3584 = vmax.f32 %v3456, %v3520
        %v3585 = vmax.f32 %v3457, %v3521
        %v3586 = vmax.f32 %v3458, %v3522
        %v3587 = vmax.f32 %v3459, %v3523
        %v3588 = vmax.f32 %v3460, %v3524
        %v3589 = vmax.f32 %v3461, %v3525
        %v3590 = vmax.f32 %v3462, %v3526
        %v3591 = vmax.f32 %v3463, %v3527
        %v3592 = vmax.f32 %v3464, %v3528
        %v3593 = vmax.f32 %v3465, %v3529
        %v3594 = vmax.f32 %v3466, %v3530
        %v3595 = vmax.f32 %v3467, %v3531
        %v3596 = vmax.f32 %v3468, %v3532
        %v3597 = vmax.f32 %v3469, %v3533
        %v3598 = vmax.f32 %v3470, %v3534
        %v3599 = vmax.f32 %v3471, %v3535
        %v3600 = vmax.f32 %v3472, %v3536
        %v3601 = vmax.f32 %v3473, %v3537
        %v3602 = vmax.f32 %v3474, %v3538
        %v3603 = vmax.f32 %v3475, %v3539
        %v3604 = vmax.f32 %v3476, %v3540
        %v3605 = vmax.f32 %v3477, %v3541
        %v3606 = vmax.f32 %v3478, %v3542
        %v3607 = vmax.f32 %v3479, %v3543
        %v3608 = vmax.f32 %v3480, %v3544
        %v3609 = vmax.f32 %v3481, %v3545
        %v3610 = vmax.f32 %v3482, %v3546
        %v3611 = vmax.f32 %v3483, %v3547
        %v3612 = vmax.f32 %v3484, %v3548
        %v3613 = vmax.f32 %v3485, %v3549
        %v3614 = vmax.f32 %v3486, %v3550
        %v3615 = vunpack.c.l.bf16 %v1723
        %v3616 = vunpack.c.h.bf16 %v1723
        %v3617 = vunpack.c.l.bf16 %v1724
        %v3618 = vunpack.c.h.bf16 %v1724
        %v3619 = vunpack.c.l.bf16 %v1725
        %v3620 = vunpack.c.h.bf16 %v1725
        %v3621 = vunpack.c.l.bf16 %v1726
        %v3622 = vunpack.c.h.bf16 %v1726
        %v3623 = vunpack.c.l.bf16 %v1727
        %v3624 = vunpack.c.h.bf16 %v1727
        %v3625 = vunpack.c.l.bf16 %v1728
        %v3626 = vunpack.c.h.bf16 %v1728
        %v3627 = vunpack.c.l.bf16 %v1729
        %v3628 = vunpack.c.h.bf16 %v1729
        %v3629 = vunpack.c.l.bf16 %v1730
        %v3630 = vunpack.c.h.bf16 %v1730
        %v3631 = vunpack.c.l.bf16 %v1731
        %v3632 = vunpack.c.h.bf16 %v1731
        %v3633 = vunpack.c.l.bf16 %v1732
        %v3634 = vunpack.c.h.bf16 %v1732
        %v3635 = vunpack.c.l.bf16 %v1733
        %v3636 = vunpack.c.h.bf16 %v1733
        %v3637 = vunpack.c.l.bf16 %v1734
        %v3638 = vunpack.c.h.bf16 %v1734
        %v3639 = vunpack.c.l.bf16 %v1735
        %v3640 = vunpack.c.h.bf16 %v1735
        %v3641 = vunpack.c.l.bf16 %v1736
        %v3642 = vunpack.c.h.bf16 %v1736
        %v3643 = vunpack.c.l.bf16 %v1737
        %v3644 = vunpack.c.h.bf16 %v1737
        %v3645 = vunpack.c.l.bf16 %v1738
        %v3646 = vunpack.c.h.bf16 %v1738
        %v3647 = vld [vmem:[%s5] sm:$0xf]
        %v3648 = vld [vmem:[%s5 + $0x4] sm:$0xf]
        %v3649 = vpack.c.bf16 %v3567, %v3551
        %v3650 = vpack.c.bf16 %v3568, %v3552
        %v3651 = vpack.c.bf16 %v3569, %v3553
        %v3652 = vpack.c.bf16 %v3570, %v3554
        %v3653 = vpack.c.bf16 %v3571, %v3555
        %v3654 = vpack.c.bf16 %v3572, %v3556
        %v3655 = vpack.c.bf16 %v3573, %v3557
        %v3656 = vpack.c.bf16 %v3574, %v3558
        %v3657 = vpack.c.bf16 %v3575, %v3559
        %v3658 = vpack.c.bf16 %v3576, %v3560
        %v3659 = vpack.c.bf16 %v3577, %v3561
        %v3660 = vpack.c.bf16 %v3578, %v3562
        %v3661 = vpack.c.bf16 %v3579, %v3563
        %v3662 = vpack.c.bf16 %v3580, %v3564
        %v3663 = vpack.c.bf16 %v3581, %v3565
        %v3664 = vpack.c.bf16 %v3582, %v3566
        %v3665 = vpack.c.bf16 %v3599, %v3583
        %v3666 = vpack.c.bf16 %v3600, %v3584
        %v3667 = vpack.c.bf16 %v3601, %v3585
        %v3668 = vpack.c.bf16 %v3602, %v3586
        %v3669 = vpack.c.bf16 %v3603, %v3587
        %v3670 = vpack.c.bf16 %v3604, %v3588
        %v3671 = vpack.c.bf16 %v3605, %v3589
        %v3672 = vpack.c.bf16 %v3606, %v3590
        %v3673 = vpack.c.bf16 %v3607, %v3591
        %v3674 = vpack.c.bf16 %v3608, %v3592
        %v3675 = vpack.c.bf16 %v3609, %v3593
        %v3676 = vpack.c.bf16 %v3610, %v3594
        %v3677 = vpack.c.bf16 %v3611, %v3595
        %v3678 = vpack.c.bf16 %v3612, %v3596
        %v3679 = vpack.c.bf16 %v3613, %v3597
        %v3680 = vpack.c.bf16 %v3614, %v3598
        %v3683 = vunpack.c.l.b16 %v3647
        %v3684 = vunpack.c.l.b16 %v3648
        %v3685 = vpack.c.b16 %v3684, %v3683
        %v3687 = vsel %vm604, %v3685, 0
        %3689 = vmatpush.bf16.msra.mxu0 0
        %3690 = vmatpush.bf16.msra.mxu0 0
        %3691 = vmatpush.bf16.msra.mxu0 0
        %3692 = vmatpush.bf16.msra.mxu0 0
        %3693 = vmatpush.bf16.msra.mxu0 0
        %3694 = vmatpush.bf16.msra.mxu0 0
        %3695 = vmatpush.bf16.msra.mxu0 %v3665
        %3696 = vmatpush.bf16.msra.mxu0 %v3649
        %3697 = vmatmul.bf16.gmra.mxu0 %v3687
        %v3698 = vpop.f32.mrf.mxu0
        %v3699 = vadd.f32 0.0, %v3698
        %v3700 = vpop.f32.mrf.mxu0
        %v3701 = vadd.f32 0.0, %v3700
        %3702 = vdwg.mxu0
        %3703 = vmatpush.bf16.msra.mxu0 0
        %3704 = vmatpush.bf16.msra.mxu0 0
        %3705 = vmatpush.bf16.msra.mxu0 0
        %3706 = vmatpush.bf16.msra.mxu0 0
        %3707 = vmatpush.bf16.msra.mxu0 0
        %3708 = vmatpush.bf16.msra.mxu0 0
        %3709 = vmatpush.bf16.msra.mxu0 %v3666
        %3710 = vmatpush.bf16.msra.mxu0 %v3650
        %3711 = vmatmul.bf16.gmra.mxu0 %v3687
        %v3712 = vpop.f32.mrf.mxu0
        %v3713 = vadd.f32 0.0, %v3712
        %v3714 = vpop.f32.mrf.mxu0
        %v3715 = vadd.f32 0.0, %v3714
        %3716 = vdwg.mxu0
        %3717 = vmatpush.bf16.msra.mxu0 0
        %3718 = vmatpush.bf16.msra.mxu0 0
        %3719 = vmatpush.bf16.msra.mxu0 0
        %3720 = vmatpush.bf16.msra.mxu0 0
        %3721 = vmatpush.bf16.msra.mxu0 0
        %3722 = vmatpush.bf16.msra.mxu0 0
        %3723 = vmatpush.bf16.msra.mxu0 %v3667
        %3724 = vmatpush.bf16.msra.mxu0 %v3651
        %3725 = vmatmul.bf16.gmra.mxu0 %v3687
        %v3726 = vpop.f32.mrf.mxu0
        %v3727 = vadd.f32 0.0, %v3726
        %v3728 = vpop.f32.mrf.mxu0
        %v3729 = vadd.f32 0.0, %v3728
        %3730 = vdwg.mxu0
        %3731 = vmatpush.bf16.msra.mxu0 0
        %3732 = vmatpush.bf16.msra.mxu0 0
        %3733 = vmatpush.bf16.msra.mxu0 0
        %3734 = vmatpush.bf16.msra.mxu0 0
        %3735 = vmatpush.bf16.msra.mxu0 0
        %3736 = vmatpush.bf16.msra.mxu0 0
        %3737 = vmatpush.bf16.msra.mxu0 %v3668
        %3738 = vmatpush.bf16.msra.mxu0 %v3652
        %3739 = vmatmul.bf16.gmra.mxu0 %v3687
        %v3740 = vpop.f32.mrf.mxu0
        %v3741 = vadd.f32 0.0, %v3740
        %v3742 = vpop.f32.mrf.mxu0
        %v3743 = vadd.f32 0.0, %v3742
        %3744 = vdwg.mxu0
        %3745 = vmatpush.bf16.msra.mxu0 0
        %3746 = vmatpush.bf16.msra.mxu0 0
        %3747 = vmatpush.bf16.msra.mxu0 0
        %3748 = vmatpush.bf16.msra.mxu0 0
        %3749 = vmatpush.bf16.msra.mxu0 0
        %3750 = vmatpush.bf16.msra.mxu0 0
        %3751 = vmatpush.bf16.msra.mxu0 %v3669
        %3752 = vmatpush.bf16.msra.mxu0 %v3653
        %3753 = vmatmul.bf16.gmra.mxu0 %v3687
        %v3754 = vpop.f32.mrf.mxu0
        %v3755 = vadd.f32 0.0, %v3754
        %v3756 = vpop.f32.mrf.mxu0
        %v3757 = vadd.f32 0.0, %v3756
        %3758 = vdwg.mxu0
        %3759 = vmatpush.bf16.msra.mxu0 0
        %3760 = vmatpush.bf16.msra.mxu0 0
        %3761 = vmatpush.bf16.msra.mxu0 0
        %3762 = vmatpush.bf16.msra.mxu0 0
        %3763 = vmatpush.bf16.msra.mxu0 0
        %3764 = vmatpush.bf16.msra.mxu0 0
        %3765 = vmatpush.bf16.msra.mxu0 %v3670
        %3766 = vmatpush.bf16.msra.mxu0 %v3654
        %3767 = vmatmul.bf16.gmra.mxu0 %v3687
        %v3768 = vpop.f32.mrf.mxu0
        %v3769 = vadd.f32 0.0, %v3768
        %v3770 = vpop.f32.mrf.mxu0
        %v3771 = vadd.f32 0.0, %v3770
        %3772 = vdwg.mxu0
        %3773 = vmatpush.bf16.msra.mxu0 0
        %3774 = vmatpush.bf16.msra.mxu0 0
        %3775 = vmatpush.bf16.msra.mxu0 0
        %3776 = vmatpush.bf16.msra.mxu0 0
        %3777 = vmatpush.bf16.msra.mxu0 0
        %3778 = vmatpush.bf16.msra.mxu0 0
        %3779 = vmatpush.bf16.msra.mxu0 %v3671
        %3780 = vmatpush.bf16.msra.mxu0 %v3655
        %3781 = vmatmul.bf16.gmra.mxu0 %v3687
        %v3782 = vpop.f32.mrf.mxu0
        %v3783 = vadd.f32 0.0, %v3782
        %v3784 = vpop.f32.mrf.mxu0
        %v3785 = vadd.f32 0.0, %v3784
        %3786 = vdwg.mxu0
        %3787 = vmatpush.bf16.msra.mxu0 0
        %3788 = vmatpush.bf16.msra.mxu0 0
        %3789 = vmatpush.bf16.msra.mxu0 0
        %3790 = vmatpush.bf16.msra.mxu0 0
        %3791 = vmatpush.bf16.msra.mxu0 0
        %3792 = vmatpush.bf16.msra.mxu0 0
        %3793 = vmatpush.bf16.msra.mxu0 %v3672
        %3794 = vmatpush.bf16.msra.mxu0 %v3656
        %3795 = vmatmul.bf16.gmra.mxu0 %v3687
        %v3796 = vpop.f32.mrf.mxu0
        %v3797 = vadd.f32 0.0, %v3796
        %v3798 = vpop.f32.mrf.mxu0
        %v3799 = vadd.f32 0.0, %v3798
        %3800 = vdwg.mxu0
        %3801 = vmatpush.bf16.msra.mxu0 0
        %3802 = vmatpush.bf16.msra.mxu0 0
        %3803 = vmatpush.bf16.msra.mxu0 0
        %3804 = vmatpush.bf16.msra.mxu0 0
        %3805 = vmatpush.bf16.msra.mxu0 0
        %3806 = vmatpush.bf16.msra.mxu0 0
        %3807 = vmatpush.bf16.msra.mxu0 %v3673
        %3808 = vmatpush.bf16.msra.mxu0 %v3657
        %3809 = vmatmul.bf16.gmra.mxu0 %v3687
        %v3810 = vpop.f32.mrf.mxu0
        %v3811 = vadd.f32 0.0, %v3810
        %v3812 = vpop.f32.mrf.mxu0
        %v3813 = vadd.f32 0.0, %v3812
        %3814 = vdwg.mxu0
        %3815 = vmatpush.bf16.msra.mxu0 0
        %3816 = vmatpush.bf16.msra.mxu0 0
        %3817 = vmatpush.bf16.msra.mxu0 0
        %3818 = vmatpush.bf16.msra.mxu0 0
        %3819 = vmatpush.bf16.msra.mxu0 0
        %3820 = vmatpush.bf16.msra.mxu0 0
        %3821 = vmatpush.bf16.msra.mxu0 %v3674
        %3822 = vmatpush.bf16.msra.mxu0 %v3658
        %3823 = vmatmul.bf16.gmra.mxu0 %v3687
        %v3824 = vpop.f32.mrf.mxu0
        %v3825 = vadd.f32 0.0, %v3824
        %v3826 = vpop.f32.mrf.mxu0
        %v3827 = vadd.f32 0.0, %v3826
        %3828 = vdwg.mxu0
        %3829 = vmatpush.bf16.msra.mxu0 0
        %3830 = vmatpush.bf16.msra.mxu0 0
        %3831 = vmatpush.bf16.msra.mxu0 0
        %3832 = vmatpush.bf16.msra.mxu0 0
        %3833 = vmatpush.bf16.msra.mxu0 0
        %3834 = vmatpush.bf16.msra.mxu0 0
        %3835 = vmatpush.bf16.msra.mxu0 %v3675
        %3836 = vmatpush.bf16.msra.mxu0 %v3659
        %3837 = vmatmul.bf16.gmra.mxu0 %v3687
        %v3838 = vpop.f32.mrf.mxu0
        %v3839 = vadd.f32 0.0, %v3838
        %v3840 = vpop.f32.mrf.mxu0
        %v3841 = vadd.f32 0.0, %v3840
        %3842 = vdwg.mxu0
        %3843 = vmatpush.bf16.msra.mxu0 0
        %3844 = vmatpush.bf16.msra.mxu0 0
        %3845 = vmatpush.bf16.msra.mxu0 0
        %3846 = vmatpush.bf16.msra.mxu0 0
        %3847 = vmatpush.bf16.msra.mxu0 0
        %3848 = vmatpush.bf16.msra.mxu0 0
        %3849 = vmatpush.bf16.msra.mxu0 %v3676
        %3850 = vmatpush.bf16.msra.mxu0 %v3660
        %3851 = vmatmul.bf16.gmra.mxu0 %v3687
        %v3852 = vpop.f32.mrf.mxu0
        %v3853 = vadd.f32 0.0, %v3852
        %v3854 = vpop.f32.mrf.mxu0
        %v3855 = vadd.f32 0.0, %v3854
        %3856 = vdwg.mxu0
        %3857 = vmatpush.bf16.msra.mxu0 0
        %3858 = vmatpush.bf16.msra.mxu0 0
        %3859 = vmatpush.bf16.msra.mxu0 0
        %3860 = vmatpush.bf16.msra.mxu0 0
        %3861 = vmatpush.bf16.msra.mxu0 0
        %3862 = vmatpush.bf16.msra.mxu0 0
        %3863 = vmatpush.bf16.msra.mxu0 %v3677
        %3864 = vmatpush.bf16.msra.mxu0 %v3661
        %3865 = vmatmul.bf16.gmra.mxu0 %v3687
        %v3866 = vpop.f32.mrf.mxu0
        %v3867 = vadd.f32 0.0, %v3866
        %v3868 = vpop.f32.mrf.mxu0
        %v3869 = vadd.f32 0.0, %v3868
        %3870 = vdwg.mxu0
        %3871 = vmatpush.bf16.msra.mxu0 0
        %3872 = vmatpush.bf16.msra.mxu0 0
        %3873 = vmatpush.bf16.msra.mxu0 0
        %3874 = vmatpush.bf16.msra.mxu0 0
        %3875 = vmatpush.bf16.msra.mxu0 0
        %3876 = vmatpush.bf16.msra.mxu0 0
        %3877 = vmatpush.bf16.msra.mxu0 %v3678
        %3878 = vmatpush.bf16.msra.mxu0 %v3662
        %3879 = vmatmul.bf16.gmra.mxu0 %v3687
        %v3880 = vpop.f32.mrf.mxu0
        %v3881 = vadd.f32 0.0, %v3880
        %v3882 = vpop.f32.mrf.mxu0
        %v3883 = vadd.f32 0.0, %v3882
        %3884 = vdwg.mxu0
        %3885 = vmatpush.bf16.msra.mxu0 0
        %3886 = vmatpush.bf16.msra.mxu0 0
        %3887 = vmatpush.bf16.msra.mxu0 0
        %3888 = vmatpush.bf16.msra.mxu0 0
        %3889 = vmatpush.bf16.msra.mxu0 0
        %3890 = vmatpush.bf16.msra.mxu0 0
        %3891 = vmatpush.bf16.msra.mxu0 %v3679
        %3892 = vmatpush.bf16.msra.mxu0 %v3663
        %3893 = vmatmul.bf16.gmra.mxu0 %v3687
        %v3894 = vpop.f32.mrf.mxu0
        %v3895 = vadd.f32 0.0, %v3894
        %v3896 = vpop.f32.mrf.mxu0
        %v3897 = vadd.f32 0.0, %v3896
        %3898 = vdwg.mxu0
        %3899 = vmatpush.bf16.msra.mxu0 0
        %3900 = vmatpush.bf16.msra.mxu0 0
        %3901 = vmatpush.bf16.msra.mxu0 0
        %3902 = vmatpush.bf16.msra.mxu0 0
        %3903 = vmatpush.bf16.msra.mxu0 0
        %3904 = vmatpush.bf16.msra.mxu0 0
        %3905 = vmatpush.bf16.msra.mxu0 %v3680
        %3906 = vmatpush.bf16.msra.mxu0 %v3664
        %3907 = vmatmul.bf16.gmra.mxu0 %v3687
        %v3908 = vpop.f32.mrf.mxu0
        %v3909 = vadd.f32 0.0, %v3908
        %v3910 = vpop.f32.mrf.mxu0
        %v3911 = vadd.f32 0.0, %v3910
        %3912 = vdwg.mxu0
        %v3913 = vadd.f32 %v3615, %v3699
        %v3914 = vadd.f32 %v3616, %v3713
        %v3915 = vadd.f32 %v3617, %v3727
        %v3916 = vadd.f32 %v3618, %v3741
        %v3917 = vadd.f32 %v3619, %v3755
        %v3918 = vadd.f32 %v3620, %v3769
        %v3919 = vadd.f32 %v3621, %v3783
        %v3920 = vadd.f32 %v3622, %v3797
        %v3921 = vadd.f32 %v3623, %v3811
        %v3922 = vadd.f32 %v3624, %v3825
        %v3923 = vadd.f32 %v3625, %v3839
        %v3924 = vadd.f32 %v3626, %v3853
        %v3925 = vadd.f32 %v3627, %v3867
        %v3926 = vadd.f32 %v3628, %v3881
        %v3927 = vadd.f32 %v3629, %v3895
        %v3928 = vadd.f32 %v3630, %v3909
        %v3929 = vadd.f32 %v3631, %v3701
        %v3930 = vadd.f32 %v3632, %v3715
        %v3931 = vadd.f32 %v3633, %v3729
        %v3932 = vadd.f32 %v3634, %v3743
        %v3933 = vadd.f32 %v3635, %v3757
        %v3934 = vadd.f32 %v3636, %v3771
        %v3935 = vadd.f32 %v3637, %v3785
        %v3936 = vadd.f32 %v3638, %v3799
        %v3937 = vadd.f32 %v3639, %v3813
        %v3938 = vadd.f32 %v3640, %v3827
        %v3939 = vadd.f32 %v3641, %v3841
        %v3940 = vadd.f32 %v3642, %v3855
        %v3941 = vadd.f32 %v3643, %v3869
        %v3942 = vadd.f32 %v3644, %v3883
        %v3943 = vadd.f32 %v3645, %v3897
        %v3944 = vadd.f32 %v3646, %v3911
        %v3945 = vmul.f32 %v3913, 0.2
        %v3946 = vmul.f32 %v3914, 0.2
        %v3947 = vmul.f32 %v3915, 0.2
        %v3948 = vmul.f32 %v3916, 0.2
        %v3949 = vmul.f32 %v3917, 0.2
        %v3950 = vmul.f32 %v3918, 0.2
        %v3951 = vmul.f32 %v3919, 0.2
        %v3952 = vmul.f32 %v3920, 0.2
        %v3953 = vmul.f32 %v3921, 0.2
        %v3954 = vmul.f32 %v3922, 0.2
        %v3955 = vmul.f32 %v3923, 0.2
        %v3956 = vmul.f32 %v3924, 0.2
        %v3957 = vmul.f32 %v3925, 0.2
        %v3958 = vmul.f32 %v3926, 0.2
        %v3959 = vmul.f32 %v3927, 0.2
        %v3960 = vmul.f32 %v3928, 0.2
        %v3961 = vmul.f32 %v3929, 0.2
        %v3962 = vmul.f32 %v3930, 0.2
        %v3963 = vmul.f32 %v3931, 0.2
        %v3964 = vmul.f32 %v3932, 0.2
        %v3965 = vmul.f32 %v3933, 0.2
        %v3966 = vmul.f32 %v3934, 0.2
        %v3967 = vmul.f32 %v3935, 0.2
        %v3968 = vmul.f32 %v3936, 0.2
        %v3969 = vmul.f32 %v3937, 0.2
        %v3970 = vmul.f32 %v3938, 0.2
        %v3971 = vmul.f32 %v3939, 0.2
        %v3972 = vmul.f32 %v3940, 0.2
        %v3973 = vmul.f32 %v3941, 0.2
        %v3974 = vmul.f32 %v3942, 0.2
        %v3975 = vmul.f32 %v3943, 0.2
        %v3976 = vmul.f32 %v3944, 0.2
        %v3977 = vmax.f32 %v3913, %v3945
        %v3978 = vmax.f32 %v3914, %v3946
        %v3979 = vmax.f32 %v3915, %v3947
        %v3980 = vmax.f32 %v3916, %v3948
        %v3981 = vmax.f32 %v3917, %v3949
        %v3982 = vmax.f32 %v3918, %v3950
        %v3983 = vmax.f32 %v3919, %v3951
        %v3984 = vmax.f32 %v3920, %v3952
        %v3985 = vmax.f32 %v3921, %v3953
        %v3986 = vmax.f32 %v3922, %v3954
        %v3987 = vmax.f32 %v3923, %v3955
        %v3988 = vmax.f32 %v3924, %v3956
        %v3989 = vmax.f32 %v3925, %v3957
        %v3990 = vmax.f32 %v3926, %v3958
        %v3991 = vmax.f32 %v3927, %v3959
        %v3992 = vmax.f32 %v3928, %v3960
        %v3993 = vmax.f32 %v3929, %v3961
        %v3994 = vmax.f32 %v3930, %v3962
        %v3995 = vmax.f32 %v3931, %v3963
        %v3996 = vmax.f32 %v3932, %v3964
        %v3997 = vmax.f32 %v3933, %v3965
        %v3998 = vmax.f32 %v3934, %v3966
        %v3999 = vmax.f32 %v3935, %v3967
        %v4000 = vmax.f32 %v3936, %v3968
        %v4001 = vmax.f32 %v3937, %v3969
        %v4002 = vmax.f32 %v3938, %v3970
        %v4003 = vmax.f32 %v3939, %v3971
        %v4004 = vmax.f32 %v3940, %v3972
        %v4005 = vmax.f32 %v3941, %v3973
        %v4006 = vmax.f32 %v3942, %v3974
        %v4007 = vmax.f32 %v3943, %v3975
        %v4008 = vmax.f32 %v3944, %v3976
        %v4009 = vld [vmem:[#allocation2] sm:$0xff]
        %v4010 = vld [vmem:[#allocation2 + $0x8] sm:$0xff]
        %v4011 = vld [vmem:[%s6] sm:$0x1]
        %v4012 = vpack.c.bf16 %v3993, %v3977
        %v4013 = vpack.c.bf16 %v3994, %v3978
        %v4014 = vpack.c.bf16 %v3995, %v3979
        %v4015 = vpack.c.bf16 %v3996, %v3980
        %v4016 = vpack.c.bf16 %v3997, %v3981
        %v4017 = vpack.c.bf16 %v3998, %v3982
        %v4018 = vpack.c.bf16 %v3999, %v3983
        %v4019 = vpack.c.bf16 %v4000, %v3984
        %v4020 = vpack.c.bf16 %v4001, %v3985
        %v4021 = vpack.c.bf16 %v4002, %v3986
        %v4022 = vpack.c.bf16 %v4003, %v3987
        %v4023 = vpack.c.bf16 %v4004, %v3988
        %v4024 = vpack.c.bf16 %v4005, %v3989
        %v4025 = vpack.c.bf16 %v4006, %v3990
        %v4026 = vpack.c.bf16 %v4007, %v3991
        %v4027 = vpack.c.bf16 %v4008, %v3992
        %vm4028 = vcmask 130048
        %v4030 = vsel %vm4028, %v4011, 0
        %4032 = vmatpush.bf16.msra.mxu0 0
        %4033 = vmatpush.bf16.msra.mxu0 0
        %4034 = vmatpush.bf16.msra.mxu0 0
        %4035 = vmatpush.bf16.msra.mxu0 0
        %4036 = vmatpush.bf16.msra.mxu0 0
        %4037 = vmatpush.bf16.msra.mxu0 0
        %4038 = vmatpush.bf16.msra.mxu0 0
        %4039 = vmatpush.bf16.msra.mxu0 %v4012
        %4040 = vmatmul.bf16.gmra.mxu0 %v4030
        %v4041 = vpop.f32.mrf.mxu0
        %v4042 = vadd.f32 0.0, %v4041
        %v4043 = vpop.f32.mrf.mxu0
        %4044 = vdwg.mxu0
        %4045 = vmatpush.bf16.msra.mxu0 0
        %4046 = vmatpush.bf16.msra.mxu0 0
        %4047 = vmatpush.bf16.msra.mxu0 0
        %4048 = vmatpush.bf16.msra.mxu0 0
        %4049 = vmatpush.bf16.msra.mxu0 0
        %4050 = vmatpush.bf16.msra.mxu0 0
        %4051 = vmatpush.bf16.msra.mxu0 0
        %4052 = vmatpush.bf16.msra.mxu0 %v4013
        %4053 = vmatmul.bf16.gmra.mxu0 %v4030
        %v4054 = vpop.f32.mrf.mxu0
        %v4055 = vadd.f32 0.0, %v4054
        %v4056 = vpop.f32.mrf.mxu0
        %4057 = vdwg.mxu0
        %4058 = vmatpush.bf16.msra.mxu0 0
        %4059 = vmatpush.bf16.msra.mxu0 0
        %4060 = vmatpush.bf16.msra.mxu0 0
        %4061 = vmatpush.bf16.msra.mxu0 0
        %4062 = vmatpush.bf16.msra.mxu0 0
        %4063 = vmatpush.bf16.msra.mxu0 0
        %4064 = vmatpush.bf16.msra.mxu0 0
        %4065 = vmatpush.bf16.msra.mxu0 %v4014
        %4066 = vmatmul.bf16.gmra.mxu0 %v4030
        %v4067 = vpop.f32.mrf.mxu0
        %v4068 = vadd.f32 0.0, %v4067
        %v4069 = vpop.f32.mrf.mxu0
        %4070 = vdwg.mxu0
        %4071 = vmatpush.bf16.msra.mxu0 0
        %4072 = vmatpush.bf16.msra.mxu0 0
        %4073 = vmatpush.bf16.msra.mxu0 0
        %4074 = vmatpush.bf16.msra.mxu0 0
        %4075 = vmatpush.bf16.msra.mxu0 0
        %4076 = vmatpush.bf16.msra.mxu0 0
        %4077 = vmatpush.bf16.msra.mxu0 0
        %4078 = vmatpush.bf16.msra.mxu0 %v4015
        %4079 = vmatmul.bf16.gmra.mxu0 %v4030
        %v4080 = vpop.f32.mrf.mxu0
        %v4081 = vadd.f32 0.0, %v4080
        %v4082 = vpop.f32.mrf.mxu0
        %4083 = vdwg.mxu0
        %4084 = vmatpush.bf16.msra.mxu0 0
        %4085 = vmatpush.bf16.msra.mxu0 0
        %4086 = vmatpush.bf16.msra.mxu0 0
        %4087 = vmatpush.bf16.msra.mxu0 0
        %4088 = vmatpush.bf16.msra.mxu0 0
        %4089 = vmatpush.bf16.msra.mxu0 0
        %4090 = vmatpush.bf16.msra.mxu0 0
        %4091 = vmatpush.bf16.msra.mxu0 %v4016
        %4092 = vmatmul.bf16.gmra.mxu0 %v4030
        %v4093 = vpop.f32.mrf.mxu0
        %v4094 = vadd.f32 0.0, %v4093
        %v4095 = vpop.f32.mrf.mxu0
        %4096 = vdwg.mxu0
        %4097 = vmatpush.bf16.msra.mxu0 0
        %4098 = vmatpush.bf16.msra.mxu0 0
        %4099 = vmatpush.bf16.msra.mxu0 0
        %4100 = vmatpush.bf16.msra.mxu0 0
        %4101 = vmatpush.bf16.msra.mxu0 0
        %4102 = vmatpush.bf16.msra.mxu0 0
        %4103 = vmatpush.bf16.msra.mxu0 0
        %4104 = vmatpush.bf16.msra.mxu0 %v4017
        %4105 = vmatmul.bf16.gmra.mxu0 %v4030
        %v4106 = vpop.f32.mrf.mxu0
        %v4107 = vadd.f32 0.0, %v4106
        %v4108 = vpop.f32.mrf.mxu0
        %4109 = vdwg.mxu0
        %4110 = vmatpush.bf16.msra.mxu0 0
        %4111 = vmatpush.bf16.msra.mxu0 0
        %4112 = vmatpush.bf16.msra.mxu0 0
        %4113 = vmatpush.bf16.msra.mxu0 0
        %4114 = vmatpush.bf16.msra.mxu0 0
        %4115 = vmatpush.bf16.msra.mxu0 0
        %4116 = vmatpush.bf16.msra.mxu0 0
        %4117 = vmatpush.bf16.msra.mxu0 %v4018
        %4118 = vmatmul.bf16.gmra.mxu0 %v4030
        %v4119 = vpop.f32.mrf.mxu0
        %v4120 = vadd.f32 0.0, %v4119
        %v4121 = vpop.f32.mrf.mxu0
        %4122 = vdwg.mxu0
        %4123 = vmatpush.bf16.msra.mxu0 0
        %4124 = vmatpush.bf16.msra.mxu0 0
        %4125 = vmatpush.bf16.msra.mxu0 0
        %4126 = vmatpush.bf16.msra.mxu0 0
        %4127 = vmatpush.bf16.msra.mxu0 0
        %4128 = vmatpush.bf16.msra.mxu0 0
        %4129 = vmatpush.bf16.msra.mxu0 0
        %4130 = vmatpush.bf16.msra.mxu0 %v4019
        %4131 = vmatmul.bf16.gmra.mxu0 %v4030
        %v4132 = vpop.f32.mrf.mxu0
        %v4133 = vadd.f32 0.0, %v4132
        %v4134 = vpop.f32.mrf.mxu0
        %4135 = vdwg.mxu0
        %4136 = vmatpush.bf16.msra.mxu0 0
        %4137 = vmatpush.bf16.msra.mxu0 0
        %4138 = vmatpush.bf16.msra.mxu0 0
        %4139 = vmatpush.bf16.msra.mxu0 0
        %4140 = vmatpush.bf16.msra.mxu0 0
        %4141 = vmatpush.bf16.msra.mxu0 0
        %4142 = vmatpush.bf16.msra.mxu0 0
        %4143 = vmatpush.bf16.msra.mxu0 %v4020
        %4144 = vmatmul.bf16.gmra.mxu0 %v4030
        %v4145 = vpop.f32.mrf.mxu0
        %v4146 = vadd.f32 0.0, %v4145
        %v4147 = vpop.f32.mrf.mxu0
        %4148 = vdwg.mxu0
        %4149 = vmatpush.bf16.msra.mxu0 0
        %4150 = vmatpush.bf16.msra.mxu0 0
        %4151 = vmatpush.bf16.msra.mxu0 0
        %4152 = vmatpush.bf16.msra.mxu0 0
        %4153 = vmatpush.bf16.msra.mxu0 0
        %4154 = vmatpush.bf16.msra.mxu0 0
        %4155 = vmatpush.bf16.msra.mxu0 0
        %4156 = vmatpush.bf16.msra.mxu0 %v4021
        %4157 = vmatmul.bf16.gmra.mxu0 %v4030
        %v4158 = vpop.f32.mrf.mxu0
        %v4159 = vadd.f32 0.0, %v4158
        %v4160 = vpop.f32.mrf.mxu0
        %4161 = vdwg.mxu0
        %4162 = vmatpush.bf16.msra.mxu0 0
        %4163 = vmatpush.bf16.msra.mxu0 0
        %4164 = vmatpush.bf16.msra.mxu0 0
        %4165 = vmatpush.bf16.msra.mxu0 0
        %4166 = vmatpush.bf16.msra.mxu0 0
        %4167 = vmatpush.bf16.msra.mxu0 0
        %4168 = vmatpush.bf16.msra.mxu0 0
        %4169 = vmatpush.bf16.msra.mxu0 %v4022
        %4170 = vmatmul.bf16.gmra.mxu0 %v4030
        %v4171 = vpop.f32.mrf.mxu0
        %v4172 = vadd.f32 0.0, %v4171
        %v4173 = vpop.f32.mrf.mxu0
        %4174 = vdwg.mxu0
        %4175 = vmatpush.bf16.msra.mxu0 0
        %4176 = vmatpush.bf16.msra.mxu0 0
        %4177 = vmatpush.bf16.msra.mxu0 0
        %4178 = vmatpush.bf16.msra.mxu0 0
        %4179 = vmatpush.bf16.msra.mxu0 0
        %4180 = vmatpush.bf16.msra.mxu0 0
        %4181 = vmatpush.bf16.msra.mxu0 0
        %4182 = vmatpush.bf16.msra.mxu0 %v4023
        %4183 = vmatmul.bf16.gmra.mxu0 %v4030
        %v4184 = vpop.f32.mrf.mxu0
        %v4185 = vadd.f32 0.0, %v4184
        %v4186 = vpop.f32.mrf.mxu0
        %4187 = vdwg.mxu0
        %4188 = vmatpush.bf16.msra.mxu0 0
        %4189 = vmatpush.bf16.msra.mxu0 0
        %4190 = vmatpush.bf16.msra.mxu0 0
        %4191 = vmatpush.bf16.msra.mxu0 0
        %4192 = vmatpush.bf16.msra.mxu0 0
        %4193 = vmatpush.bf16.msra.mxu0 0
        %4194 = vmatpush.bf16.msra.mxu0 0
        %4195 = vmatpush.bf16.msra.mxu0 %v4024
        %4196 = vmatmul.bf16.gmra.mxu0 %v4030
        %v4197 = vpop.f32.mrf.mxu0
        %v4198 = vadd.f32 0.0, %v4197
        %v4199 = vpop.f32.mrf.mxu0
        %4200 = vdwg.mxu0
        %4201 = vmatpush.bf16.msra.mxu0 0
        %4202 = vmatpush.bf16.msra.mxu0 0
        %4203 = vmatpush.bf16.msra.mxu0 0
        %4204 = vmatpush.bf16.msra.mxu0 0
        %4205 = vmatpush.bf16.msra.mxu0 0
        %4206 = vmatpush.bf16.msra.mxu0 0
        %4207 = vmatpush.bf16.msra.mxu0 0
        %4208 = vmatpush.bf16.msra.mxu0 %v4025
        %4209 = vmatmul.bf16.gmra.mxu0 %v4030
        %v4210 = vpop.f32.mrf.mxu0
        %v4211 = vadd.f32 0.0, %v4210
        %v4212 = vpop.f32.mrf.mxu0
        %4213 = vdwg.mxu0
        %4214 = vmatpush.bf16.msra.mxu0 0
        %4215 = vmatpush.bf16.msra.mxu0 0
        %4216 = vmatpush.bf16.msra.mxu0 0
        %4217 = vmatpush.bf16.msra.mxu0 0
        %4218 = vmatpush.bf16.msra.mxu0 0
        %4219 = vmatpush.bf16.msra.mxu0 0
        %4220 = vmatpush.bf16.msra.mxu0 0
        %4221 = vmatpush.bf16.msra.mxu0 %v4026
        %4222 = vmatmul.bf16.gmra.mxu0 %v4030
        %v4223 = vpop.f32.mrf.mxu0
        %v4224 = vadd.f32 0.0, %v4223
        %v4225 = vpop.f32.mrf.mxu0
        %4226 = vdwg.mxu0
        %4227 = vmatpush.bf16.msra.mxu0 0
        %4228 = vmatpush.bf16.msra.mxu0 0
        %4229 = vmatpush.bf16.msra.mxu0 0
        %4230 = vmatpush.bf16.msra.mxu0 0
        %4231 = vmatpush.bf16.msra.mxu0 0
        %4232 = vmatpush.bf16.msra.mxu0 0
        %4233 = vmatpush.bf16.msra.mxu0 0
        %4234 = vmatpush.bf16.msra.mxu0 %v4027
        %4235 = vmatmul.bf16.gmra.mxu0 %v4030
        %v4236 = vpop.f32.mrf.mxu0
        %v4237 = vadd.f32 0.0, %v4236
        %v4238 = vpop.f32.mrf.mxu0
        %4239 = vdwg.mxu0
        %v4256 = vrot.slane %v4055, 7
        %v4257 = vrot.slane %v4068, 6
        %v4258 = vrot.slane %v4081, 5
        %v4259 = vrot.slane %v4094, 4
        %v4260 = vrot.slane %v4107, 3
        %v4261 = vrot.slane %v4120, 2
        %v4262 = vrot.slane %v4133, 1
        %v4263 = vrot.slane %v4159, 7
        %v4264 = vrot.slane %v4172, 6
        %v4265 = vrot.slane %v4185, 5
        %v4266 = vrot.slane %v4198, 4
        %v4267 = vrot.slane %v4211, 3
        %v4268 = vrot.slane %v4224, 2
        %v4269 = vrot.slane %v4237, 1
        %vm4270 = vcmask 1040384
        %v4271 = vsel %vm4270, %v4042, %v4256
        %vm4272 = vcmask 1042434
        %v4273 = vsel %vm4272, %v4257, %v4258
        %vm4274 = vcmask 1041408
        %v4275 = vsel %vm4274, %v4271, %v4273
        %vm4276 = vcmask 1044484
        %v4277 = vsel %vm4276, %v4259, %v4260
        %vm4278 = vcmask 1046534
        %v4279 = vsel %vm4278, %v4261, %v4262
        %vm4280 = vcmask 1045508
        %v4281 = vsel %vm4280, %v4277, %v4279
        %vm4282 = vcmask 1043456
        %v4283 = vsel %vm4282, %v4275, %v4281
        %v4284 = vsel %vm4270, %v4146, %v4263
        %v4285 = vsel %vm4272, %v4264, %v4265
        %v4286 = vsel %vm4274, %v4284, %v4285
        %v4287 = vsel %vm4276, %v4266, %v4267
        %v4288 = vsel %vm4278, %v4268, %v4269
        %v4289 = vsel %vm4280, %v4287, %v4288
        %v4290 = vsel %vm4282, %v4286, %v4289
        %v4293 = vadd.f32 %v4009, %v4283
        %v4294 = vadd.f32 %v4010, %v4290
        %4295 = vst [vmem:[#allocation2] sm:$0xff] %v4293
        %4296 = vst [vmem:[#allocation2 + $0x8] sm:$0xff] %v4294
        %p4297 = scmp.eq.s32.totalorder %s27, 2
        // Predicated region
        $region57: #{pamir_mlp_multiview_forward.1} parent=47 // pred_check
          %p4298 = pneg %p4297
        $region58: #{pamir_mlp_multiview_forward.1} parent=47 // pred_check_branch
          %4300 = sbr.rel (%p4298) target = $region60
        $region59: #{pamir_mlp_multiview_forward.1} parent=47 // pred_region
          %v4301 = vld [vmem:[#allocation2] sm:$0xff]
          %v4302 = vld [vmem:[#allocation2 + $0x8] sm:$0xff]
          %v4303 = vmul.f32 %v4301, 0.33333334
          %v4304 = vmul.f32 %v4302, 0.33333334
          %4306 = vset.pattern.permute.xlu0 0
          %4307 = vperm.xlu0 %4306, %v433
          %v4308 = vpop.permute.xlu0 %4307
          %v4309 = vperm.slane %v4308, 0
          %v4311 = vadd.f32 %v4303, %v4309
          %v4312 = vadd.f32 %v4304, %v4309
          %v4313 = vsub.f32 0.0, %v4311
          %v4314 = vsub.f32 0.0, %v4312
          %v4315 = vmul.f32 %v4313, 1.442695
          %v4316 = vpow.pop %v4315
          %v4317 = vmul.f32 %v4314, 1.442695
          %v4318 = vpow.pop %v4317
          %v4319 = vadd.f32 %v4316, 1.0
          %v4320 = vadd.f32 %v4318, 1.0
          %v4321 = vrcp.pop %v4319
          %v4322 = vrcp.pop %v4320
          %4323 = vst [vmem:[#allocation6] sm:$0xff] %v4321
          %4324 = vst [vmem:[#allocation6 + $0x8] sm:$0xff] %v4322
        $region60: #{pamir_mlp_multiview_forward.1} parent=47 // pred_fallthru
          _
        // Predicated region
        $region61: #{pamir_mlp_multiview_forward.1} parent=47 // pred_check
          %p4325 = pneg %p206
        $region62: #{pamir_mlp_multiview_forward.1} parent=47 // pred_check_branch
          %4327 = sbr.rel (%p4325) target = $region64
        $region63: #{pamir_mlp_multiview_forward.1} parent=47 // pred_region
          %s4328 = smul.u32 16, %s26
          %4330 = vsyncadd [#allocation5], 0
          %s4331 = scalar_lea.hbm %s7, %s4328
          %s4333 = sshll.u32 [#allocation6], 4
          %s4334 = int_to_ptr.vmem [resolvable:$true] %s4333
          %s4335 = sshll.u32 %s4331, 4
          %s4336 = int_to_ptr.hbm [resolvable:$true] %s4335
          %4338 = dma.vmem_to_hbm [thread:$0]  %s4334, 256, %s4336, [#allocation5]
        $region64: #{pamir_mlp_multiview_forward.1} parent=47 // pred_fallthru
          _
        // Predicated region
        $region65: #{pamir_mlp_multiview_forward.1} parent=47 // pred_check
          %p4339 = pneg %p206
        $region66: #{pamir_mlp_multiview_forward.1} parent=47 // pred_check_branch
          %4341 = sbr.rel (%p4339) target = $region68
        $region67: #{pamir_mlp_multiview_forward.1} parent=47 // pred_region
          %4343 = dma.done [#allocation5], 256
        $region68: #{pamir_mlp_multiview_forward.1} parent=47 // pred_fallthru
          _
      $region48: #{pamir_mlp_multiview_forward.1} parent=5 // pred_fallthru
        _
      %p4344 = scmp.le.s32.totalorder 2, %s17
      // Predicated region
      $region69: #{pamir_mlp_multiview_forward.1} parent=5 // pred_check
        %p4345 = pneg %p4344
      $region70: #{pamir_mlp_multiview_forward.1} parent=5 // pred_check_branch
        %4347 = sbr.rel (%p4345) target = $region72
      $region71: #{pamir_mlp_multiview_forward.1} parent=5 // pred_region
        %s4348 = ssub.s32 %s17, 2
      $region72: #{pamir_mlp_multiview_forward.1} parent=5 // pred_fallthru
        _
    $region6: #{pamir_mlp_multiview_forward.1} parent=1 // loop_footer
      %s21 = sadd.s32 1, %s17
    $region7: #{pamir_mlp_multiview_forward.1} parent=1 // loop_footer_branch
      %16 = sbr.rel target = $region3
    $region8: #{pamir_mlp_multiview_forward.1} parent=1 // loop_exit
      _
    %4349 = vsyncpa [#allocation4], 1
    %s4350 = scalar_lea.sflag [#allocation4], 1
    %4351 = vsyncpa %s4350, 1
    %4352 = vsyncpa [#allocation5], 1
    %s4353 = scalar_lea.sflag [#allocation5], 1
    %4354 = vsyncpa %s4353, 1

</llo_original>
